<compile_context>
chip_gen: v5e
topology: v5e:2x2
jax: 0.10.0
libtpu: 0.0.40
codegen_flags: <defaults>
</compile_context>

<pallas_src>
import functools
import math

import jax
import jax.numpy as jnp
from jax import lax
from jax.experimental import pallas as pl
from jax.experimental.pallas import tpu as pltpu


# ---------------------------------------------------------------------------
# Kernel
# ---------------------------------------------------------------------------

def _layer_norm(h, gamma, beta, eps):
    # Statistics in f32 (matches nn.LayerNorm); rsqrt runs on the EUP slot.
    mu = jnp.mean(h, axis=-1, keepdims=True)
    xc = h - mu
    var = jnp.mean(xc * xc, axis=-1, keepdims=True)
    return xc * lax.rsqrt(var + eps) * gamma + beta


def spe_encoder_kernel(x_ref,
                       wqkv_ref, bqkv_ref,
                       wo_ref, bo_ref,
                       g1_ref, be1_ref,
                       w1_ref, bf1_ref, w2_ref, bf2_ref,
                       g3_ref, be3_ref,
                       out_ref,
                       ctx_ref,
                       *, head, eps):
    bb, S, D = x_ref.shape                       # static block shape
    dk = D // head
    rows = bb * S

    # Batch block folded into the matmul M dimension: (bb, S, D) -> (bb*S, D).
    x_bf = x_ref[...].reshape(rows, D)           # streamed bf16 activations

    # --- Fused Q/K/V projection: one MXU pass, N = 3D ----------------------
    # Wq (and bq) are pre-scaled by 1/sqrt(dk) on the host, so no per-head
    # score scaling is needed below.
    qkv = jnp.dot(x_bf, wqkv_ref[...],
                  preferred_element_type=jnp.float32) + bqkv_ref[...]
    qkv = qkv.astype(jnp.bfloat16)
    q = qkv[:, :D]
    k = qkv[:, D:2 * D]
    v = qkv[:, 2 * D:]

    # --- Scaled dot-product attention (per batch element / head) -----------
    # Each per-head context is written straight into the (rows, D) VMEM
    # scratch at its column slice; the output projection then runs once at
    # full M = rows (instead of head*bb tiny M = S matmuls).  Routing through
    # the scratch also keeps the per-head live ranges bounded.
    # K is contracted on dim 1 via dot_general (transposed-RHS MXU matmul).
    for b in range(bb):                          # static, small
        r0 = b * S
        for h in range(head):                    # static, small
            c0 = h * dk
            qh = q[r0:r0 + S, c0:c0 + dk]
            kh = k[r0:r0 + S, c0:c0 + dk]
            vh = v[r0:r0 + S, c0:c0 + dk]
            s = lax.dot_general(qh, kh, (((1,), (1,)), ((), ())),
                                preferred_element_type=jnp.float32)
            s = s - jnp.max(s, axis=-1, keepdims=True)        # f32 stats
            p = jnp.exp(s)
            p = p * pl.reciprocal(jnp.sum(p, axis=-1, keepdims=True),
                                  approx=True)                # EUP, not VALU div
            ctx = jnp.dot(p.astype(jnp.bfloat16), vh,
                          preferred_element_type=jnp.float32)
            ctx_ref[r0:r0 + S, c0:c0 + dk] = ctx.astype(jnp.bfloat16)

    # --- Output projection: single (rows, D) @ (D, D) matmul ----------------
    mha = jnp.dot(ctx_ref[...], wo_ref[...],
                  preferred_element_type=jnp.float32) + bo_ref[...]

    # --- Residual + LayerNorm1 (dropout == identity in eval mode) ----------
    h1 = _layer_norm(x_bf.astype(jnp.float32) + mha,
                     g1_ref[...], be1_ref[...], eps)

    # --- FeedForward: Linear -> relu -> Linear (bf16 operands, f32 acc) -----
    ff1 = jnp.dot(h1.astype(jnp.bfloat16), w1_ref[...],
                  preferred_element_type=jnp.float32) + bf1_ref[...]
    ff1 = jnp.maximum(ff1, 0.0)                  # active='relu'
    ff2 = jnp.dot(ff1.astype(jnp.bfloat16), w2_ref[...],
                  preferred_element_type=jnp.float32) + bf2_ref[...]

    # --- Residual + LayerNorm3 ----------------------------------------------
    out = _layer_norm(h1 + ff2, g3_ref[...], be3_ref[...], eps)
    out_ref[...] = out.reshape(bb, S, D).astype(out_ref.dtype)


# ---------------------------------------------------------------------------
# Hardware-aware sizing helpers
# ---------------------------------------------------------------------------

def _vmem_capacity_bytes():
    try:
        return int(pltpu.get_tpu_info().vmem_capacity_bytes)
    except Exception:   # noqa: BLE001 - conservative fallback (v7x per-TC VMEM)
        return 64 << 20


def _num_tensorcores():
    """TensorCores per device (megacore chips need >=1 grid step per core)."""
    try:
        dev = jax.devices()[0]
        nc = getattr(dev, "num_cores", None)
        if isinstance(nc, int) and nc >= 1:
            return nc
        kind = str(getattr(dev, "device_kind", "")).lower()
        if any(tag in kind for tag in ("v4", "v5p", "v7", "7x")):
            return 2
    except Exception:   # noqa: BLE001
        pass
    return 1


def _per_step_vmem_bytes(bb, S, D, d_ff):
    """Rough per-grid-step VMEM footprint estimate (bytes)."""
    rows = bb * S
    bf16, f32 = 2, 4
    weights = bf16 * (3 * D * D + D * D + 2 * D * d_ff)      # wqkv, wo, w1, w2
    small = f32 * (3 * D + 6 * D + d_ff)                     # biases + LN params
    io = 2 * 2 * bf16 * rows * D                             # x/out blocks, double-buffered
    scratch = bf16 * rows * D                                 # ctx scratch
    acts = (f32 + bf16) * rows * 3 * D                        # qkv (f32 + bf16 copy)
    acts += f32 * rows * D * 3                                # mha, h1, ff2
    acts += (f32 + bf16) * rows * d_ff                        # ff1
    acts += f32 * 2 * S * S                                   # scores + probs live
    return weights + small + io + scratch + acts


def _vmem_limit_bytes(bb, S, D, d_ff, cap):
    est = _per_step_vmem_bytes(bb, S, D, d_ff) + (8 << 20)    # compiler headroom
    hi = int(cap * 0.85)                                      # stay below physical VMEM
    lo = min(32 << 20, hi)
    return int(min(max(est, lo), hi))


def _choose_block_batch(batch, seq, D, d_ff, num_cores, cap, target_rows=512):
    """Batch elements folded per grid step.

    Fill the MXU M dimension (bigger is better on a single TC — fewer grid
    steps amortize the ~0.35us per-step overhead) while staying under ~45% of
    physical VMEM; only megacore chips keep >= num_cores grid steps so every
    TensorCore gets work.
    """
    bb = max(1, min(batch, max(1, target_rows // max(seq, 1))))
    budget = int(cap * 0.45)
    while bb > 1 and _per_step_vmem_bytes(bb, seq, D, d_ff) > budget:
        bb -= 1
    if num_cores >= 2:
        while bb > 1 and pl.cdiv(batch, bb) < num_cores:
            bb -= 1
    while batch % bb:
        bb -= 1
    return bb


# ---------------------------------------------------------------------------
# pallas_call builder (cached) + forward wrapper
# ---------------------------------------------------------------------------

_HAS_BUFFERED = hasattr(pl, "Buffered")
# Tri-state: None = not probed yet, True/False = single-buffered weight specs
# (pl.Buffered(1)) supported by this jax/Mosaic build.
_SINGLE_BUFFER_OK = None if _HAS_BUFFERED else False


@functools.lru_cache(maxsize=None)
def _build_call(B, S, D, d_ff, head, eps, bb, out_dtype_name,
                single_buffer, vmem_limit):
    kernel = functools.partial(spe_encoder_kernel, head=head, eps=eps)

    def wspec(shp):
        if single_buffer:
            # Constant-index weights: double-buffering only wastes VMEM.
            return pl.BlockSpec(shp, lambda g: (0, 0),
                                pipeline_mode=pl.Buffered(1))
        return pl.BlockSpec(shp, lambda g: (0, 0))

    weight_specs = [
        wspec((D, 3 * D)), wspec((1, 3 * D)),   # fused Wqkv, bqkv
        wspec((D, D)), wspec((1, D)),           # Wo, bo
        wspec((1, D)), wspec((1, D)),           # norm1 gamma, beta
        wspec((D, d_ff)), wspec((1, d_ff)),     # ff W1, b1
        wspec((d_ff, D)), wspec((1, D)),        # ff W2, b2
        wspec((1, D)), wspec((1, D)),           # norm3 gamma, beta
    ]
    return pl.pallas_call(
        kernel,
        out_shape=jax.ShapeDtypeStruct((B, S, D), jnp.dtype(out_dtype_name)),
        grid_spec=pltpu.PrefetchScalarGridSpec(
            num_scalar_prefetch=0,
            grid=(B // bb,),
            in_specs=[pl.BlockSpec((bb, S, D), lambda g: (g, 0, 0))]
                     + weight_specs,
            out_specs=pl.BlockSpec((bb, S, D), lambda g: (g, 0, 0)),
            scratch_shapes=[pltpu.VMEM((bb * S, D), jnp.bfloat16)],
        ),
        compiler_params=pltpu.CompilerParams(
            dimension_semantics=("parallel",),
            vmem_limit_bytes=vmem_limit),
    )


def prepare_params(params, *, head):
    """Host-side one-time weight prep: fuse QKV, pre-scale Wq/bq, cast bf16."""
    D = params["wq"].shape[0]
    dk = D // head
    scale = 1.0 / math.sqrt(dk)
    bf = lambda w: jnp.asarray(w, jnp.bfloat16)
    f32 = lambda w: jnp.asarray(w, jnp.float32)
    wqkv = jnp.concatenate(
        [jnp.asarray(params["wq"], jnp.float32) * scale,
         jnp.asarray(params["wk"], jnp.float32),
         jnp.asarray(params["wv"], jnp.float32)], axis=1)
    bqkv = jnp.concatenate(
        [jnp.asarray(params["bq"], jnp.float32) * scale,
         jnp.asarray(params["bk"], jnp.float32),
         jnp.asarray(params["bv"], jnp.float32)], axis=1)
    return {
        "wqkv": bf(wqkv), "bqkv": f32(bqkv),
        "wo": bf(params["wo"]), "bo": f32(params["bo"]),
        "g1": f32(params["g1"]), "be1": f32(params["be1"]),
        "w1": bf(params["w1"]), "bf1": f32(params["bf1"]),
        "w2": bf(params["w2"]), "bf2": f32(params["bf2"]),
        "g3": f32(params["g3"]), "be3": f32(params["be3"]),
    }


def spe_layer_forward(x, params, *, head, eps=1e-5, block_batch=None,
                      out_dtype=jnp.bfloat16):
    """Encoder-path forward of SpeLayer. Returns (out, k_cache, v_cache).

    Activations are streamed bf16 (input cast here, bf16 output block);
    internal residual / LayerNorm / softmax math is f32.
    """
    global _SINGLE_BUFFER_OK

    B, S, D = x.shape
    if "wqkv" not in params:
        params = prepare_params(params, head=head)
    d_ff = params["w1"].shape[1]

    if D % head != 0:
        raise ValueError(f"dembed={D} must be divisible by head={head}")
    if S % 8 != 0:
        raise ValueError("sequence length must be a multiple of 8 (sublane tile)")

    num_cores = _num_tensorcores()
    cap = _vmem_capacity_bytes()
    bb = (block_batch if block_batch is not None
          else _choose_block_batch(B, S, D, d_ff, num_cores, cap))
    if B % bb != 0:
        raise ValueError(f"batch={B} must be divisible by block_batch={bb}")
    vmem_limit = _vmem_limit_bytes(bb, S, D, d_ff, cap)

    args = (x.astype(jnp.bfloat16),
            params["wqkv"], params["bqkv"], params["wo"], params["bo"],
            params["g1"], params["be1"],
            params["w1"], params["bf1"], params["w2"], params["bf2"],
            params["g3"], params["be3"])

    key = (B, S, D, d_ff, head, float(eps), bb, jnp.dtype(out_dtype).name)

    # One-time probe of pl.Buffered(1) support; steady-state calls use the
    # cached pallas_call with no host sync.
    if _SINGLE_BUFFER_OK is None:
        try:
            fn = _build_call(*key, True, vmem_limit)
            out = fn(*args)
            jax.block_until_ready(out)           # probe only; not the hot path
            _SINGLE_BUFFER_OK = True
            return out, None, None
        except Exception:   # noqa: BLE001 - retry below; real errors re-surface
            _SINGLE_BUFFER_OK = False

    fn = _build_call(*key, _SINGLE_BUFFER_OK, vmem_limit)
    return fn(*args), None, None                 # (out, k_cache, v_cache)


# ---------------------------------------------------------------------------
# Parameter init + demo
# ---------------------------------------------------------------------------

def init_params(key, dembed, d_ff):
    ks = jax.random.split(key, 8)
    std = 0.02
    nrm = lambda k, shp: (std * jax.random.normal(k, shp)).astype(jnp.float32)
    return {
        "wq": nrm(ks[0], (dembed, dembed)), "bq": jnp.zeros((1, dembed), jnp.float32),
        "wk": nrm(ks[1], (dembed, dembed)), "bk": jnp.zeros((1, dembed), jnp.float32),
        "wv": nrm(ks[2], (dembed, dembed)), "bv": jnp.zeros((1, dembed), jnp.float32),
        "wo": nrm(ks[3], (dembed, dembed)), "bo": jnp.zeros((1, dembed), jnp.float32),
        # nn.LayerNorm default init: weight=1, bias=0
        "g1": jnp.ones((1, dembed), jnp.float32), "be1": jnp.zeros((1, dembed), jnp.float32),
        "w1": nrm(ks[4], (dembed, d_ff)), "bf1": jnp.zeros((1, d_ff), jnp.float32),
        "w2": nrm(ks[5], (d_ff, dembed)), "bf2": jnp.zeros((1, dembed), jnp.float32),
        "g3": jnp.ones((1, dembed), jnp.float32), "be3": jnp.zeros((1, dembed), jnp.float32),
    }


if __name__ == "__main__":
    # Small shapes consistent with the module (dembed == dmodel);
    # head_dim = 128 so per-head slices are lane-aligned.
    B, S, D, D_FF, HEAD = 2, 16, 256, 512, 2
    key = jax.random.PRNGKey(0)
    kx, kp = jax.random.split(key)

    x = jax.random.normal(kx, (B, S, D), dtype=jnp.float32)
    params = prepare_params(init_params(kp, D, D_FF), head=HEAD)

    out, k_cache, v_cache = spe_layer_forward(x, params, head=HEAD, eps=1e-5)
    out = jax.block_until_ready(out)
    assert out.shape == (B, S, D)
    assert jnp.all(jnp.isfinite(out.astype(jnp.float32)))
    print("KERNEL_OK")
</pallas_src>

<mosaic_0001>
module attributes {stable_mosaic.version = 11 : i64} {
  func.func @spe_encoder_kernel(%arg0: i32, %arg1: memref<2x16x256xbf16, #tpu.memory_space<vmem>>, %arg2: memref<256x768xbf16, #tpu.memory_space<vmem>>, %arg3: memref<1x768xf32, #tpu.memory_space<vmem>>, %arg4: memref<256x256xbf16, #tpu.memory_space<vmem>>, %arg5: memref<1x256xf32, #tpu.memory_space<vmem>>, %arg6: memref<1x256xf32, #tpu.memory_space<vmem>>, %arg7: memref<1x256xf32, #tpu.memory_space<vmem>>, %arg8: memref<256x512xbf16, #tpu.memory_space<vmem>>, %arg9: memref<1x512xf32, #tpu.memory_space<vmem>>, %arg10: memref<512x256xbf16, #tpu.memory_space<vmem>>, %arg11: memref<1x256xf32, #tpu.memory_space<vmem>>, %arg12: memref<1x256xf32, #tpu.memory_space<vmem>>, %arg13: memref<1x256xf32, #tpu.memory_space<vmem>>, %arg14: memref<2x16x256xbf16, #tpu.memory_space<vmem>>, %arg15: memref<32x256xbf16, #tpu.memory_space<vmem>>) attributes {dimension_semantics = [#tpu.dimension_semantics<parallel>], iteration_bounds = array<i64: 1>, scalar_prefetch = 0 : i64, scratch_operands = 1 : i64, tpu.core_type = #tpu.core_type<tc>, window_params = [{transform_indices = @transform_0, window_bounds = array<i64: 2, 16, 256>}, {pipeline_mode = #tpu.pipeline_mode<synchronous>, transform_indices = @transform_1, window_bounds = array<i64: 256, 768>}, {pipeline_mode = #tpu.pipeline_mode<synchronous>, transform_indices = @transform_2, window_bounds = array<i64: 1, 768>}, {pipeline_mode = #tpu.pipeline_mode<synchronous>, transform_indices = @transform_3, window_bounds = array<i64: 256, 256>}, {pipeline_mode = #tpu.pipeline_mode<synchronous>, transform_indices = @transform_4, window_bounds = array<i64: 1, 256>}, {pipeline_mode = #tpu.pipeline_mode<synchronous>, transform_indices = @transform_5, window_bounds = array<i64: 1, 256>}, {pipeline_mode = #tpu.pipeline_mode<synchronous>, transform_indices = @transform_6, window_bounds = array<i64: 1, 256>}, {pipeline_mode = #tpu.pipeline_mode<synchronous>, transform_indices = @transform_7, window_bounds = array<i64: 256, 512>}, {pipeline_mode = #tpu.pipeline_mode<synchronous>, transform_indices = @transform_8, window_bounds = array<i64: 1, 512>}, {pipeline_mode = #tpu.pipeline_mode<synchronous>, transform_indices = @transform_9, window_bounds = array<i64: 512, 256>}, {pipeline_mode = #tpu.pipeline_mode<synchronous>, transform_indices = @transform_10, window_bounds = array<i64: 1, 256>}, {pipeline_mode = #tpu.pipeline_mode<synchronous>, transform_indices = @transform_11, window_bounds = array<i64: 1, 256>}, {pipeline_mode = #tpu.pipeline_mode<synchronous>, transform_indices = @transform_12, window_bounds = array<i64: 1, 256>}, {transform_indices = @transform_13, window_bounds = array<i64: 2, 16, 256>}]} {
    %c0 = arith.constant 0 : index
    %c0_0 = arith.constant 0 : index
    %c0_1 = arith.constant 0 : index
    %0 = vector.load %arg1[%c0, %c0_0, %c0_1] : memref<2x16x256xbf16, #tpu.memory_space<vmem>>, vector<2x16x256xbf16>
    %1 = vector.shape_cast %0 : vector<2x16x256xbf16> to vector<32x256xbf16>
    %c0_2 = arith.constant 0 : index
    %c0_3 = arith.constant 0 : index
    %2 = vector.load %arg2[%c0_2, %c0_3] : memref<256x768xbf16, #tpu.memory_space<vmem>>, vector<256x768xbf16>
    %cst = arith.constant dense<0.000000e+00> : vector<32x768xf32>
    %3 = tpu.matmul %1, %2, %cst {dimension_numbers = #tpu.dot_dimension_numbers<[1], [0], [0], [1], [0, 0, 1, 1], [], []>} : vector<32x256xbf16>, vector<256x768xbf16>, vector<32x768xf32> -> vector<32x768xf32>
    %c0_4 = arith.constant 0 : index
    %c0_5 = arith.constant 0 : index
    %4 = vector.load %arg3[%c0_4, %c0_5] : memref<1x768xf32, #tpu.memory_space<vmem>>, vector<1x768xf32>
    %5 = vector.broadcast %4 : vector<1x768xf32> to vector<32x768xf32>
    %6 = arith.addf %3, %5 : vector<32x768xf32>
    %7 = arith.truncf %6 : vector<32x768xf32> to vector<32x768xbf16>
    %8 = vector.extract_strided_slice %7 {offsets = [0, 0], sizes = [32, 256], strides = [1, 1]} : vector<32x768xbf16> to vector<32x256xbf16>
    %9 = vector.extract_strided_slice %7 {offsets = [0, 256], sizes = [32, 256], strides = [1, 1]} : vector<32x768xbf16> to vector<32x256xbf16>
    %10 = vector.extract_strided_slice %7 {offsets = [0, 512], sizes = [32, 256], strides = [1, 1]} : vector<32x768xbf16> to vector<32x256xbf16>
    %11 = vector.extract_strided_slice %8 {offsets = [0, 0], sizes = [16, 128], strides = [1, 1]} : vector<32x256xbf16> to vector<16x128xbf16>
    %12 = vector.extract_strided_slice %9 {offsets = [0, 0], sizes = [16, 128], strides = [1, 1]} : vector<32x256xbf16> to vector<16x128xbf16>
    %13 = vector.extract_strided_slice %10 {offsets = [0, 0], sizes = [16, 128], strides = [1, 1]} : vector<32x256xbf16> to vector<16x128xbf16>
    %cst_6 = arith.constant dense<0.000000e+00> : vector<16x16xf32>
    %14 = tpu.matmul %11, %12, %cst_6 {dimension_numbers = #tpu.dot_dimension_numbers<[1], [1], [0], [0], [0, 0, 1, 0], [], []>} : vector<16x128xbf16>, vector<16x128xbf16>, vector<16x16xf32> -> vector<16x16xf32>
    %cst_7 = arith.constant dense<0xFF800000> : vector<16xf32>
    %15 = vector.multi_reduction <maximumf>, %14, %cst_7 [1] : vector<16x16xf32> to vector<16xf32>
    %16 = vector.shape_cast %15 : vector<16xf32> to vector<16x1xf32>
    %17 = vector.broadcast %16 : vector<16x1xf32> to vector<16x16xf32>
    %18 = arith.subf %14, %17 : vector<16x16xf32>
    %19 = math.exp %18 : vector<16x16xf32>
    %cst_8 = arith.constant dense<0.000000e+00> : vector<16xf32>
    %20 = vector.multi_reduction <add>, %19, %cst_8 [1] : vector<16x16xf32> to vector<16xf32>
    %21 = vector.shape_cast %20 : vector<16xf32> to vector<16x1xf32>
    %22 = tpu.reciprocal %21 {approx = true} : vector<16x1xf32> -> vector<16x1xf32>
    %23 = vector.broadcast %22 : vector<16x1xf32> to vector<16x16xf32>
    %24 = arith.mulf %19, %23 : vector<16x16xf32>
    %25 = arith.truncf %24 : vector<16x16xf32> to vector<16x16xbf16>
    %cst_9 = arith.constant dense<0.000000e+00> : vector<16x128xf32>
    %26 = tpu.matmul %25, %13, %cst_9 {dimension_numbers = #tpu.dot_dimension_numbers<[1], [0], [0], [1], [0, 0, 1, 1], [], []>} : vector<16x16xbf16>, vector<16x128xbf16>, vector<16x128xf32> -> vector<16x128xf32>
    %27 = arith.truncf %26 : vector<16x128xf32> to vector<16x128xbf16>
    %c0_10 = arith.constant 0 : index
    %c0_11 = arith.constant 0 : index
    %28 = vector.load %arg15[%c0_10, %c0_11] : memref<32x256xbf16, #tpu.memory_space<vmem>>, vector<16x128xbf16>
    tpu.vector_store %arg15[%c0_10, %c0_11], %27 {strides = array<i32>} : memref<32x256xbf16, #tpu.memory_space<vmem>>, vector<16x128xbf16>,
    %29 = vector.extract_strided_slice %8 {offsets = [0, 128], sizes = [16, 128], strides = [1, 1]} : vector<32x256xbf16> to vector<16x128xbf16>
    %30 = vector.extract_strided_slice %9 {offsets = [0, 128], sizes = [16, 128], strides = [1, 1]} : vector<32x256xbf16> to vector<16x128xbf16>
    %31 = vector.extract_strided_slice %10 {offsets = [0, 128], sizes = [16, 128], strides = [1, 1]} : vector<32x256xbf16> to vector<16x128xbf16>
    %cst_12 = arith.constant dense<0.000000e+00> : vector<16x16xf32>
    %32 = tpu.matmul %29, %30, %cst_12 {dimension_numbers = #tpu.dot_dimension_numbers<[1], [1], [0], [0], [0, 0, 1, 0], [], []>} : vector<16x128xbf16>, vector<16x128xbf16>, vector<16x16xf32> -> vector<16x16xf32>
    %cst_13 = arith.constant dense<0xFF800000> : vector<16xf32>
    %33 = vector.multi_reduction <maximumf>, %32, %cst_13 [1] : vector<16x16xf32> to vector<16xf32>
    %34 = vector.shape_cast %33 : vector<16xf32> to vector<16x1xf32>
    %35 = vector.broadcast %34 : vector<16x1xf32> to vector<16x16xf32>
    %36 = arith.subf %32, %35 : vector<16x16xf32>
    %37 = math.exp %36 : vector<16x16xf32>
    %cst_14 = arith.constant dense<0.000000e+00> : vector<16xf32>
    %38 = vector.multi_reduction <add>, %37, %cst_14 [1] : vector<16x16xf32> to vector<16xf32>
    %39 = vector.shape_cast %38 : vector<16xf32> to vector<16x1xf32>
    %40 = tpu.reciprocal %39 {approx = true} : vector<16x1xf32> -> vector<16x1xf32>
    %41 = vector.broadcast %40 : vector<16x1xf32> to vector<16x16xf32>
    %42 = arith.mulf %37, %41 : vector<16x16xf32>
    %43 = arith.truncf %42 : vector<16x16xf32> to vector<16x16xbf16>
    %cst_15 = arith.constant dense<0.000000e+00> : vector<16x128xf32>
    %44 = tpu.matmul %43, %31, %cst_15 {dimension_numbers = #tpu.dot_dimension_numbers<[1], [0], [0], [1], [0, 0, 1, 1], [], []>} : vector<16x16xbf16>, vector<16x128xbf16>, vector<16x128xf32> -> vector<16x128xf32>
    %45 = arith.truncf %44 : vector<16x128xf32> to vector<16x128xbf16>
    %c0_16 = arith.constant 0 : index
    %c128 = arith.constant 128 : index
    %46 = vector.load %arg15[%c0_16, %c128] : memref<32x256xbf16, #tpu.memory_space<vmem>>, vector<16x128xbf16>
    tpu.vector_store %arg15[%c0_16, %c128], %45 {strides = array<i32>} : memref<32x256xbf16, #tpu.memory_space<vmem>>, vector<16x128xbf16>,
    %47 = vector.extract_strided_slice %8 {offsets = [16, 0], sizes = [16, 128], strides = [1, 1]} : vector<32x256xbf16> to vector<16x128xbf16>
    %48 = vector.extract_strided_slice %9 {offsets = [16, 0], sizes = [16, 128], strides = [1, 1]} : vector<32x256xbf16> to vector<16x128xbf16>
    %49 = vector.extract_strided_slice %10 {offsets = [16, 0], sizes = [16, 128], strides = [1, 1]} : vector<32x256xbf16> to vector<16x128xbf16>
    %cst_17 = arith.constant dense<0.000000e+00> : vector<16x16xf32>
    %50 = tpu.matmul %47, %48, %cst_17 {dimension_numbers = #tpu.dot_dimension_numbers<[1], [1], [0], [0], [0, 0, 1, 0], [], []>} : vector<16x128xbf16>, vector<16x128xbf16>, vector<16x16xf32> -> vector<16x16xf32>
    %cst_18 = arith.constant dense<0xFF800000> : vector<16xf32>
    %51 = vector.multi_reduction <maximumf>, %50, %cst_18 [1] : vector<16x16xf32> to vector<16xf32>
    %52 = vector.shape_cast %51 : vector<16xf32> to vector<16x1xf32>
    %53 = vector.broadcast %52 : vector<16x1xf32> to vector<16x16xf32>
    %54 = arith.subf %50, %53 : vector<16x16xf32>
    %55 = math.exp %54 : vector<16x16xf32>
    %cst_19 = arith.constant dense<0.000000e+00> : vector<16xf32>
    %56 = vector.multi_reduction <add>, %55, %cst_19 [1] : vector<16x16xf32> to vector<16xf32>
    %57 = vector.shape_cast %56 : vector<16xf32> to vector<16x1xf32>
    %58 = tpu.reciprocal %57 {approx = true} : vector<16x1xf32> -> vector<16x1xf32>
    %59 = vector.broadcast %58 : vector<16x1xf32> to vector<16x16xf32>
    %60 = arith.mulf %55, %59 : vector<16x16xf32>
    %61 = arith.truncf %60 : vector<16x16xf32> to vector<16x16xbf16>
    %cst_20 = arith.constant dense<0.000000e+00> : vector<16x128xf32>
    %62 = tpu.matmul %61, %49, %cst_20 {dimension_numbers = #tpu.dot_dimension_numbers<[1], [0], [0], [1], [0, 0, 1, 1], [], []>} : vector<16x16xbf16>, vector<16x128xbf16>, vector<16x128xf32> -> vector<16x128xf32>
    %63 = arith.truncf %62 : vector<16x128xf32> to vector<16x128xbf16>
    %c16 = arith.constant 16 : index
    %c0_21 = arith.constant 0 : index
    %64 = vector.load %arg15[%c16, %c0_21] : memref<32x256xbf16, #tpu.memory_space<vmem>>, vector<16x128xbf16>
    tpu.vector_store %arg15[%c16, %c0_21], %63 {strides = array<i32>} : memref<32x256xbf16, #tpu.memory_space<vmem>>, vector<16x128xbf16>,
    %65 = vector.extract_strided_slice %8 {offsets = [16, 128], sizes = [16, 128], strides = [1, 1]} : vector<32x256xbf16> to vector<16x128xbf16>
    %66 = vector.extract_strided_slice %9 {offsets = [16, 128], sizes = [16, 128], strides = [1, 1]} : vector<32x256xbf16> to vector<16x128xbf16>
    %67 = vector.extract_strided_slice %10 {offsets = [16, 128], sizes = [16, 128], strides = [1, 1]} : vector<32x256xbf16> to vector<16x128xbf16>
    %cst_22 = arith.constant dense<0.000000e+00> : vector<16x16xf32>
    %68 = tpu.matmul %65, %66, %cst_22 {dimension_numbers = #tpu.dot_dimension_numbers<[1], [1], [0], [0], [0, 0, 1, 0], [], []>} : vector<16x128xbf16>, vector<16x128xbf16>, vector<16x16xf32> -> vector<16x16xf32>
    %cst_23 = arith.constant dense<0xFF800000> : vector<16xf32>
    %69 = vector.multi_reduction <maximumf>, %68, %cst_23 [1] : vector<16x16xf32> to vector<16xf32>
    %70 = vector.shape_cast %69 : vector<16xf32> to vector<16x1xf32>
    %71 = vector.broadcast %70 : vector<16x1xf32> to vector<16x16xf32>
    %72 = arith.subf %68, %71 : vector<16x16xf32>
    %73 = math.exp %72 : vector<16x16xf32>
    %cst_24 = arith.constant dense<0.000000e+00> : vector<16xf32>
    %74 = vector.multi_reduction <add>, %73, %cst_24 [1] : vector<16x16xf32> to vector<16xf32>
    %75 = vector.shape_cast %74 : vector<16xf32> to vector<16x1xf32>
    %76 = tpu.reciprocal %75 {approx = true} : vector<16x1xf32> -> vector<16x1xf32>
    %77 = vector.broadcast %76 : vector<16x1xf32> to vector<16x16xf32>
    %78 = arith.mulf %73, %77 : vector<16x16xf32>
    %79 = arith.truncf %78 : vector<16x16xf32> to vector<16x16xbf16>
    %cst_25 = arith.constant dense<0.000000e+00> : vector<16x128xf32>
    %80 = tpu.matmul %79, %67, %cst_25 {dimension_numbers = #tpu.dot_dimension_numbers<[1], [0], [0], [1], [0, 0, 1, 1], [], []>} : vector<16x16xbf16>, vector<16x128xbf16>, vector<16x128xf32> -> vector<16x128xf32>
    %81 = arith.truncf %80 : vector<16x128xf32> to vector<16x128xbf16>
    %c16_26 = arith.constant 16 : index
    %c128_27 = arith.constant 128 : index
    %82 = vector.load %arg15[%c16_26, %c128_27] : memref<32x256xbf16, #tpu.memory_space<vmem>>, vector<16x128xbf16>
    tpu.vector_store %arg15[%c16_26, %c128_27], %81 {strides = array<i32>} : memref<32x256xbf16, #tpu.memory_space<vmem>>, vector<16x128xbf16>,
    %c0_28 = arith.constant 0 : index
    %c0_29 = arith.constant 0 : index
    %83 = vector.load %arg15[%c0_28, %c0_29] : memref<32x256xbf16, #tpu.memory_space<vmem>>, vector<32x256xbf16>
    %c0_30 = arith.constant 0 : index
    %c0_31 = arith.constant 0 : index
    %84 = vector.load %arg4[%c0_30, %c0_31] : memref<256x256xbf16, #tpu.memory_space<vmem>>, vector<256x256xbf16>
    %cst_32 = arith.constant dense<0.000000e+00> : vector<32x256xf32>
    %85 = tpu.matmul %83, %84, %cst_32 {dimension_numbers = #tpu.dot_dimension_numbers<[1], [0], [0], [1], [0, 0, 1, 1], [], []>} : vector<32x256xbf16>, vector<256x256xbf16>, vector<32x256xf32> -> vector<32x256xf32>
    %c0_33 = arith.constant 0 : index
    %c0_34 = arith.constant 0 : index
    %86 = vector.load %arg5[%c0_33, %c0_34] : memref<1x256xf32, #tpu.memory_space<vmem>>, vector<1x256xf32>
    %87 = vector.broadcast %86 : vector<1x256xf32> to vector<32x256xf32>
    %88 = arith.addf %85, %87 : vector<32x256xf32>
    %89 = arith.extf %1 : vector<32x256xbf16> to vector<32x256xf32>
    %90 = arith.addf %89, %88 : vector<32x256xf32>
    %c0_35 = arith.constant 0 : index
    %c0_36 = arith.constant 0 : index
    %91 = vector.load %arg6[%c0_35, %c0_36] : memref<1x256xf32, #tpu.memory_space<vmem>>, vector<1x256xf32>
    %c0_37 = arith.constant 0 : index
    %c0_38 = arith.constant 0 : index
    %92 = vector.load %arg7[%c0_37, %c0_38] : memref<1x256xf32, #tpu.memory_space<vmem>>, vector<1x256xf32>
    %cst_39 = arith.constant dense<0.000000e+00> : vector<32xf32>
    %93 = vector.multi_reduction <add>, %90, %cst_39 [1] : vector<32x256xf32> to vector<32xf32>
    %94 = vector.shape_cast %93 : vector<32xf32> to vector<32x1xf32>
    %cst_40 = arith.constant 2.560000e+02 : f32
    %95 = vector.broadcast %cst_40 : f32 to vector<32x1xf32>
    %96 = arith.divf %94, %95 : vector<32x1xf32>
    %97 = vector.broadcast %96 : vector<32x1xf32> to vector<32x256xf32>
    %98 = arith.subf %90, %97 : vector<32x256xf32>
    %99 = arith.mulf %98, %98 : vector<32x256xf32>
    %cst_41 = arith.constant dense<0.000000e+00> : vector<32xf32>
    %100 = vector.multi_reduction <add>, %99, %cst_41 [1] : vector<32x256xf32> to vector<32xf32>
    %101 = vector.shape_cast %100 : vector<32xf32> to vector<32x1xf32>
    %cst_42 = arith.constant 2.560000e+02 : f32
    %102 = vector.broadcast %cst_42 : f32 to vector<32x1xf32>
    %103 = arith.divf %101, %102 : vector<32x1xf32>
    %cst_43 = arith.constant 9.99999974E-6 : f32
    %104 = vector.broadcast %cst_43 : f32 to vector<32x1xf32>
    %105 = arith.addf %103, %104 : vector<32x1xf32>
    %106 = math.rsqrt %105 : vector<32x1xf32>
    %107 = vector.broadcast %106 : vector<32x1xf32> to vector<32x256xf32>
    %108 = arith.mulf %98, %107 : vector<32x256xf32>
    %109 = vector.broadcast %91 : vector<1x256xf32> to vector<32x256xf32>
    %110 = arith.mulf %108, %109 : vector<32x256xf32>
    %111 = vector.broadcast %92 : vector<1x256xf32> to vector<32x256xf32>
    %112 = arith.addf %110, %111 : vector<32x256xf32>
    %113 = arith.truncf %112 : vector<32x256xf32> to vector<32x256xbf16>
    %c0_44 = arith.constant 0 : index
    %c0_45 = arith.constant 0 : index
    %114 = vector.load %arg8[%c0_44, %c0_45] : memref<256x512xbf16, #tpu.memory_space<vmem>>, vector<256x512xbf16>
    %cst_46 = arith.constant dense<0.000000e+00> : vector<32x512xf32>
    %115 = tpu.matmul %113, %114, %cst_46 {dimension_numbers = #tpu.dot_dimension_numbers<[1], [0], [0], [1], [0, 0, 1, 1], [], []>} : vector<32x256xbf16>, vector<256x512xbf16>, vector<32x512xf32> -> vector<32x512xf32>
    %c0_47 = arith.constant 0 : index
    %c0_48 = arith.constant 0 : index
    %116 = vector.load %arg9[%c0_47, %c0_48] : memref<1x512xf32, #tpu.memory_space<vmem>>, vector<1x512xf32>
    %117 = vector.broadcast %116 : vector<1x512xf32> to vector<32x512xf32>
    %118 = arith.addf %115, %117 : vector<32x512xf32>
    %cst_49 = arith.constant 0.000000e+00 : f32
    %119 = vector.broadcast %cst_49 : f32 to vector<32x512xf32>
    %120 = arith.maximumf %118, %119 : vector<32x512xf32>
    %121 = arith.truncf %120 : vector<32x512xf32> to vector<32x512xbf16>
    %c0_50 = arith.constant 0 : index
    %c0_51 = arith.constant 0 : index
    %122 = vector.load %arg10[%c0_50, %c0_51] : memref<512x256xbf16, #tpu.memory_space<vmem>>, vector<512x256xbf16>
    %cst_52 = arith.constant dense<0.000000e+00> : vector<32x256xf32>
    %123 = tpu.matmul %121, %122, %cst_52 {dimension_numbers = #tpu.dot_dimension_numbers<[1], [0], [0], [1], [0, 0, 1, 1], [], []>} : vector<32x512xbf16>, vector<512x256xbf16>, vector<32x256xf32> -> vector<32x256xf32>
    %c0_53 = arith.constant 0 : index
    %c0_54 = arith.constant 0 : index
    %124 = vector.load %arg11[%c0_53, %c0_54] : memref<1x256xf32, #tpu.memory_space<vmem>>, vector<1x256xf32>
    %125 = vector.broadcast %124 : vector<1x256xf32> to vector<32x256xf32>
    %126 = arith.addf %123, %125 : vector<32x256xf32>
    %127 = arith.addf %112, %126 : vector<32x256xf32>
    %c0_55 = arith.constant 0 : index
    %c0_56 = arith.constant 0 : index
    %128 = vector.load %arg12[%c0_55, %c0_56] : memref<1x256xf32, #tpu.memory_space<vmem>>, vector<1x256xf32>
    %c0_57 = arith.constant 0 : index
    %c0_58 = arith.constant 0 : index
    %129 = vector.load %arg13[%c0_57, %c0_58] : memref<1x256xf32, #tpu.memory_space<vmem>>, vector<1x256xf32>
    %cst_59 = arith.constant dense<0.000000e+00> : vector<32xf32>
    %130 = vector.multi_reduction <add>, %127, %cst_59 [1] : vector<32x256xf32> to vector<32xf32>
    %131 = vector.shape_cast %130 : vector<32xf32> to vector<32x1xf32>
    %cst_60 = arith.constant 2.560000e+02 : f32
    %132 = vector.broadcast %cst_60 : f32 to vector<32x1xf32>
    %133 = arith.divf %131, %132 : vector<32x1xf32>
    %134 = vector.broadcast %133 : vector<32x1xf32> to vector<32x256xf32>
    %135 = arith.subf %127, %134 : vector<32x256xf32>
    %136 = arith.mulf %135, %135 : vector<32x256xf32>
    %cst_61 = arith.constant dense<0.000000e+00> : vector<32xf32>
    %137 = vector.multi_reduction <add>, %136, %cst_61 [1] : vector<32x256xf32> to vector<32xf32>
    %138 = vector.shape_cast %137 : vector<32xf32> to vector<32x1xf32>
    %cst_62 = arith.constant 2.560000e+02 : f32
    %139 = vector.broadcast %cst_62 : f32 to vector<32x1xf32>
    %140 = arith.divf %138, %139 : vector<32x1xf32>
    %cst_63 = arith.constant 9.99999974E-6 : f32
    %141 = vector.broadcast %cst_63 : f32 to vector<32x1xf32>
    %142 = arith.addf %140, %141 : vector<32x1xf32>
    %143 = math.rsqrt %142 : vector<32x1xf32>
    %144 = vector.broadcast %143 : vector<32x1xf32> to vector<32x256xf32>
    %145 = arith.mulf %135, %144 : vector<32x256xf32>
    %146 = vector.broadcast %128 : vector<1x256xf32> to vector<32x256xf32>
    %147 = arith.mulf %145, %146 : vector<32x256xf32>
    %148 = vector.broadcast %129 : vector<1x256xf32> to vector<32x256xf32>
    %149 = arith.addf %147, %148 : vector<32x256xf32>
    %150 = vector.shape_cast %149 : vector<32x256xf32> to vector<2x16x256xf32>
    %151 = arith.truncf %150 : vector<2x16x256xf32> to vector<2x16x256xbf16>
    %c0_64 = arith.constant 0 : index
    %c0_65 = arith.constant 0 : index
    %c0_66 = arith.constant 0 : index
    %152 = vector.load %arg14[%c0_64, %c0_65, %c0_66] : memref<2x16x256xbf16, #tpu.memory_space<vmem>>, vector<2x16x256xbf16>
    tpu.vector_store %arg14[%c0_64, %c0_65, %c0_66], %151 {strides = array<i32>} : memref<2x16x256xbf16, #tpu.memory_space<vmem>>, vector<2x16x256xbf16>,
    return
  }
  func.func @transform_0(%arg0: i32) -> (i32, i32, i32) {
    %c0_i32 = arith.constant 0 : i32
    %c0_i32_0 = arith.constant 0 : i32
    %c0_i32_1 = arith.constant 0 : i32
    return %arg0, %c0_i32, %c0_i32_0 : i32, i32, i32
  }
  func.func @transform_1(%arg0: i32) -> (i32, i32) {
    %c0_i32 = arith.constant 0 : i32
    %c0_i32_0 = arith.constant 0 : i32
    %c0_i32_1 = arith.constant 0 : i32
    return %c0_i32, %c0_i32_0 : i32, i32
  }
  func.func @transform_2(%arg0: i32) -> (i32, i32) {
    %c0_i32 = arith.constant 0 : i32
    %c0_i32_0 = arith.constant 0 : i32
    %c0_i32_1 = arith.constant 0 : i32
    return %c0_i32, %c0_i32_0 : i32, i32
  }
  func.func @transform_3(%arg0: i32) -> (i32, i32) {
    %c0_i32 = arith.constant 0 : i32
    %c0_i32_0 = arith.constant 0 : i32
    %c0_i32_1 = arith.constant 0 : i32
    return %c0_i32, %c0_i32_0 : i32, i32
  }
  func.func @transform_4(%arg0: i32) -> (i32, i32) {
    %c0_i32 = arith.constant 0 : i32
    %c0_i32_0 = arith.constant 0 : i32
    %c0_i32_1 = arith.constant 0 : i32
    return %c0_i32, %c0_i32_0 : i32, i32
  }
  func.func @transform_5(%arg0: i32) -> (i32, i32) {
    %c0_i32 = arith.constant 0 : i32
    %c0_i32_0 = arith.constant 0 : i32
    %c0_i32_1 = arith.constant 0 : i32
    return %c0_i32, %c0_i32_0 : i32, i32
  }
  func.func @transform_6(%arg0: i32) -> (i32, i32) {
    %c0_i32 = arith.constant 0 : i32
    %c0_i32_0 = arith.constant 0 : i32
    %c0_i32_1 = arith.constant 0 : i32
    return %c0_i32, %c0_i32_0 : i32, i32
  }
  func.func @transform_7(%arg0: i32) -> (i32, i32) {
    %c0_i32 = arith.constant 0 : i32
    %c0_i32_0 = arith.constant 0 : i32
    %c0_i32_1 = arith.constant 0 : i32
    return %c0_i32, %c0_i32_0 : i32, i32
  }
  func.func @transform_8(%arg0: i32) -> (i32, i32) {
    %c0_i32 = arith.constant 0 : i32
    %c0_i32_0 = arith.constant 0 : i32
    %c0_i32_1 = arith.constant 0 : i32
    return %c0_i32, %c0_i32_0 : i32, i32
  }
  func.func @transform_9(%arg0: i32) -> (i32, i32) {
    %c0_i32 = arith.constant 0 : i32
    %c0_i32_0 = arith.constant 0 : i32
    %c0_i32_1 = arith.constant 0 : i32
    return %c0_i32, %c0_i32_0 : i32, i32
  }
  func.func @transform_10(%arg0: i32) -> (i32, i32) {
    %c0_i32 = arith.constant 0 : i32
    %c0_i32_0 = arith.constant 0 : i32
    %c0_i32_1 = arith.constant 0 : i32
    return %c0_i32, %c0_i32_0 : i32, i32
  }
  func.func @transform_11(%arg0: i32) -> (i32, i32) {
    %c0_i32 = arith.constant 0 : i32
    %c0_i32_0 = arith.constant 0 : i32
    %c0_i32_1 = arith.constant 0 : i32
    return %c0_i32, %c0_i32_0 : i32, i32
  }
  func.func @transform_12(%arg0: i32) -> (i32, i32) {
    %c0_i32 = arith.constant 0 : i32
    %c0_i32_0 = arith.constant 0 : i32
    %c0_i32_1 = arith.constant 0 : i32
    return %c0_i32, %c0_i32_0 : i32, i32
  }
  func.func @transform_13(%arg0: i32) -> (i32, i32, i32) {
    %c0_i32 = arith.constant 0 : i32
    %c0_i32_0 = arith.constant 0 : i32
    %c0_i32_1 = arith.constant 0 : i32
    return %arg0, %c0_i32, %c0_i32_0 : i32, i32, i32
  }
}

module attributes {stable_mosaic.version = 11 : i64} {
  func.func @spe_encoder_kernel(%arg0: i32, %arg1: memref<2x16x256xbf16, #tpu.memory_space<vmem>>, %arg2: memref<256x768xbf16, #tpu.memory_space<vmem>>, %arg3: memref<1x768xf32, #tpu.memory_space<vmem>>, %arg4: memref<256x256xbf16, #tpu.memory_space<vmem>>, %arg5: memref<1x256xf32, #tpu.memory_space<vmem>>, %arg6: memref<1x256xf32, #tpu.memory_space<vmem>>, %arg7: memref<1x256xf32, #tpu.memory_space<vmem>>, %arg8: memref<256x512xbf16, #tpu.memory_space<vmem>>, %arg9: memref<1x512xf32, #tpu.memory_space<vmem>>, %arg10: memref<512x256xbf16, #tpu.memory_space<vmem>>, %arg11: memref<1x256xf32, #tpu.memory_space<vmem>>, %arg12: memref<1x256xf32, #tpu.memory_space<vmem>>, %arg13: memref<1x256xf32, #tpu.memory_space<vmem>>, %arg14: memref<2x16x256xbf16, #tpu.memory_space<vmem>>, %arg15: memref<32x256xbf16, #tpu.memory_space<vmem>>) attributes {dimension_semantics = [#tpu.dimension_semantics<parallel>], iteration_bounds = array<i64: 1>, scalar_prefetch = 0 : i64, scratch_operands = 1 : i64, tpu.core_type = #tpu.core_type<tc>, window_params = [{transform_indices = @transform_0, window_bounds = array<i64: 2, 16, 256>}, {pipeline_mode = #tpu.pipeline_mode<synchronous>, transform_indices = @transform_1, window_bounds = array<i64: 256, 768>}, {pipeline_mode = #tpu.pipeline_mode<synchronous>, transform_indices = @transform_2, window_bounds = array<i64: 1, 768>}, {pipeline_mode = #tpu.pipeline_mode<synchronous>, transform_indices = @transform_3, window_bounds = array<i64: 256, 256>}, {pipeline_mode = #tpu.pipeline_mode<synchronous>, transform_indices = @transform_4, window_bounds = array<i64: 1, 256>}, {pipeline_mode = #tpu.pipeline_mode<synchronous>, transform_indices = @transform_5, window_bounds = array<i64: 1, 256>}, {pipeline_mode = #tpu.pipeline_mode<synchronous>, transform_indices = @transform_6, window_bounds = array<i64: 1, 256>}, {pipeline_mode = #tpu.pipeline_mode<synchronous>, transform_indices = @transform_7, window_bounds = array<i64: 256, 512>}, {pipeline_mode = #tpu.pipeline_mode<synchronous>, transform_indices = @transform_8, window_bounds = array<i64: 1, 512>}, {pipeline_mode = #tpu.pipeline_mode<synchronous>, transform_indices = @transform_9, window_bounds = array<i64: 512, 256>}, {pipeline_mode = #tpu.pipeline_mode<synchronous>, transform_indices = @transform_10, window_bounds = array<i64: 1, 256>}, {pipeline_mode = #tpu.pipeline_mode<synchronous>, transform_indices = @transform_11, window_bounds = array<i64: 1, 256>}, {pipeline_mode = #tpu.pipeline_mode<synchronous>, transform_indices = @transform_12, window_bounds = array<i64: 1, 256>}, {transform_indices = @transform_13, window_bounds = array<i64: 2, 16, 256>}]} {
    %c0 = arith.constant 0 : index
    %c0_0 = arith.constant 0 : index
    %c0_1 = arith.constant 0 : index
    %0 = vector.load %arg1[%c0, %c0_0, %c0_1] : memref<2x16x256xbf16, #tpu.memory_space<vmem>>, vector<2x16x256xbf16>
    %1 = vector.shape_cast %0 : vector<2x16x256xbf16> to vector<32x256xbf16>
    %c0_2 = arith.constant 0 : index
    %c0_3 = arith.constant 0 : index
    %2 = vector.load %arg2[%c0_2, %c0_3] : memref<256x768xbf16, #tpu.memory_space<vmem>>, vector<256x768xbf16>
    %cst = arith.constant dense<0.000000e+00> : vector<32x768xf32>
    %3 = tpu.matmul %1, %2, %cst {dimension_numbers = #tpu.dot_dimension_numbers<[1], [0], [0], [1], [0, 0, 1, 1], [], []>} : vector<32x256xbf16>, vector<256x768xbf16>, vector<32x768xf32> -> vector<32x768xf32>
    %c0_4 = arith.constant 0 : index
    %c0_5 = arith.constant 0 : index
    %4 = vector.load %arg3[%c0_4, %c0_5] : memref<1x768xf32, #tpu.memory_space<vmem>>, vector<1x768xf32>
    %5 = vector.broadcast %4 : vector<1x768xf32> to vector<32x768xf32>
    %6 = arith.addf %3, %5 : vector<32x768xf32>
    %7 = arith.truncf %6 : vector<32x768xf32> to vector<32x768xbf16>
    %8 = vector.extract_strided_slice %7 {offsets = [0, 0], sizes = [32, 256], strides = [1, 1]} : vector<32x768xbf16> to vector<32x256xbf16>
    %9 = vector.extract_strided_slice %7 {offsets = [0, 256], sizes = [32, 256], strides = [1, 1]} : vector<32x768xbf16> to vector<32x256xbf16>
    %10 = vector.extract_strided_slice %7 {offsets = [0, 512], sizes = [32, 256], strides = [1, 1]} : vector<32x768xbf16> to vector<32x256xbf16>
    %11 = vector.extract_strided_slice %8 {offsets = [0, 0], sizes = [16, 128], strides = [1, 1]} : vector<32x256xbf16> to vector<16x128xbf16>
    %12 = vector.extract_strided_slice %9 {offsets = [0, 0], sizes = [16, 128], strides = [1, 1]} : vector<32x256xbf16> to vector<16x128xbf16>
    %13 = vector.extract_strided_slice %10 {offsets = [0, 0], sizes = [16, 128], strides = [1, 1]} : vector<32x256xbf16> to vector<16x128xbf16>
    %cst_6 = arith.constant dense<0.000000e+00> : vector<16x16xf32>
    %14 = tpu.matmul %11, %12, %cst_6 {dimension_numbers = #tpu.dot_dimension_numbers<[1], [1], [0], [0], [0, 0, 1, 0], [], []>} : vector<16x128xbf16>, vector<16x128xbf16>, vector<16x16xf32> -> vector<16x16xf32>
    %cst_7 = arith.constant dense<0xFF800000> : vector<16xf32>
    %15 = vector.multi_reduction <maximumf>, %14, %cst_7 [1] : vector<16x16xf32> to vector<16xf32>
    %16 = vector.shape_cast %15 : vector<16xf32> to vector<16x1xf32>
    %17 = vector.broadcast %16 : vector<16x1xf32> to vector<16x16xf32>
    %18 = arith.subf %14, %17 : vector<16x16xf32>
    %19 = math.exp %18 : vector<16x16xf32>
    %cst_8 = arith.constant dense<0.000000e+00> : vector<16xf32>
    %20 = vector.multi_reduction <add>, %19, %cst_8 [1] : vector<16x16xf32> to vector<16xf32>
    %21 = vector.shape_cast %20 : vector<16xf32> to vector<16x1xf32>
    %22 = tpu.reciprocal %21 {approx = true} : vector<16x1xf32> -> vector<16x1xf32>
    %23 = vector.broadcast %22 : vector<16x1xf32> to vector<16x16xf32>
    %24 = arith.mulf %19, %23 : vector<16x16xf32>
    %25 = arith.truncf %24 : vector<16x16xf32> to vector<16x16xbf16>
    %cst_9 = arith.constant dense<0.000000e+00> : vector<16x128xf32>
    %26 = tpu.matmul %25, %13, %cst_9 {dimension_numbers = #tpu.dot_dimension_numbers<[1], [0], [0], [1], [0, 0, 1, 1], [], []>} : vector<16x16xbf16>, vector<16x128xbf16>, vector<16x128xf32> -> vector<16x128xf32>
    %27 = arith.truncf %26 : vector<16x128xf32> to vector<16x128xbf16>
    %c0_10 = arith.constant 0 : index
    %c0_11 = arith.constant 0 : index
    %28 = vector.load %arg15[%c0_10, %c0_11] : memref<32x256xbf16, #tpu.memory_space<vmem>>, vector<16x128xbf16>
    tpu.vector_store %arg15[%c0_10, %c0_11], %27 {strides = array<i32>} : memref<32x256xbf16, #tpu.memory_space<vmem>>, vector<16x128xbf16>,
    %29 = vector.extract_strided_slice %8 {offsets = [0, 128], sizes = [16, 128], strides = [1, 1]} : vector<32x256xbf16> to vector<16x128xbf16>
    %30 = vector.extract_strided_slice %9 {offsets = [0, 128], sizes = [16, 128], strides = [1, 1]} : vector<32x256xbf16> to vector<16x128xbf16>
    %31 = vector.extract_strided_slice %10 {offsets = [0, 128], sizes = [16, 128], strides = [1, 1]} : vector<32x256xbf16> to vector<16x128xbf16>
    %cst_12 = arith.constant dense<0.000000e+00> : vector<16x16xf32>
    %32 = tpu.matmul %29, %30, %cst_12 {dimension_numbers = #tpu.dot_dimension_numbers<[1], [1], [0], [0], [0, 0, 1, 0], [], []>} : vector<16x128xbf16>, vector<16x128xbf16>, vector<16x16xf32> -> vector<16x16xf32>
    %cst_13 = arith.constant dense<0xFF800000> : vector<16xf32>
    %33 = vector.multi_reduction <maximumf>, %32, %cst_13 [1] : vector<16x16xf32> to vector<16xf32>
    %34 = vector.shape_cast %33 : vector<16xf32> to vector<16x1xf32>
    %35 = vector.broadcast %34 : vector<16x1xf32> to vector<16x16xf32>
    %36 = arith.subf %32, %35 : vector<16x16xf32>
    %37 = math.exp %36 : vector<16x16xf32>
    %cst_14 = arith.constant dense<0.000000e+00> : vector<16xf32>
    %38 = vector.multi_reduction <add>, %37, %cst_14 [1] : vector<16x16xf32> to vector<16xf32>
    %39 = vector.shape_cast %38 : vector<16xf32> to vector<16x1xf32>
    %40 = tpu.reciprocal %39 {approx = true} : vector<16x1xf32> -> vector<16x1xf32>
    %41 = vector.broadcast %40 : vector<16x1xf32> to vector<16x16xf32>
    %42 = arith.mulf %37, %41 : vector<16x16xf32>
    %43 = arith.truncf %42 : vector<16x16xf32> to vector<16x16xbf16>
    %cst_15 = arith.constant dense<0.000000e+00> : vector<16x128xf32>
    %44 = tpu.matmul %43, %31, %cst_15 {dimension_numbers = #tpu.dot_dimension_numbers<[1], [0], [0], [1], [0, 0, 1, 1], [], []>} : vector<16x16xbf16>, vector<16x128xbf16>, vector<16x128xf32> -> vector<16x128xf32>
    %45 = arith.truncf %44 : vector<16x128xf32> to vector<16x128xbf16>
    %c0_16 = arith.constant 0 : index
    %c128 = arith.constant 128 : index
    %46 = vector.load %arg15[%c0_16, %c128] : memref<32x256xbf16, #tpu.memory_space<vmem>>, vector<16x128xbf16>
    tpu.vector_store %arg15[%c0_16, %c128], %45 {strides = array<i32>} : memref<32x256xbf16, #tpu.memory_space<vmem>>, vector<16x128xbf16>,
    %47 = vector.extract_strided_slice %8 {offsets = [16, 0], sizes = [16, 128], strides = [1, 1]} : vector<32x256xbf16> to vector<16x128xbf16>
    %48 = vector.extract_strided_slice %9 {offsets = [16, 0], sizes = [16, 128], strides = [1, 1]} : vector<32x256xbf16> to vector<16x128xbf16>
    %49 = vector.extract_strided_slice %10 {offsets = [16, 0], sizes = [16, 128], strides = [1, 1]} : vector<32x256xbf16> to vector<16x128xbf16>
    %cst_17 = arith.constant dense<0.000000e+00> : vector<16x16xf32>
    %50 = tpu.matmul %47, %48, %cst_17 {dimension_numbers = #tpu.dot_dimension_numbers<[1], [1], [0], [0], [0, 0, 1, 0], [], []>} : vector<16x128xbf16>, vector<16x128xbf16>, vector<16x16xf32> -> vector<16x16xf32>
    %cst_18 = arith.constant dense<0xFF800000> : vector<16xf32>
    %51 = vector.multi_reduction <maximumf>, %50, %cst_18 [1] : vector<16x16xf32> to vector<16xf32>
    %52 = vector.shape_cast %51 : vector<16xf32> to vector<16x1xf32>
    %53 = vector.broadcast %52 : vector<16x1xf32> to vector<16x16xf32>
    %54 = arith.subf %50, %53 : vector<16x16xf32>
    %55 = math.exp %54 : vector<16x16xf32>
    %cst_19 = arith.constant dense<0.000000e+00> : vector<16xf32>
    %56 = vector.multi_reduction <add>, %55, %cst_19 [1] : vector<16x16xf32> to vector<16xf32>
    %57 = vector.shape_cast %56 : vector<16xf32> to vector<16x1xf32>
    %58 = tpu.reciprocal %57 {approx = true} : vector<16x1xf32> -> vector<16x1xf32>
    %59 = vector.broadcast %58 : vector<16x1xf32> to vector<16x16xf32>
    %60 = arith.mulf %55, %59 : vector<16x16xf32>
    %61 = arith.truncf %60 : vector<16x16xf32> to vector<16x16xbf16>
    %cst_20 = arith.constant dense<0.000000e+00> : vector<16x128xf32>
    %62 = tpu.matmul %61, %49, %cst_20 {dimension_numbers = #tpu.dot_dimension_numbers<[1], [0], [0], [1], [0, 0, 1, 1], [], []>} : vector<16x16xbf16>, vector<16x128xbf16>, vector<16x128xf32> -> vector<16x128xf32>
    %63 = arith.truncf %62 : vector<16x128xf32> to vector<16x128xbf16>
    %c16 = arith.constant 16 : index
    %c0_21 = arith.constant 0 : index
    %64 = vector.load %arg15[%c16, %c0_21] : memref<32x256xbf16, #tpu.memory_space<vmem>>, vector<16x128xbf16>
    tpu.vector_store %arg15[%c16, %c0_21], %63 {strides = array<i32>} : memref<32x256xbf16, #tpu.memory_space<vmem>>, vector<16x128xbf16>,
    %65 = vector.extract_strided_slice %8 {offsets = [16, 128], sizes = [16, 128], strides = [1, 1]} : vector<32x256xbf16> to vector<16x128xbf16>
    %66 = vector.extract_strided_slice %9 {offsets = [16, 128], sizes = [16, 128], strides = [1, 1]} : vector<32x256xbf16> to vector<16x128xbf16>
    %67 = vector.extract_strided_slice %10 {offsets = [16, 128], sizes = [16, 128], strides = [1, 1]} : vector<32x256xbf16> to vector<16x128xbf16>
    %cst_22 = arith.constant dense<0.000000e+00> : vector<16x16xf32>
    %68 = tpu.matmul %65, %66, %cst_22 {dimension_numbers = #tpu.dot_dimension_numbers<[1], [1], [0], [0], [0, 0, 1, 0], [], []>} : vector<16x128xbf16>, vector<16x128xbf16>, vector<16x16xf32> -> vector<16x16xf32>
    %cst_23 = arith.constant dense<0xFF800000> : vector<16xf32>
    %69 = vector.multi_reduction <maximumf>, %68, %cst_23 [1] : vector<16x16xf32> to vector<16xf32>
    %70 = vector.shape_cast %69 : vector<16xf32> to vector<16x1xf32>
    %71 = vector.broadcast %70 : vector<16x1xf32> to vector<16x16xf32>
    %72 = arith.subf %68, %71 : vector<16x16xf32>
    %73 = math.exp %72 : vector<16x16xf32>
    %cst_24 = arith.constant dense<0.000000e+00> : vector<16xf32>
    %74 = vector.multi_reduction <add>, %73, %cst_24 [1] : vector<16x16xf32> to vector<16xf32>
    %75 = vector.shape_cast %74 : vector<16xf32> to vector<16x1xf32>
    %76 = tpu.reciprocal %75 {approx = true} : vector<16x1xf32> -> vector<16x1xf32>
    %77 = vector.broadcast %76 : vector<16x1xf32> to vector<16x16xf32>
    %78 = arith.mulf %73, %77 : vector<16x16xf32>
    %79 = arith.truncf %78 : vector<16x16xf32> to vector<16x16xbf16>
    %cst_25 = arith.constant dense<0.000000e+00> : vector<16x128xf32>
    %80 = tpu.matmul %79, %67, %cst_25 {dimension_numbers = #tpu.dot_dimension_numbers<[1], [0], [0], [1], [0, 0, 1, 1], [], []>} : vector<16x16xbf16>, vector<16x128xbf16>, vector<16x128xf32> -> vector<16x128xf32>
    %81 = arith.truncf %80 : vector<16x128xf32> to vector<16x128xbf16>
    %c16_26 = arith.constant 16 : index
    %c128_27 = arith.constant 128 : index
    %82 = vector.load %arg15[%c16_26, %c128_27] : memref<32x256xbf16, #tpu.memory_space<vmem>>, vector<16x128xbf16>
    tpu.vector_store %arg15[%c16_26, %c128_27], %81 {strides = array<i32>} : memref<32x256xbf16, #tpu.memory_space<vmem>>, vector<16x128xbf16>,
    %c0_28 = arith.constant 0 : index
    %c0_29 = arith.constant 0 : index
    %83 = vector.load %arg15[%c0_28, %c0_29] : memref<32x256xbf16, #tpu.memory_space<vmem>>, vector<32x256xbf16>
    %c0_30 = arith.constant 0 : index
    %c0_31 = arith.constant 0 : index
    %84 = vector.load %arg4[%c0_30, %c0_31] : memref<256x256xbf16, #tpu.memory_space<vmem>>, vector<256x256xbf16>
    %cst_32 = arith.constant dense<0.000000e+00> : vector<32x256xf32>
    %85 = tpu.matmul %83, %84, %cst_32 {dimension_numbers = #tpu.dot_dimension_numbers<[1], [0], [0], [1], [0, 0, 1, 1], [], []>} : vector<32x256xbf16>, vector<256x256xbf16>, vector<32x256xf32> -> vector<32x256xf32>
    %c0_33 = arith.constant 0 : index
    %c0_34 = arith.constant 0 : index
    %86 = vector.load %arg5[%c0_33, %c0_34] : memref<1x256xf32, #tpu.memory_space<vmem>>, vector<1x256xf32>
    %87 = vector.broadcast %86 : vector<1x256xf32> to vector<32x256xf32>
    %88 = arith.addf %85, %87 : vector<32x256xf32>
    %89 = arith.extf %1 : vector<32x256xbf16> to vector<32x256xf32>
    %90 = arith.addf %89, %88 : vector<32x256xf32>
    %c0_35 = arith.constant 0 : index
    %c0_36 = arith.constant 0 : index
    %91 = vector.load %arg6[%c0_35, %c0_36] : memref<1x256xf32, #tpu.memory_space<vmem>>, vector<1x256xf32>
    %c0_37 = arith.constant 0 : index
    %c0_38 = arith.constant 0 : index
    %92 = vector.load %arg7[%c0_37, %c0_38] : memref<1x256xf32, #tpu.memory_space<vmem>>, vector<1x256xf32>
    %cst_39 = arith.constant dense<0.000000e+00> : vector<32xf32>
    %93 = vector.multi_reduction <add>, %90, %cst_39 [1] : vector<32x256xf32> to vector<32xf32>
    %94 = vector.shape_cast %93 : vector<32xf32> to vector<32x1xf32>
    %cst_40 = arith.constant 2.560000e+02 : f32
    %95 = vector.broadcast %cst_40 : f32 to vector<32x1xf32>
    %96 = arith.divf %94, %95 : vector<32x1xf32>
    %97 = vector.broadcast %96 : vector<32x1xf32> to vector<32x256xf32>
    %98 = arith.subf %90, %97 : vector<32x256xf32>
    %99 = arith.mulf %98, %98 : vector<32x256xf32>
    %cst_41 = arith.constant dense<0.000000e+00> : vector<32xf32>
    %100 = vector.multi_reduction <add>, %99, %cst_41 [1] : vector<32x256xf32> to vector<32xf32>
    %101 = vector.shape_cast %100 : vector<32xf32> to vector<32x1xf32>
    %cst_42 = arith.constant 2.560000e+02 : f32
    %102 = vector.broadcast %cst_42 : f32 to vector<32x1xf32>
    %103 = arith.divf %101, %102 : vector<32x1xf32>
    %cst_43 = arith.constant 9.99999974E-6 : f32
    %104 = vector.broadcast %cst_43 : f32 to vector<32x1xf32>
    %105 = arith.addf %103, %104 : vector<32x1xf32>
    %106 = math.rsqrt %105 : vector<32x1xf32>
    %107 = vector.broadcast %106 : vector<32x1xf32> to vector<32x256xf32>
    %108 = arith.mulf %98, %107 : vector<32x256xf32>
    %109 = vector.broadcast %91 : vector<1x256xf32> to vector<32x256xf32>
    %110 = arith.mulf %108, %109 : vector<32x256xf32>
    %111 = vector.broadcast %92 : vector<1x256xf32> to vector<32x256xf32>
    %112 = arith.addf %110, %111 : vector<32x256xf32>
    %113 = arith.truncf %112 : vector<32x256xf32> to vector<32x256xbf16>
    %c0_44 = arith.constant 0 : index
    %c0_45 = arith.constant 0 : index
    %114 = vector.load %arg8[%c0_44, %c0_45] : memref<256x512xbf16, #tpu.memory_space<vmem>>, vector<256x512xbf16>
    %cst_46 = arith.constant dense<0.000000e+00> : vector<32x512xf32>
    %115 = tpu.matmul %113, %114, %cst_46 {dimension_numbers = #tpu.dot_dimension_numbers<[1], [0], [0], [1], [0, 0, 1, 1], [], []>} : vector<32x256xbf16>, vector<256x512xbf16>, vector<32x512xf32> -> vector<32x512xf32>
    %c0_47 = arith.constant 0 : index
    %c0_48 = arith.constant 0 : index
    %116 = vector.load %arg9[%c0_47, %c0_48] : memref<1x512xf32, #tpu.memory_space<vmem>>, vector<1x512xf32>
    %117 = vector.broadcast %116 : vector<1x512xf32> to vector<32x512xf32>
    %118 = arith.addf %115, %117 : vector<32x512xf32>
    %cst_49 = arith.constant 0.000000e+00 : f32
    %119 = vector.broadcast %cst_49 : f32 to vector<32x512xf32>
    %120 = arith.maximumf %118, %119 : vector<32x512xf32>
    %121 = arith.truncf %120 : vector<32x512xf32> to vector<32x512xbf16>
    %c0_50 = arith.constant 0 : index
    %c0_51 = arith.constant 0 : index
    %122 = vector.load %arg10[%c0_50, %c0_51] : memref<512x256xbf16, #tpu.memory_space<vmem>>, vector<512x256xbf16>
    %cst_52 = arith.constant dense<0.000000e+00> : vector<32x256xf32>
    %123 = tpu.matmul %121, %122, %cst_52 {dimension_numbers = #tpu.dot_dimension_numbers<[1], [0], [0], [1], [0, 0, 1, 1], [], []>} : vector<32x512xbf16>, vector<512x256xbf16>, vector<32x256xf32> -> vector<32x256xf32>
    %c0_53 = arith.constant 0 : index
    %c0_54 = arith.constant 0 : index
    %124 = vector.load %arg11[%c0_53, %c0_54] : memref<1x256xf32, #tpu.memory_space<vmem>>, vector<1x256xf32>
    %125 = vector.broadcast %124 : vector<1x256xf32> to vector<32x256xf32>
    %126 = arith.addf %123, %125 : vector<32x256xf32>
    %127 = arith.addf %112, %126 : vector<32x256xf32>
    %c0_55 = arith.constant 0 : index
    %c0_56 = arith.constant 0 : index
    %128 = vector.load %arg12[%c0_55, %c0_56] : memref<1x256xf32, #tpu.memory_space<vmem>>, vector<1x256xf32>
    %c0_57 = arith.constant 0 : index
    %c0_58 = arith.constant 0 : index
    %129 = vector.load %arg13[%c0_57, %c0_58] : memref<1x256xf32, #tpu.memory_space<vmem>>, vector<1x256xf32>
    %cst_59 = arith.constant dense<0.000000e+00> : vector<32xf32>
    %130 = vector.multi_reduction <add>, %127, %cst_59 [1] : vector<32x256xf32> to vector<32xf32>
    %131 = vector.shape_cast %130 : vector<32xf32> to vector<32x1xf32>
    %cst_60 = arith.constant 2.560000e+02 : f32
    %132 = vector.broadcast %cst_60 : f32 to vector<32x1xf32>
    %133 = arith.divf %131, %132 : vector<32x1xf32>
    %134 = vector.broadcast %133 : vector<32x1xf32> to vector<32x256xf32>
    %135 = arith.subf %127, %134 : vector<32x256xf32>
    %136 = arith.mulf %135, %135 : vector<32x256xf32>
    %cst_61 = arith.constant dense<0.000000e+00> : vector<32xf32>
    %137 = vector.multi_reduction <add>, %136, %cst_61 [1] : vector<32x256xf32> to vector<32xf32>
    %138 = vector.shape_cast %137 : vector<32xf32> to vector<32x1xf32>
    %cst_62 = arith.constant 2.560000e+02 : f32
    %139 = vector.broadcast %cst_62 : f32 to vector<32x1xf32>
    %140 = arith.divf %138, %139 : vector<32x1xf32>
    %cst_63 = arith.constant 9.99999974E-6 : f32
    %141 = vector.broadcast %cst_63 : f32 to vector<32x1xf32>
    %142 = arith.addf %140, %141 : vector<32x1xf32>
    %143 = math.rsqrt %142 : vector<32x1xf32>
    %144 = vector.broadcast %143 : vector<32x1xf32> to vector<32x256xf32>
    %145 = arith.mulf %135, %144 : vector<32x256xf32>
    %146 = vector.broadcast %128 : vector<1x256xf32> to vector<32x256xf32>
    %147 = arith.mulf %145, %146 : vector<32x256xf32>
    %148 = vector.broadcast %129 : vector<1x256xf32> to vector<32x256xf32>
    %149 = arith.addf %147, %148 : vector<32x256xf32>
    %150 = vector.shape_cast %149 : vector<32x256xf32> to vector<2x16x256xf32>
    %151 = arith.truncf %150 : vector<2x16x256xf32> to vector<2x16x256xbf16>
    %c0_64 = arith.constant 0 : index
    %c0_65 = arith.constant 0 : index
    %c0_66 = arith.constant 0 : index
    %152 = vector.load %arg14[%c0_64, %c0_65, %c0_66] : memref<2x16x256xbf16, #tpu.memory_space<vmem>>, vector<2x16x256xbf16>
    tpu.vector_store %arg14[%c0_64, %c0_65, %c0_66], %151 {strides = array<i32>} : memref<2x16x256xbf16, #tpu.memory_space<vmem>>, vector<2x16x256xbf16>,
    return
  }
  func.func @transform_0(%arg0: i32) -> (i32, i32, i32) {
    %c0_i32 = arith.constant 0 : i32
    %c0_i32_0 = arith.constant 0 : i32
    %c0_i32_1 = arith.constant 0 : i32
    return %arg0, %c0_i32, %c0_i32_0 : i32, i32, i32
  }
  func.func @transform_1(%arg0: i32) -> (i32, i32) {
    %c0_i32 = arith.constant 0 : i32
    %c0_i32_0 = arith.constant 0 : i32
    %c0_i32_1 = arith.constant 0 : i32
    return %c0_i32, %c0_i32_0 : i32, i32
  }
  func.func @transform_2(%arg0: i32) -> (i32, i32) {
    %c0_i32 = arith.constant 0 : i32
    %c0_i32_0 = arith.constant 0 : i32
    %c0_i32_1 = arith.constant 0 : i32
    return %c0_i32, %c0_i32_0 : i32, i32
  }
  func.func @transform_3(%arg0: i32) -> (i32, i32) {
    %c0_i32 = arith.constant 0 : i32
    %c0_i32_0 = arith.constant 0 : i32
    %c0_i32_1 = arith.constant 0 : i32
    return %c0_i32, %c0_i32_0 : i32, i32
  }
  func.func @transform_4(%arg0: i32) -> (i32, i32) {
    %c0_i32 = arith.constant 0 : i32
    %c0_i32_0 = arith.constant 0 : i32
    %c0_i32_1 = arith.constant 0 : i32
    return %c0_i32, %c0_i32_0 : i32, i32
  }
  func.func @transform_5(%arg0: i32) -> (i32, i32) {
    %c0_i32 = arith.constant 0 : i32
    %c0_i32_0 = arith.constant 0 : i32
    %c0_i32_1 = arith.constant 0 : i32
    return %c0_i32, %c0_i32_0 : i32, i32
  }
  func.func @transform_6(%arg0: i32) -> (i32, i32) {
    %c0_i32 = arith.constant 0 : i32
    %c0_i32_0 = arith.constant 0 : i32
    %c0_i32_1 = arith.constant 0 : i32
    return %c0_i32, %c0_i32_0 : i32, i32
  }
  func.func @transform_7(%arg0: i32) -> (i32, i32) {
    %c0_i32 = arith.constant 0 : i32
    %c0_i32_0 = arith.constant 0 : i32
    %c0_i32_1 = arith.constant 0 : i32
    return %c0_i32, %c0_i32_0 : i32, i32
  }
  func.func @transform_8(%arg0: i32) -> (i32, i32) {
    %c0_i32 = arith.constant 0 : i32
    %c0_i32_0 = arith.constant 0 : i32
    %c0_i32_1 = arith.constant 0 : i32
    return %c0_i32, %c0_i32_0 : i32, i32
  }
  func.func @transform_9(%arg0: i32) -> (i32, i32) {
    %c0_i32 = arith.constant 0 : i32
    %c0_i32_0 = arith.constant 0 : i32
    %c0_i32_1 = arith.constant 0 : i32
    return %c0_i32, %c0_i32_0 : i32, i32
  }
  func.func @transform_10(%arg0: i32) -> (i32, i32) {
    %c0_i32 = arith.constant 0 : i32
    %c0_i32_0 = arith.constant 0 : i32
    %c0_i32_1 = arith.constant 0 : i32
    return %c0_i32, %c0_i32_0 : i32, i32
  }
  func.func @transform_11(%arg0: i32) -> (i32, i32) {
    %c0_i32 = arith.constant 0 : i32
    %c0_i32_0 = arith.constant 0 : i32
    %c0_i32_1 = arith.constant 0 : i32
    return %c0_i32, %c0_i32_0 : i32, i32
  }
  func.func @transform_12(%arg0: i32) -> (i32, i32) {
    %c0_i32 = arith.constant 0 : i32
    %c0_i32_0 = arith.constant 0 : i32
    %c0_i32_1 = arith.constant 0 : i32
    return %c0_i32, %c0_i32_0 : i32, i32
  }
  func.func @transform_13(%arg0: i32) -> (i32, i32, i32) {
    %c0_i32 = arith.constant 0 : i32
    %c0_i32_0 = arith.constant 0 : i32
    %c0_i32_1 = arith.constant 0 : i32
    return %arg0, %c0_i32, %c0_i32_0 : i32, i32, i32
  }
}

</mosaic_0001>

<llo_original>
// kernel: tpu_custom_call.1
$region0: #{tpu_custom_call.1}
  #allocation0 [shape = 'u32[]', space=smem, size = 0x4, offset = 0x4, fixed_abs, tag = 'smem constant byte address 0x4 - core index']
  #allocation1 [shape = 'u32[72,128]{1,0:T(1,128)}', space=vmem, size = 0x9000, scoped, tag = 'internal scratch']
  #allocation2 [shape = 'bf16[32,256]{1,0:T(8,128)(2,1)}', space=vmem, size = 0x4000, scoped, tag = 'scratch operand']
  %s0 = inlined_call_operand.hbm [shape: bf16[2,16,256], index: 0, kind: input, shape index: {}]
  %s1 = inlined_call_operand.hbm [shape: bf16[256,768], index: 1, kind: input, shape index: {}]
  %s2 = inlined_call_operand.hbm [shape: f32[1,768], index: 2, kind: input, shape index: {}]
  %s3 = inlined_call_operand.hbm [shape: bf16[256,256], index: 3, kind: input, shape index: {}]
  %s4 = inlined_call_operand.vmem [shape: f32[1,256], index: 4, kind: input, shape index: {}]
  %s5 = inlined_call_operand.hbm [shape: f32[1,256], index: 5, kind: input, shape index: {}]
  %s6 = inlined_call_operand.hbm [shape: f32[1,256], index: 6, kind: input, shape index: {}]
  %s7 = inlined_call_operand.hbm [shape: bf16[256,512], index: 7, kind: input, shape index: {}]
  %s8 = inlined_call_operand.vmem [shape: f32[1,512], index: 8, kind: input, shape index: {}]
  %s9 = inlined_call_operand.hbm [shape: bf16[512,256], index: 9, kind: input, shape index: {}]
  %s10 = inlined_call_operand.vmem [shape: f32[1,256], index: 10, kind: input, shape index: {}]
  %s11 = inlined_call_operand.vmem [shape: f32[1,256], index: 11, kind: input, shape index: {}]
  %s12 = inlined_call_operand.hbm [shape: f32[1,256], index: 12, kind: input, shape index: {}]
  %s13 = inlined_call_operand.hbm [shape: bf16[2,16,256], index: 13, kind: output, shape index: {}]
  %s14 = sld [smem:[#allocation0]]
  $region98: #{tpu_custom_call.1} parent=0
    _
  %s16 = ssub.s32 1, %s14
  %s17 = scalar_select 0, %s16, %s14
  $region1: #{tpu_custom_call.1} parent=0
    #allocation3 [shape = 'u8[16384]{0}', space=vmem, size = 0x4000, scoped, tag = 'input window, operand 0, single buffered']
    #allocation4 [shape = 's32[1]{0}', space=sflag, size = 0x4, scoped, tag = 'scoped memory for tpu_custom_call.1']
    #allocation5 [shape = 's32[1]{0}', space=sflag, size = 0x4, scoped, tag = 'scoped memory for tpu_custom_call.1']
    #allocation6 [shape = 'u8[393216]{0}', space=vmem, size = 0x60000, scoped, tag = 'input window, operand 1, single buffered']
    #allocation7 [shape = 's32[1]{0}', space=sflag, size = 0x4, scoped, tag = 'scoped memory for tpu_custom_call.1']
    #allocation8 [shape = 'u8[3072]{0}', space=vmem, size = 0xc00, scoped, tag = 'input window, operand 2, single buffered']
    #allocation9 [shape = 'u8[131072]{0}', space=vmem, size = 0x20000, scoped, tag = 'input window, operand 3, single buffered']
    #allocation10 [shape = 's32[1]{0}', space=sflag, size = 0x4, scoped, tag = 'scoped memory for tpu_custom_call.1']
    #allocation11 [shape = 'u8[1024]{0}', space=vmem, size = 0x400, scoped, tag = 'input window, operand 5, single buffered']
    #allocation12 [shape = 'u8[1024]{0}', space=vmem, size = 0x400, scoped, tag = 'input window, operand 6, single buffered']
    #allocation13 [shape = 's32[1]{0}', space=sflag, size = 0x4, scoped, tag = 'scoped memory for tpu_custom_call.1']
    #allocation14 [shape = 'u8[262144]{0}', space=vmem, size = 0x40000, scoped, tag = 'input window, operand 7, single buffered']
    #allocation15 [shape = 'u8[262144]{0}', space=vmem, size = 0x40000, scoped, tag = 'input window, operand 9, single buffered']
    #allocation16 [shape = 's32[1]{0}', space=sflag, size = 0x4, scoped, tag = 'scoped memory for tpu_custom_call.1']
    #allocation17 [shape = 'u8[1024]{0}', space=vmem, size = 0x400, scoped, tag = 'input window, operand 12, single buffered']
    #allocation18 [shape = 'u8[16384]{0}', space=vmem, size = 0x4000, scoped, tag = 'output window, operand 0, single buffered']
    %18 = vsyncpa [#allocation4], 0
    %19 = vsyncpa [#allocation7], 0
    %20 = vsyncpa [#allocation10], 0
    %21 = vsyncpa [#allocation13], 0
    %22 = vsyncpa [#allocation16], 0
    %23 = vsyncpa [#allocation5], 0
    // Predicated region
    $region2: #{tpu_custom_call.1} parent=1 // pred_check
      _
    $region3: #{tpu_custom_call.1} parent=1 // pred_check_branch
      %25 = sbr.rel (0) target = $region5
    $region4: #{tpu_custom_call.1} parent=1 // pred_region
      %27 = vsyncadd [#allocation4], 0
      %s28 = sshll.u32 %s0, 4
      %s29 = int_to_ptr.hbm [resolvable:$true] %s28
      %s30 = sshll.u32 [#allocation3], 4
      %s31 = int_to_ptr.vmem [resolvable:$true] %s30
      %36 = dma.hbm_to_vmem [thread:$0]  %s29, 512, %s31, [#allocation4], 128, 128, 8
    $region5: #{tpu_custom_call.1} parent=1 // pred_fallthru
      _
    // Predicated region
    $region6: #{tpu_custom_call.1} parent=1 // pred_check
      _
    $region7: #{tpu_custom_call.1} parent=1 // pred_check_branch
      %38 = sbr.rel (0) target = $region9
    $region8: #{tpu_custom_call.1} parent=1 // pred_region
      %40 = vsyncadd [#allocation7], 0
      %s41 = sshll.u32 %s1, 4
      %s42 = int_to_ptr.hbm [resolvable:$true] %s41
      %s43 = sshll.u32 [#allocation6], 4
      %s44 = int_to_ptr.vmem [resolvable:$true] %s43
      %49 = dma.hbm_to_vmem [thread:$0]  %s42, 12288, %s44, [#allocation7], 384, 384, 24
    $region9: #{tpu_custom_call.1} parent=1 // pred_fallthru
      _
    // Predicated region
    $region10: #{tpu_custom_call.1} parent=1 // pred_check
      _
    $region11: #{tpu_custom_call.1} parent=1 // pred_check_branch
      %51 = sbr.rel (0) target = $region13
    $region12: #{tpu_custom_call.1} parent=1 // pred_region
      %53 = vsyncadd [#allocation7], 0
      %s55 = sshll.u32 %s2, 4
      %s56 = int_to_ptr.hbm [resolvable:$true] %s55
      %s57 = sshll.u32 [#allocation8], 4
      %s58 = int_to_ptr.vmem [resolvable:$true] %s57
      %60 = dma.hbm_to_vmem [thread:$0]  %s56, 96, %s58, [#allocation7]
    $region13: #{tpu_custom_call.1} parent=1 // pred_fallthru
      _
    // Predicated region
    $region14: #{tpu_custom_call.1} parent=1 // pred_check
      _
    $region15: #{tpu_custom_call.1} parent=1 // pred_check_branch
      %62 = sbr.rel (0) target = $region17
    $region16: #{tpu_custom_call.1} parent=1 // pred_region
      %64 = vsyncadd [#allocation10], 0
      %s65 = sshll.u32 %s3, 4
      %s66 = int_to_ptr.hbm [resolvable:$true] %s65
      %s67 = sshll.u32 [#allocation9], 4
      %s68 = int_to_ptr.vmem [resolvable:$true] %s67
      %73 = dma.hbm_to_vmem [thread:$0]  %s66, 4096, %s68, [#allocation10], 128, 128, 8
    $region17: #{tpu_custom_call.1} parent=1 // pred_fallthru
      _
    // Predicated region
    $region18: #{tpu_custom_call.1} parent=1 // pred_check
      _
    $region19: #{tpu_custom_call.1} parent=1 // pred_check_branch
      %75 = sbr.rel (0) target = $region21
    $region20: #{tpu_custom_call.1} parent=1 // pred_region
      _
    $region21: #{tpu_custom_call.1} parent=1 // pred_fallthru
      _
    // Predicated region
    $region22: #{tpu_custom_call.1} parent=1 // pred_check
      _
    $region23: #{tpu_custom_call.1} parent=1 // pred_check_branch
      %77 = sbr.rel (0) target = $region25
    $region24: #{tpu_custom_call.1} parent=1 // pred_region
      %79 = vsyncadd [#allocation10], 0
      %s81 = sshll.u32 %s5, 4
      %s82 = int_to_ptr.hbm [resolvable:$true] %s81
      %s83 = sshll.u32 [#allocation11], 4
      %s84 = int_to_ptr.vmem [resolvable:$true] %s83
      %86 = dma.hbm_to_vmem [thread:$0]  %s82, 32, %s84, [#allocation10]
    $region25: #{tpu_custom_call.1} parent=1 // pred_fallthru
      _
    // Predicated region
    $region26: #{tpu_custom_call.1} parent=1 // pred_check
      _
    $region27: #{tpu_custom_call.1} parent=1 // pred_check_branch
      %88 = sbr.rel (0) target = $region29
    $region28: #{tpu_custom_call.1} parent=1 // pred_region
      %90 = vsyncadd [#allocation13], 0
      %s92 = sshll.u32 %s6, 4
      %s93 = int_to_ptr.hbm [resolvable:$true] %s92
      %s94 = sshll.u32 [#allocation12], 4
      %s95 = int_to_ptr.vmem [resolvable:$true] %s94
      %97 = dma.hbm_to_vmem [thread:$0]  %s93, 32, %s95, [#allocation13]
    $region29: #{tpu_custom_call.1} parent=1 // pred_fallthru
      _
    // Predicated region
    $region30: #{tpu_custom_call.1} parent=1 // pred_check
      _
    $region31: #{tpu_custom_call.1} parent=1 // pred_check_branch
      %99 = sbr.rel (0) target = $region33
    $region32: #{tpu_custom_call.1} parent=1 // pred_region
      %101 = vsyncadd [#allocation13], 0
      %s102 = sshll.u32 %s7, 4
      %s103 = int_to_ptr.hbm [resolvable:$true] %s102
      %s104 = sshll.u32 [#allocation14], 4
      %s105 = int_to_ptr.vmem [resolvable:$true] %s104
      %110 = dma.hbm_to_vmem [thread:$0]  %s103, 8192, %s105, [#allocation13], 256, 256, 16
    $region33: #{tpu_custom_call.1} parent=1 // pred_fallthru
      _
    // Predicated region
    $region34: #{tpu_custom_call.1} parent=1 // pred_check
      _
    $region35: #{tpu_custom_call.1} parent=1 // pred_check_branch
      %112 = sbr.rel (0) target = $region37
    $region36: #{tpu_custom_call.1} parent=1 // pred_region
      _
    $region37: #{tpu_custom_call.1} parent=1 // pred_fallthru
      _
    // Predicated region
    $region38: #{tpu_custom_call.1} parent=1 // pred_check
      _
    $region39: #{tpu_custom_call.1} parent=1 // pred_check_branch
      %114 = sbr.rel (0) target = $region41
    $region40: #{tpu_custom_call.1} parent=1 // pred_region
      %116 = vsyncadd [#allocation16], 0
      %s117 = sshll.u32 %s9, 4
      %s118 = int_to_ptr.hbm [resolvable:$true] %s117
      %s119 = sshll.u32 [#allocation15], 4
      %s120 = int_to_ptr.vmem [resolvable:$true] %s119
      %125 = dma.hbm_to_vmem [thread:$0]  %s118, 8192, %s120, [#allocation16], 128, 128, 8
    $region41: #{tpu_custom_call.1} parent=1 // pred_fallthru
      _
    // Predicated region
    $region42: #{tpu_custom_call.1} parent=1 // pred_check
      _
    $region43: #{tpu_custom_call.1} parent=1 // pred_check_branch
      %127 = sbr.rel (0) target = $region45
    $region44: #{tpu_custom_call.1} parent=1 // pred_region
      _
    $region45: #{tpu_custom_call.1} parent=1 // pred_fallthru
      _
    // Predicated region
    $region46: #{tpu_custom_call.1} parent=1 // pred_check
      _
    $region47: #{tpu_custom_call.1} parent=1 // pred_check_branch
      %129 = sbr.rel (0) target = $region49
    $region48: #{tpu_custom_call.1} parent=1 // pred_region
      _
    $region49: #{tpu_custom_call.1} parent=1 // pred_fallthru
      _
    // Predicated region
    $region50: #{tpu_custom_call.1} parent=1 // pred_check
      _
    $region51: #{tpu_custom_call.1} parent=1 // pred_check_branch
      %131 = sbr.rel (0) target = $region53
    $region52: #{tpu_custom_call.1} parent=1 // pred_region
      %133 = vsyncadd [#allocation16], 0
      %s135 = sshll.u32 %s12, 4
      %s136 = int_to_ptr.hbm [resolvable:$true] %s135
      %s137 = sshll.u32 [#allocation17], 4
      %s138 = int_to_ptr.vmem [resolvable:$true] %s137
      %140 = dma.hbm_to_vmem [thread:$0]  %s136, 32, %s138, [#allocation16]
    $region53: #{tpu_custom_call.1} parent=1 // pred_fallthru
      _
    // Predicated region
    $region54: #{tpu_custom_call.1} parent=1 // pred_check
      _
    $region55: #{tpu_custom_call.1} parent=1 // pred_check_branch
      %142 = sbr.rel (0) target = $region57
    $region56: #{tpu_custom_call.1} parent=1 // pred_region
      %144 = dma.done [#allocation4], 512
    $region57: #{tpu_custom_call.1} parent=1 // pred_fallthru
      _
    // Predicated region
    $region58: #{tpu_custom_call.1} parent=1 // pred_check
      _
    $region59: #{tpu_custom_call.1} parent=1 // pred_check_branch
      %146 = sbr.rel (0) target = $region61
    $region60: #{tpu_custom_call.1} parent=1 // pred_region
      %148 = dma.done [#allocation7], 12288
    $region61: #{tpu_custom_call.1} parent=1 // pred_fallthru
      _
    // Predicated region
    $region62: #{tpu_custom_call.1} parent=1 // pred_check
      _
    $region63: #{tpu_custom_call.1} parent=1 // pred_check_branch
      %150 = sbr.rel (0) target = $region65
    $region64: #{tpu_custom_call.1} parent=1 // pred_region
      %152 = dma.done [#allocation7], 96
    $region65: #{tpu_custom_call.1} parent=1 // pred_fallthru
      _
    // Predicated region
    $region66: #{tpu_custom_call.1} parent=1 // pred_check
      _
    $region67: #{tpu_custom_call.1} parent=1 // pred_check_branch
      %154 = sbr.rel (0) target = $region69
    $region68: #{tpu_custom_call.1} parent=1 // pred_region
      %156 = dma.done [#allocation10], 4096
    $region69: #{tpu_custom_call.1} parent=1 // pred_fallthru
      _
    // Predicated region
    $region70: #{tpu_custom_call.1} parent=1 // pred_check
      _
    $region71: #{tpu_custom_call.1} parent=1 // pred_check_branch
      %158 = sbr.rel (0) target = $region73
    $region72: #{tpu_custom_call.1} parent=1 // pred_region
      %160 = dma.done [#allocation10], 32
    $region73: #{tpu_custom_call.1} parent=1 // pred_fallthru
      _
    // Predicated region
    $region74: #{tpu_custom_call.1} parent=1 // pred_check
      _
    $region75: #{tpu_custom_call.1} parent=1 // pred_check_branch
      %162 = sbr.rel (0) target = $region77
    $region76: #{tpu_custom_call.1} parent=1 // pred_region
      %164 = dma.done [#allocation13], 32
    $region77: #{tpu_custom_call.1} parent=1 // pred_fallthru
      _
    // Predicated region
    $region78: #{tpu_custom_call.1} parent=1 // pred_check
      _
    $region79: #{tpu_custom_call.1} parent=1 // pred_check_branch
      %166 = sbr.rel (0) target = $region81
    $region80: #{tpu_custom_call.1} parent=1 // pred_region
      %168 = dma.done [#allocation13], 8192
    $region81: #{tpu_custom_call.1} parent=1 // pred_fallthru
      _
    // Predicated region
    $region82: #{tpu_custom_call.1} parent=1 // pred_check
      _
    $region83: #{tpu_custom_call.1} parent=1 // pred_check_branch
      %170 = sbr.rel (0) target = $region85
    $region84: #{tpu_custom_call.1} parent=1 // pred_region
      %172 = dma.done [#allocation16], 8192
    $region85: #{tpu_custom_call.1} parent=1 // pred_fallthru
      _
    // Predicated region
    $region86: #{tpu_custom_call.1} parent=1 // pred_check
      _
    $region87: #{tpu_custom_call.1} parent=1 // pred_check_branch
      %174 = sbr.rel (0) target = $region89
    $region88: #{tpu_custom_call.1} parent=1 // pred_region
      %176 = dma.done [#allocation16], 32
    $region89: #{tpu_custom_call.1} parent=1 // pred_fallthru
      _
    %v178 = vld [vmem:[#allocation3] sm:$0xff]
    %v179 = vld [vmem:[#allocation3 + $0x8] sm:$0xff]
    %v180 = vld [vmem:[#allocation3 + $0x10] sm:$0xff]
    %v181 = vld [vmem:[#allocation3 + $0x18] sm:$0xff]
    %v182 = vld [vmem:[#allocation6] sm:$0xff]
    %v183 = vld [vmem:[#allocation6 + $0x8] sm:$0xff]
    %v184 = vld [vmem:[#allocation6 + $0x10] sm:$0xff]
    %v185 = vld [vmem:[#allocation6 + $0x18] sm:$0xff]
    %v186 = vld [vmem:[#allocation6 + $0x20] sm:$0xff]
    %v187 = vld [vmem:[#allocation6 + $0x28] sm:$0xff]
    %v188 = vld [vmem:[#allocation6 + $0x30] sm:$0xff]
    %v189 = vld [vmem:[#allocation6 + $0x38] sm:$0xff]
    %v190 = vld [vmem:[#allocation6 + $0x40] sm:$0xff]
    %v191 = vld [vmem:[#allocation6 + $0x48] sm:$0xff]
    %v192 = vld [vmem:[#allocation6 + $0x50] sm:$0xff]
    %v193 = vld [vmem:[#allocation6 + $0x58] sm:$0xff]
    %v194 = vld [vmem:[#allocation6 + $0x60] sm:$0xff]
    %v195 = vld [vmem:[#allocation6 + $0x68] sm:$0xff]
    %v196 = vld [vmem:[#allocation6 + $0x70] sm:$0xff]
    %v197 = vld [vmem:[#allocation6 + $0x78] sm:$0xff]
    %v198 = vld [vmem:[#allocation6 + $0x80] sm:$0xff]
    %v199 = vld [vmem:[#allocation6 + $0x88] sm:$0xff]
    %v200 = vld [vmem:[#allocation6 + $0x90] sm:$0xff]
    %v201 = vld [vmem:[#allocation6 + $0x98] sm:$0xff]
    %v202 = vld [vmem:[#allocation6 + $0xa0] sm:$0xff]
    %v203 = vld [vmem:[#allocation6 + $0xa8] sm:$0xff]
    %v204 = vld [vmem:[#allocation6 + $0xb0] sm:$0xff]
    %v205 = vld [vmem:[#allocation6 + $0xb8] sm:$0xff]
    %v206 = vld [vmem:[#allocation6 + $0xc0] sm:$0xff]
    %v207 = vld [vmem:[#allocation6 + $0xc8] sm:$0xff]
    %v208 = vld [vmem:[#allocation6 + $0xd0] sm:$0xff]
    %v209 = vld [vmem:[#allocation6 + $0xd8] sm:$0xff]
    %v210 = vld [vmem:[#allocation6 + $0xe0] sm:$0xff]
    %v211 = vld [vmem:[#allocation6 + $0xe8] sm:$0xff]
    %v212 = vld [vmem:[#allocation6 + $0xf0] sm:$0xff]
    %v213 = vld [vmem:[#allocation6 + $0xf8] sm:$0xff]
    %v214 = vld [vmem:[#allocation6 + $0x100] sm:$0xff]
    %v215 = vld [vmem:[#allocation6 + $0x108] sm:$0xff]
    %v216 = vld [vmem:[#allocation6 + $0x110] sm:$0xff]
    %v217 = vld [vmem:[#allocation6 + $0x118] sm:$0xff]
    %v218 = vld [vmem:[#allocation6 + $0x120] sm:$0xff]
    %v219 = vld [vmem:[#allocation6 + $0x128] sm:$0xff]
    %v220 = vld [vmem:[#allocation6 + $0x130] sm:$0xff]
    %v221 = vld [vmem:[#allocation6 + $0x138] sm:$0xff]
    %v222 = vld [vmem:[#allocation6 + $0x140] sm:$0xff]
    %v223 = vld [vmem:[#allocation6 + $0x148] sm:$0xff]
    %v224 = vld [vmem:[#allocation6 + $0x150] sm:$0xff]
    %v225 = vld [vmem:[#allocation6 + $0x158] sm:$0xff]
    %v226 = vld [vmem:[#allocation6 + $0x160] sm:$0xff]
    %v227 = vld [vmem:[#allocation6 + $0x168] sm:$0xff]
    %v228 = vld [vmem:[#allocation6 + $0x170] sm:$0xff]
    %v229 = vld [vmem:[#allocation6 + $0x178] sm:$0xff]
    %v230 = vld [vmem:[#allocation6 + $0x180] sm:$0xff]
    %v231 = vld [vmem:[#allocation6 + $0x188] sm:$0xff]
    %v232 = vld [vmem:[#allocation6 + $0x190] sm:$0xff]
    %v233 = vld [vmem:[#allocation6 + $0x198] sm:$0xff]
    %v234 = vld [vmem:[#allocation6 + $0x1a0] sm:$0xff]
    %v235 = vld [vmem:[#allocation6 + $0x1a8] sm:$0xff]
    %v236 = vld [vmem:[#allocation6 + $0x1b0] sm:$0xff]
    %v237 = vld [vmem:[#allocation6 + $0x1b8] sm:$0xff]
    %v238 = vld [vmem:[#allocation6 + $0x1c0] sm:$0xff]
    %v239 = vld [vmem:[#allocation6 + $0x1c8] sm:$0xff]
    %v240 = vld [vmem:[#allocation6 + $0x1d0] sm:$0xff]
    %v241 = vld [vmem:[#allocation6 + $0x1d8] sm:$0xff]
    %v242 = vld [vmem:[#allocation6 + $0x1e0] sm:$0xff]
    %v243 = vld [vmem:[#allocation6 + $0x1e8] sm:$0xff]
    %v244 = vld [vmem:[#allocation6 + $0x1f0] sm:$0xff]
    %v245 = vld [vmem:[#allocation6 + $0x1f8] sm:$0xff]
    %v246 = vld [vmem:[#allocation6 + $0x200] sm:$0xff]
    %v247 = vld [vmem:[#allocation6 + $0x208] sm:$0xff]
    %v248 = vld [vmem:[#allocation6 + $0x210] sm:$0xff]
    %v249 = vld [vmem:[#allocation6 + $0x218] sm:$0xff]
    %v250 = vld [vmem:[#allocation6 + $0x220] sm:$0xff]
    %v251 = vld [vmem:[#allocation6 + $0x228] sm:$0xff]
    %v252 = vld [vmem:[#allocation6 + $0x230] sm:$0xff]
    %v253 = vld [vmem:[#allocation6 + $0x238] sm:$0xff]
    %v254 = vld [vmem:[#allocation6 + $0x240] sm:$0xff]
    %v255 = vld [vmem:[#allocation6 + $0x248] sm:$0xff]
    %v256 = vld [vmem:[#allocation6 + $0x250] sm:$0xff]
    %v257 = vld [vmem:[#allocation6 + $0x258] sm:$0xff]
    %v258 = vld [vmem:[#allocation6 + $0x260] sm:$0xff]
    %v259 = vld [vmem:[#allocation6 + $0x268] sm:$0xff]
    %v260 = vld [vmem:[#allocation6 + $0x270] sm:$0xff]
    %v261 = vld [vmem:[#allocation6 + $0x278] sm:$0xff]
    %v262 = vld [vmem:[#allocation6 + $0x280] sm:$0xff]
    %v263 = vld [vmem:[#allocation6 + $0x288] sm:$0xff]
    %v264 = vld [vmem:[#allocation6 + $0x290] sm:$0xff]
    %v265 = vld [vmem:[#allocation6 + $0x298] sm:$0xff]
    %v266 = vld [vmem:[#allocation6 + $0x2a0] sm:$0xff]
    %v267 = vld [vmem:[#allocation6 + $0x2a8] sm:$0xff]
    %v268 = vld [vmem:[#allocation6 + $0x2b0] sm:$0xff]
    %v269 = vld [vmem:[#allocation6 + $0x2b8] sm:$0xff]
    %v270 = vld [vmem:[#allocation6 + $0x2c0] sm:$0xff]
    %v271 = vld [vmem:[#allocation6 + $0x2c8] sm:$0xff]
    %v272 = vld [vmem:[#allocation6 + $0x2d0] sm:$0xff]
    %v273 = vld [vmem:[#allocation6 + $0x2d8] sm:$0xff]
    %v274 = vld [vmem:[#allocation6 + $0x2e0] sm:$0xff]
    %v275 = vld [vmem:[#allocation6 + $0x2e8] sm:$0xff]
    %v276 = vld [vmem:[#allocation6 + $0x2f0] sm:$0xff]
    %v277 = vld [vmem:[#allocation6 + $0x2f8] sm:$0xff]
    %v278 = vld [vmem:[#allocation8] sm:$0x3f]
    %v280 = vperm.slane %v278, 0
    %v281 = vperm.slane %v278, 1
    %v282 = vperm.slane %v278, 2
    %v283 = vperm.slane %v278, 3
    %v284 = vperm.slane %v278, 4
    %v285 = vperm.slane %v278, 5
    %v296 = vunpack.c.l.b16 %v178
    %v297 = vunpack.c.h.b16 %v178
    %v298 = vunpack.c.l.b16 %v179
    %v299 = vunpack.c.h.b16 %v179
    %v300 = vunpack.c.l.b16 %v180
    %v301 = vunpack.c.h.b16 %v180
    %v302 = vunpack.c.l.b16 %v181
    %v303 = vunpack.c.h.b16 %v181
    %v304 = vpack.c.b16 %v298, %v296
    %v305 = vpack.c.b16 %v299, %v297
    %v306 = vpack.c.b16 %v302, %v300
    %v307 = vpack.c.b16 %v303, %v301
    %v408 = vunpack.c.l.b16 %v182
    %v409 = vunpack.c.h.b16 %v182
    %v410 = vunpack.c.l.b16 %v183
    %v411 = vunpack.c.h.b16 %v183
    %v412 = vunpack.c.l.b16 %v184
    %v413 = vunpack.c.h.b16 %v184
    %v414 = vunpack.c.l.b16 %v185
    %v415 = vunpack.c.h.b16 %v185
    %v416 = vunpack.c.l.b16 %v186
    %v417 = vunpack.c.h.b16 %v186
    %v418 = vunpack.c.l.b16 %v187
    %v419 = vunpack.c.h.b16 %v187
    %v420 = vunpack.c.l.b16 %v188
    %v421 = vunpack.c.h.b16 %v188
    %v422 = vunpack.c.l.b16 %v189
    %v423 = vunpack.c.h.b16 %v189
    %v424 = vunpack.c.l.b16 %v190
    %v425 = vunpack.c.h.b16 %v190
    %v426 = vunpack.c.l.b16 %v191
    %v427 = vunpack.c.h.b16 %v191
    %v428 = vunpack.c.l.b16 %v192
    %v429 = vunpack.c.h.b16 %v192
    %v430 = vunpack.c.l.b16 %v193
    %v431 = vunpack.c.h.b16 %v193
    %v432 = vunpack.c.l.b16 %v194
    %v433 = vunpack.c.h.b16 %v194
    %v434 = vunpack.c.l.b16 %v195
    %v435 = vunpack.c.h.b16 %v195
    %v436 = vunpack.c.l.b16 %v196
    %v437 = vunpack.c.h.b16 %v196
    %v438 = vunpack.c.l.b16 %v197
    %v439 = vunpack.c.h.b16 %v197
    %v440 = vunpack.c.l.b16 %v198
    %v441 = vunpack.c.h.b16 %v198
    %v442 = vunpack.c.l.b16 %v199
    %v443 = vunpack.c.h.b16 %v199
    %v444 = vunpack.c.l.b16 %v200
    %v445 = vunpack.c.h.b16 %v200
    %v446 = vunpack.c.l.b16 %v201
    %v447 = vunpack.c.h.b16 %v201
    %v448 = vunpack.c.l.b16 %v202
    %v449 = vunpack.c.h.b16 %v202
    %v450 = vunpack.c.l.b16 %v203
    %v451 = vunpack.c.h.b16 %v203
    %v452 = vunpack.c.l.b16 %v204
    %v453 = vunpack.c.h.b16 %v204
    %v454 = vunpack.c.l.b16 %v205
    %v455 = vunpack.c.h.b16 %v205
    %v456 = vunpack.c.l.b16 %v206
    %v457 = vunpack.c.h.b16 %v206
    %v458 = vunpack.c.l.b16 %v207
    %v459 = vunpack.c.h.b16 %v207
    %v460 = vunpack.c.l.b16 %v208
    %v461 = vunpack.c.h.b16 %v208
    %v462 = vunpack.c.l.b16 %v209
    %v463 = vunpack.c.h.b16 %v209
    %v464 = vunpack.c.l.b16 %v210
    %v465 = vunpack.c.h.b16 %v210
    %v466 = vunpack.c.l.b16 %v211
    %v467 = vunpack.c.h.b16 %v211
    %v468 = vunpack.c.l.b16 %v212
    %v469 = vunpack.c.h.b16 %v212
    %v470 = vunpack.c.l.b16 %v213
    %v471 = vunpack.c.h.b16 %v213
    %v472 = vunpack.c.l.b16 %v214
    %v473 = vunpack.c.h.b16 %v214
    %v474 = vunpack.c.l.b16 %v215
    %v475 = vunpack.c.h.b16 %v215
    %v476 = vunpack.c.l.b16 %v216
    %v477 = vunpack.c.h.b16 %v216
    %v478 = vunpack.c.l.b16 %v217
    %v479 = vunpack.c.h.b16 %v217
    %v480 = vunpack.c.l.b16 %v218
    %v481 = vunpack.c.h.b16 %v218
    %v482 = vunpack.c.l.b16 %v219
    %v483 = vunpack.c.h.b16 %v219
    %v484 = vunpack.c.l.b16 %v220
    %v485 = vunpack.c.h.b16 %v220
    %v486 = vunpack.c.l.b16 %v221
    %v487 = vunpack.c.h.b16 %v221
    %v488 = vunpack.c.l.b16 %v222
    %v489 = vunpack.c.h.b16 %v222
    %v490 = vunpack.c.l.b16 %v223
    %v491 = vunpack.c.h.b16 %v223
    %v492 = vunpack.c.l.b16 %v224
    %v493 = vunpack.c.h.b16 %v224
    %v494 = vunpack.c.l.b16 %v225
    %v495 = vunpack.c.h.b16 %v225
    %v496 = vunpack.c.l.b16 %v226
    %v497 = vunpack.c.h.b16 %v226
    %v498 = vunpack.c.l.b16 %v227
    %v499 = vunpack.c.h.b16 %v227
    %v500 = vunpack.c.l.b16 %v228
    %v501 = vunpack.c.h.b16 %v228
    %v502 = vunpack.c.l.b16 %v229
    %v503 = vunpack.c.h.b16 %v229
    %v504 = vunpack.c.l.b16 %v230
    %v505 = vunpack.c.h.b16 %v230
    %v506 = vunpack.c.l.b16 %v231
    %v507 = vunpack.c.h.b16 %v231
    %v508 = vunpack.c.l.b16 %v232
    %v509 = vunpack.c.h.b16 %v232
    %v510 = vunpack.c.l.b16 %v233
    %v511 = vunpack.c.h.b16 %v233
    %v512 = vunpack.c.l.b16 %v234
    %v513 = vunpack.c.h.b16 %v234
    %v514 = vunpack.c.l.b16 %v235
    %v515 = vunpack.c.h.b16 %v235
    %v516 = vunpack.c.l.b16 %v236
    %v517 = vunpack.c.h.b16 %v236
    %v518 = vunpack.c.l.b16 %v237
    %v519 = vunpack.c.h.b16 %v237
    %v520 = vunpack.c.l.b16 %v238
    %v521 = vunpack.c.h.b16 %v238
    %v522 = vunpack.c.l.b16 %v239
    %v523 = vunpack.c.h.b16 %v239
    %v524 = vunpack.c.l.b16 %v240
    %v525 = vunpack.c.h.b16 %v240
    %v526 = vunpack.c.l.b16 %v241
    %v527 = vunpack.c.h.b16 %v241
    %v528 = vunpack.c.l.b16 %v242
    %v529 = vunpack.c.h.b16 %v242
    %v530 = vunpack.c.l.b16 %v243
    %v531 = vunpack.c.h.b16 %v243
    %v532 = vunpack.c.l.b16 %v244
    %v533 = vunpack.c.h.b16 %v244
    %v534 = vunpack.c.l.b16 %v245
    %v535 = vunpack.c.h.b16 %v245
    %v536 = vunpack.c.l.b16 %v246
    %v537 = vunpack.c.h.b16 %v246
    %v538 = vunpack.c.l.b16 %v247
    %v539 = vunpack.c.h.b16 %v247
    %v540 = vunpack.c.l.b16 %v248
    %v541 = vunpack.c.h.b16 %v248
    %v542 = vunpack.c.l.b16 %v249
    %v543 = vunpack.c.h.b16 %v249
    %v544 = vunpack.c.l.b16 %v250
    %v545 = vunpack.c.h.b16 %v250
    %v546 = vunpack.c.l.b16 %v251
    %v547 = vunpack.c.h.b16 %v251
    %v548 = vunpack.c.l.b16 %v252
    %v549 = vunpack.c.h.b16 %v252
    %v550 = vunpack.c.l.b16 %v253
    %v551 = vunpack.c.h.b16 %v253
    %v552 = vunpack.c.l.b16 %v254
    %v553 = vunpack.c.h.b16 %v254
    %v554 = vunpack.c.l.b16 %v255
    %v555 = vunpack.c.h.b16 %v255
    %v556 = vunpack.c.l.b16 %v256
    %v557 = vunpack.c.h.b16 %v256
    %v558 = vunpack.c.l.b16 %v257
    %v559 = vunpack.c.h.b16 %v257
    %v560 = vunpack.c.l.b16 %v258
    %v561 = vunpack.c.h.b16 %v258
    %v562 = vunpack.c.l.b16 %v259
    %v563 = vunpack.c.h.b16 %v259
    %v564 = vunpack.c.l.b16 %v260
    %v565 = vunpack.c.h.b16 %v260
    %v566 = vunpack.c.l.b16 %v261
    %v567 = vunpack.c.h.b16 %v261
    %v568 = vunpack.c.l.b16 %v262
    %v569 = vunpack.c.h.b16 %v262
    %v570 = vunpack.c.l.b16 %v263
    %v571 = vunpack.c.h.b16 %v263
    %v572 = vunpack.c.l.b16 %v264
    %v573 = vunpack.c.h.b16 %v264
    %v574 = vunpack.c.l.b16 %v265
    %v575 = vunpack.c.h.b16 %v265
    %v576 = vunpack.c.l.b16 %v266
    %v577 = vunpack.c.h.b16 %v266
    %v578 = vunpack.c.l.b16 %v267
    %v579 = vunpack.c.h.b16 %v267
    %v580 = vunpack.c.l.b16 %v268
    %v581 = vunpack.c.h.b16 %v268
    %v582 = vunpack.c.l.b16 %v269
    %v583 = vunpack.c.h.b16 %v269
    %v584 = vunpack.c.l.b16 %v270
    %v585 = vunpack.c.h.b16 %v270
    %v586 = vunpack.c.l.b16 %v271
    %v587 = vunpack.c.h.b16 %v271
    %v588 = vunpack.c.l.b16 %v272
    %v589 = vunpack.c.h.b16 %v272
    %v590 = vunpack.c.l.b16 %v273
    %v591 = vunpack.c.h.b16 %v273
    %v592 = vunpack.c.l.b16 %v274
    %v593 = vunpack.c.h.b16 %v274
    %v594 = vunpack.c.l.b16 %v275
    %v595 = vunpack.c.h.b16 %v275
    %v596 = vunpack.c.l.b16 %v276
    %v597 = vunpack.c.h.b16 %v276
    %v598 = vunpack.c.l.b16 %v277
    %v599 = vunpack.c.h.b16 %v277
    %v600 = vpack.c.b16 %v414, %v408
    %v601 = vpack.c.b16 %v415, %v409
    %v602 = vpack.c.b16 %v416, %v410
    %v603 = vpack.c.b16 %v417, %v411
    %v604 = vpack.c.b16 %v418, %v412
    %v605 = vpack.c.b16 %v419, %v413
    %v606 = vpack.c.b16 %v426, %v420
    %v607 = vpack.c.b16 %v427, %v421
    %v608 = vpack.c.b16 %v428, %v422
    %v609 = vpack.c.b16 %v429, %v423
    %v610 = vpack.c.b16 %v430, %v424
    %v611 = vpack.c.b16 %v431, %v425
    %v612 = vpack.c.b16 %v438, %v432
    %v613 = vpack.c.b16 %v439, %v433
    %v614 = vpack.c.b16 %v440, %v434
    %v615 = vpack.c.b16 %v441, %v435
    %v616 = vpack.c.b16 %v442, %v436
    %v617 = vpack.c.b16 %v443, %v437
    %v618 = vpack.c.b16 %v450, %v444
    %v619 = vpack.c.b16 %v451, %v445
    %v620 = vpack.c.b16 %v452, %v446
    %v621 = vpack.c.b16 %v453, %v447
    %v622 = vpack.c.b16 %v454, %v448
    %v623 = vpack.c.b16 %v455, %v449
    %v624 = vpack.c.b16 %v462, %v456
    %v625 = vpack.c.b16 %v463, %v457
    %v626 = vpack.c.b16 %v464, %v458
    %v627 = vpack.c.b16 %v465, %v459
    %v628 = vpack.c.b16 %v466, %v460
    %v629 = vpack.c.b16 %v467, %v461
    %v630 = vpack.c.b16 %v474, %v468
    %v631 = vpack.c.b16 %v475, %v469
    %v632 = vpack.c.b16 %v476, %v470
    %v633 = vpack.c.b16 %v477, %v471
    %v634 = vpack.c.b16 %v478, %v472
    %v635 = vpack.c.b16 %v479, %v473
    %v636 = vpack.c.b16 %v486, %v480
    %v637 = vpack.c.b16 %v487, %v481
    %v638 = vpack.c.b16 %v488, %v482
    %v639 = vpack.c.b16 %v489, %v483
    %v640 = vpack.c.b16 %v490, %v484
    %v641 = vpack.c.b16 %v491, %v485
    %v642 = vpack.c.b16 %v498, %v492
    %v643 = vpack.c.b16 %v499, %v493
    %v644 = vpack.c.b16 %v500, %v494
    %v645 = vpack.c.b16 %v501, %v495
    %v646 = vpack.c.b16 %v502, %v496
    %v647 = vpack.c.b16 %v503, %v497
    %v648 = vpack.c.b16 %v510, %v504
    %v649 = vpack.c.b16 %v511, %v505
    %v650 = vpack.c.b16 %v512, %v506
    %v651 = vpack.c.b16 %v513, %v507
    %v652 = vpack.c.b16 %v514, %v508
    %v653 = vpack.c.b16 %v515, %v509
    %v654 = vpack.c.b16 %v522, %v516
    %v655 = vpack.c.b16 %v523, %v517
    %v656 = vpack.c.b16 %v524, %v518
    %v657 = vpack.c.b16 %v525, %v519
    %v658 = vpack.c.b16 %v526, %v520
    %v659 = vpack.c.b16 %v527, %v521
    %v660 = vpack.c.b16 %v534, %v528
    %v661 = vpack.c.b16 %v535, %v529
    %v662 = vpack.c.b16 %v536, %v530
    %v663 = vpack.c.b16 %v537, %v531
    %v664 = vpack.c.b16 %v538, %v532
    %v665 = vpack.c.b16 %v539, %v533
    %v666 = vpack.c.b16 %v546, %v540
    %v667 = vpack.c.b16 %v547, %v541
    %v668 = vpack.c.b16 %v548, %v542
    %v669 = vpack.c.b16 %v549, %v543
    %v670 = vpack.c.b16 %v550, %v544
    %v671 = vpack.c.b16 %v551, %v545
    %v672 = vpack.c.b16 %v558, %v552
    %v673 = vpack.c.b16 %v559, %v553
    %v674 = vpack.c.b16 %v560, %v554
    %v675 = vpack.c.b16 %v561, %v555
    %v676 = vpack.c.b16 %v562, %v556
    %v677 = vpack.c.b16 %v563, %v557
    %v678 = vpack.c.b16 %v570, %v564
    %v679 = vpack.c.b16 %v571, %v565
    %v680 = vpack.c.b16 %v572, %v566
    %v681 = vpack.c.b16 %v573, %v567
    %v682 = vpack.c.b16 %v574, %v568
    %v683 = vpack.c.b16 %v575, %v569
    %v684 = vpack.c.b16 %v582, %v576
    %v685 = vpack.c.b16 %v583, %v577
    %v686 = vpack.c.b16 %v584, %v578
    %v687 = vpack.c.b16 %v585, %v579
    %v688 = vpack.c.b16 %v586, %v580
    %v689 = vpack.c.b16 %v587, %v581
    %v690 = vpack.c.b16 %v594, %v588
    %v691 = vpack.c.b16 %v595, %v589
    %v692 = vpack.c.b16 %v596, %v590
    %v693 = vpack.c.b16 %v597, %v591
    %v694 = vpack.c.b16 %v598, %v592
    %v695 = vpack.c.b16 %v599, %v593
    %792 = vmatpush.bf16.msra.mxu0 %v642
    %793 = vmatpush.bf16.msra.mxu0 %v636
    %794 = vmatpush.bf16.msra.mxu0 %v630
    %795 = vmatpush.bf16.msra.mxu0 %v624
    %796 = vmatpush.bf16.msra.mxu0 %v618
    %797 = vmatpush.bf16.msra.mxu0 %v612
    %798 = vmatpush.bf16.msra.mxu0 %v606
    %799 = vmatpush.bf16.msra.mxu0 %v600
    %800 = vmatmul.bf16.gmra.mxu0 %v304
    %v801 = vpop.f32.mrf.mxu0
    %v802 = vadd.f32 %v280, %v801
    %v803 = vpop.f32.mrf.mxu0
    %v804 = vadd.f32 %v280, %v803
    %805 = vmatmul.bf16.gmra.mxu0 %v306
    %v806 = vpop.f32.mrf.mxu0
    %v807 = vadd.f32 %v280, %v806
    %v808 = vpop.f32.mrf.mxu0
    %v809 = vadd.f32 %v280, %v808
    %810 = vdwg.mxu0
    %811 = vmatpush.bf16.msra.mxu0 %v690
    %812 = vmatpush.bf16.msra.mxu0 %v684
    %813 = vmatpush.bf16.msra.mxu0 %v678
    %814 = vmatpush.bf16.msra.mxu0 %v672
    %815 = vmatpush.bf16.msra.mxu0 %v666
    %816 = vmatpush.bf16.msra.mxu0 %v660
    %817 = vmatpush.bf16.msra.mxu0 %v654
    %818 = vmatpush.bf16.msra.mxu0 %v648
    %819 = vmatmul.bf16.gmra.mxu0 %v305
    %v820 = vpop.f32.mrf.mxu0
    %v821 = vadd.f32 %v802, %v820
    %v822 = vpop.f32.mrf.mxu0
    %v823 = vadd.f32 %v804, %v822
    %824 = vmatmul.bf16.gmra.mxu0 %v307
    %v825 = vpop.f32.mrf.mxu0
    %v826 = vadd.f32 %v807, %v825
    %v827 = vpop.f32.mrf.mxu0
    %v828 = vadd.f32 %v809, %v827
    %829 = vdwg.mxu0
    %830 = vmatpush.bf16.msra.mxu0 %v643
    %831 = vmatpush.bf16.msra.mxu0 %v637
    %832 = vmatpush.bf16.msra.mxu0 %v631
    %833 = vmatpush.bf16.msra.mxu0 %v625
    %834 = vmatpush.bf16.msra.mxu0 %v619
    %835 = vmatpush.bf16.msra.mxu0 %v613
    %836 = vmatpush.bf16.msra.mxu0 %v607
    %837 = vmatpush.bf16.msra.mxu0 %v601
    %838 = vmatmul.bf16.gmra.mxu0 %v304
    %v839 = vpop.f32.mrf.mxu0
    %v840 = vadd.f32 %v281, %v839
    %v841 = vpop.f32.mrf.mxu0
    %v842 = vadd.f32 %v281, %v841
    %843 = vmatmul.bf16.gmra.mxu0 %v306
    %v844 = vpop.f32.mrf.mxu0
    %v845 = vadd.f32 %v281, %v844
    %v846 = vpop.f32.mrf.mxu0
    %v847 = vadd.f32 %v281, %v846
    %848 = vdwg.mxu0
    %849 = vmatpush.bf16.msra.mxu0 %v691
    %850 = vmatpush.bf16.msra.mxu0 %v685
    %851 = vmatpush.bf16.msra.mxu0 %v679
    %852 = vmatpush.bf16.msra.mxu0 %v673
    %853 = vmatpush.bf16.msra.mxu0 %v667
    %854 = vmatpush.bf16.msra.mxu0 %v661
    %855 = vmatpush.bf16.msra.mxu0 %v655
    %856 = vmatpush.bf16.msra.mxu0 %v649
    %857 = vmatmul.bf16.gmra.mxu0 %v305
    %v858 = vpop.f32.mrf.mxu0
    %v859 = vadd.f32 %v840, %v858
    %v860 = vpop.f32.mrf.mxu0
    %v861 = vadd.f32 %v842, %v860
    %862 = vmatmul.bf16.gmra.mxu0 %v307
    %v863 = vpop.f32.mrf.mxu0
    %v864 = vadd.f32 %v845, %v863
    %v865 = vpop.f32.mrf.mxu0
    %v866 = vadd.f32 %v847, %v865
    %867 = vdwg.mxu0
    %868 = vmatpush.bf16.msra.mxu0 %v644
    %869 = vmatpush.bf16.msra.mxu0 %v638
    %870 = vmatpush.bf16.msra.mxu0 %v632
    %871 = vmatpush.bf16.msra.mxu0 %v626
    %872 = vmatpush.bf16.msra.mxu0 %v620
    %873 = vmatpush.bf16.msra.mxu0 %v614
    %874 = vmatpush.bf16.msra.mxu0 %v608
    %875 = vmatpush.bf16.msra.mxu0 %v602
    %876 = vmatmul.bf16.gmra.mxu0 %v304
    %v877 = vpop.f32.mrf.mxu0
    %v878 = vadd.f32 %v282, %v877
    %v879 = vpop.f32.mrf.mxu0
    %v880 = vadd.f32 %v282, %v879
    %881 = vmatmul.bf16.gmra.mxu0 %v306
    %v882 = vpop.f32.mrf.mxu0
    %v883 = vadd.f32 %v282, %v882
    %v884 = vpop.f32.mrf.mxu0
    %v885 = vadd.f32 %v282, %v884
    %886 = vdwg.mxu0
    %887 = vmatpush.bf16.msra.mxu0 %v692
    %888 = vmatpush.bf16.msra.mxu0 %v686
    %889 = vmatpush.bf16.msra.mxu0 %v680
    %890 = vmatpush.bf16.msra.mxu0 %v674
    %891 = vmatpush.bf16.msra.mxu0 %v668
    %892 = vmatpush.bf16.msra.mxu0 %v662
    %893 = vmatpush.bf16.msra.mxu0 %v656
    %894 = vmatpush.bf16.msra.mxu0 %v650
    %895 = vmatmul.bf16.gmra.mxu0 %v305
    %v896 = vpop.f32.mrf.mxu0
    %v897 = vadd.f32 %v878, %v896
    %v898 = vpop.f32.mrf.mxu0
    %v899 = vadd.f32 %v880, %v898
    %900 = vmatmul.bf16.gmra.mxu0 %v307
    %v901 = vpop.f32.mrf.mxu0
    %v902 = vadd.f32 %v883, %v901
    %v903 = vpop.f32.mrf.mxu0
    %v904 = vadd.f32 %v885, %v903
    %905 = vdwg.mxu0
    %906 = vmatpush.bf16.msra.mxu0 %v645
    %907 = vmatpush.bf16.msra.mxu0 %v639
    %908 = vmatpush.bf16.msra.mxu0 %v633
    %909 = vmatpush.bf16.msra.mxu0 %v627
    %910 = vmatpush.bf16.msra.mxu0 %v621
    %911 = vmatpush.bf16.msra.mxu0 %v615
    %912 = vmatpush.bf16.msra.mxu0 %v609
    %913 = vmatpush.bf16.msra.mxu0 %v603
    %914 = vmatmul.bf16.gmra.mxu0 %v304
    %v915 = vpop.f32.mrf.mxu0
    %v916 = vadd.f32 %v283, %v915
    %v917 = vpop.f32.mrf.mxu0
    %v918 = vadd.f32 %v283, %v917
    %919 = vmatmul.bf16.gmra.mxu0 %v306
    %v920 = vpop.f32.mrf.mxu0
    %v921 = vadd.f32 %v283, %v920
    %v922 = vpop.f32.mrf.mxu0
    %v923 = vadd.f32 %v283, %v922
    %924 = vdwg.mxu0
    %925 = vmatpush.bf16.msra.mxu0 %v693
    %926 = vmatpush.bf16.msra.mxu0 %v687
    %927 = vmatpush.bf16.msra.mxu0 %v681
    %928 = vmatpush.bf16.msra.mxu0 %v675
    %929 = vmatpush.bf16.msra.mxu0 %v669
    %930 = vmatpush.bf16.msra.mxu0 %v663
    %931 = vmatpush.bf16.msra.mxu0 %v657
    %932 = vmatpush.bf16.msra.mxu0 %v651
    %933 = vmatmul.bf16.gmra.mxu0 %v305
    %v934 = vpop.f32.mrf.mxu0
    %v935 = vadd.f32 %v916, %v934
    %v936 = vpop.f32.mrf.mxu0
    %v937 = vadd.f32 %v918, %v936
    %938 = vmatmul.bf16.gmra.mxu0 %v307
    %v939 = vpop.f32.mrf.mxu0
    %v940 = vadd.f32 %v921, %v939
    %v941 = vpop.f32.mrf.mxu0
    %v942 = vadd.f32 %v923, %v941
    %943 = vdwg.mxu0
    %944 = vmatpush.bf16.msra.mxu0 %v646
    %945 = vmatpush.bf16.msra.mxu0 %v640
    %946 = vmatpush.bf16.msra.mxu0 %v634
    %947 = vmatpush.bf16.msra.mxu0 %v628
    %948 = vmatpush.bf16.msra.mxu0 %v622
    %949 = vmatpush.bf16.msra.mxu0 %v616
    %950 = vmatpush.bf16.msra.mxu0 %v610
    %951 = vmatpush.bf16.msra.mxu0 %v604
    %952 = vmatmul.bf16.gmra.mxu0 %v304
    %v953 = vpop.f32.mrf.mxu0
    %v954 = vadd.f32 %v284, %v953
    %v955 = vpop.f32.mrf.mxu0
    %v956 = vadd.f32 %v284, %v955
    %957 = vmatmul.bf16.gmra.mxu0 %v306
    %v958 = vpop.f32.mrf.mxu0
    %v959 = vadd.f32 %v284, %v958
    %v960 = vpop.f32.mrf.mxu0
    %v961 = vadd.f32 %v284, %v960
    %962 = vdwg.mxu0
    %963 = vmatpush.bf16.msra.mxu0 %v694
    %964 = vmatpush.bf16.msra.mxu0 %v688
    %965 = vmatpush.bf16.msra.mxu0 %v682
    %966 = vmatpush.bf16.msra.mxu0 %v676
    %967 = vmatpush.bf16.msra.mxu0 %v670
    %968 = vmatpush.bf16.msra.mxu0 %v664
    %969 = vmatpush.bf16.msra.mxu0 %v658
    %970 = vmatpush.bf16.msra.mxu0 %v652
    %971 = vmatmul.bf16.gmra.mxu0 %v305
    %v972 = vpop.f32.mrf.mxu0
    %v973 = vadd.f32 %v954, %v972
    %v974 = vpop.f32.mrf.mxu0
    %v975 = vadd.f32 %v956, %v974
    %976 = vmatmul.bf16.gmra.mxu0 %v307
    %v977 = vpop.f32.mrf.mxu0
    %v978 = vadd.f32 %v959, %v977
    %v979 = vpop.f32.mrf.mxu0
    %v980 = vadd.f32 %v961, %v979
    %981 = vdwg.mxu0
    %982 = vmatpush.bf16.msra.mxu0 %v647
    %983 = vmatpush.bf16.msra.mxu0 %v641
    %984 = vmatpush.bf16.msra.mxu0 %v635
    %985 = vmatpush.bf16.msra.mxu0 %v629
    %986 = vmatpush.bf16.msra.mxu0 %v623
    %987 = vmatpush.bf16.msra.mxu0 %v617
    %988 = vmatpush.bf16.msra.mxu0 %v611
    %989 = vmatpush.bf16.msra.mxu0 %v605
    %990 = vmatmul.bf16.gmra.mxu0 %v304
    %v991 = vpop.f32.mrf.mxu0
    %v992 = vadd.f32 %v285, %v991
    %v993 = vpop.f32.mrf.mxu0
    %v994 = vadd.f32 %v285, %v993
    %995 = vmatmul.bf16.gmra.mxu0 %v306
    %v996 = vpop.f32.mrf.mxu0
    %v997 = vadd.f32 %v285, %v996
    %v998 = vpop.f32.mrf.mxu0
    %v999 = vadd.f32 %v285, %v998
    %1000 = vdwg.mxu0
    %1001 = vmatpush.bf16.msra.mxu0 %v695
    %1002 = vmatpush.bf16.msra.mxu0 %v689
    %1003 = vmatpush.bf16.msra.mxu0 %v683
    %1004 = vmatpush.bf16.msra.mxu0 %v677
    %1005 = vmatpush.bf16.msra.mxu0 %v671
    %1006 = vmatpush.bf16.msra.mxu0 %v665
    %1007 = vmatpush.bf16.msra.mxu0 %v659
    %1008 = vmatpush.bf16.msra.mxu0 %v653
    %1009 = vmatmul.bf16.gmra.mxu0 %v305
    %v1010 = vpop.f32.mrf.mxu0
    %v1011 = vadd.f32 %v992, %v1010
    %v1012 = vpop.f32.mrf.mxu0
    %v1013 = vadd.f32 %v994, %v1012
    %1014 = vmatmul.bf16.gmra.mxu0 %v307
    %v1015 = vpop.f32.mrf.mxu0
    %v1016 = vadd.f32 %v997, %v1015
    %v1017 = vpop.f32.mrf.mxu0
    %v1018 = vadd.f32 %v999, %v1017
    %1019 = vdwg.mxu0
    %v1020 = vpack.c.bf16 %v859, %v821
    %v1021 = vpack.c.bf16 %v935, %v897
    %v1022 = vpack.c.bf16 %v1011, %v973
    %v1023 = vpack.c.bf16 %v861, %v823
    %v1024 = vpack.c.bf16 %v937, %v899
    %v1025 = vpack.c.bf16 %v1013, %v975
    %v1026 = vpack.c.bf16 %v864, %v826
    %v1027 = vpack.c.bf16 %v940, %v902
    %v1028 = vpack.c.bf16 %v1016, %v978
    %v1029 = vpack.c.bf16 %v866, %v828
    %v1030 = vpack.c.bf16 %v942, %v904
    %v1031 = vpack.c.bf16 %v1018, %v980
    %v1034 = vunpack.c.l.b16 %v1020
    %v1035 = vunpack.c.l.b16 %v1023
    %v1036 = vpack.c.b16 %v1035, %v1034
    %v1040 = vunpack.c.l.b16 %v1021
    %v1041 = vunpack.c.l.b16 %v1024
    %v1042 = vpack.c.b16 %v1041, %v1040
    %1044 = vmatpush.bf16.xpose.msra.mxu0 0
    %1045 = vmatpush.bf16.xpose.msra.mxu0 0
    %1046 = vmatpush.bf16.xpose.msra.mxu0 0
    %1047 = vmatpush.bf16.xpose.msra.mxu0 0
    %1048 = vmatpush.bf16.xpose.msra.mxu0 0
    %1049 = vmatpush.bf16.xpose.msra.mxu0 0
    %1050 = vmatpush.bf16.xpose.msra.mxu0 0
    %1051 = vmatpush.bf16.xpose.msra.mxu0 %v1042
    %1052 = vmatmul.bf16.gmra.mxu0 %v1036
    %v1053 = vpop.f32.mrf.mxu0
    %v1054 = vadd.f32 0.0, %v1053
    %v1055 = vpop.f32.mrf.mxu0
    %v1056 = vadd.f32 0.0, %v1055
    %1057 = vdwg.mxu0
    %vm1058 = vcmask 130048
    %v1059 = vsel %vm1058, %v1054, -inf
    %1060 = vmax.xlane.f32.xlu0 %v1059
    %v1061 = vpop.xlane.xlu0 %1060
    %v1062 = vsel %vm1058, %v1056, -inf
    %1063 = vmax.xlane.f32.xlu0 %v1062
    %v1064 = vpop.xlane.xlu0 %1063
    %v1065 = vsub.f32 %v1054, %v1061
    %v1066 = vsub.f32 %v1056, %v1064
    %v1067 = vmul.f32 %v1065, 1.442695
    %v1068 = vpow.pop %v1067
    %v1069 = vmul.f32 %v1066, 1.442695
    %v1070 = vpow.pop %v1069
    %v1071 = vsel %vm1058, %v1068, 0.0
    %1072 = vadd.xlane.f32.xlu0 %v1071
    %v1073 = vpop.xlane.xlu0 %1072
    %v1074 = vsel %vm1058, %v1070, 0.0
    %1075 = vadd.xlane.f32.xlu0 %v1074
    %v1076 = vpop.xlane.xlu0 %1075
    %v1077 = vrcp.pop %v1073
    %v1078 = vrcp.pop %v1076
    %v1079 = vmul.f32 %v1068, %v1077
    %v1080 = vmul.f32 %v1070, %v1078
    %v1081 = vpack.c.bf16 %v1080, %v1079
    %v1084 = vunpack.c.l.b16 %v1022
    %v1085 = vunpack.c.l.b16 %v1025
    %v1086 = vpack.c.b16 %v1085, %v1084
    %v1089 = vsel %vm1058, %v1081, 0
    %1091 = vmatpush.bf16.msra.mxu0 0
    %1092 = vmatpush.bf16.msra.mxu0 0
    %1093 = vmatpush.bf16.msra.mxu0 0
    %1094 = vmatpush.bf16.msra.mxu0 0
    %1095 = vmatpush.bf16.msra.mxu0 0
    %1096 = vmatpush.bf16.msra.mxu0 0
    %1097 = vmatpush.bf16.msra.mxu0 0
    %1098 = vmatpush.bf16.msra.mxu0 %v1086
    %1099 = vmatmul.bf16.gmra.mxu0 %v1089
    %v1100 = vpop.f32.mrf.mxu0
    %v1101 = vadd.f32 0.0, %v1100
    %v1102 = vpop.f32.mrf.mxu0
    %v1103 = vadd.f32 0.0, %v1102
    %1104 = vdwg.mxu0
    %v1105 = vpack.c.bf16 %v1101, %v1101
    %v1106 = vpack.c.bf16 %v1103, %v1103
    %1107 = vst [vmem:[#allocation2] sm:$0xf] %v1105
    %1108 = vst [vmem:[#allocation2 + $0x8] sm:$0xf] %v1106
    %v1109 = vunpack.c.h.b16 %v1020
    %v1110 = vunpack.c.h.b16 %v1023
    %v1111 = vpack.c.b16 %v1110, %v1109
    %v1113 = vunpack.c.h.b16 %v1021
    %v1114 = vunpack.c.h.b16 %v1024
    %v1115 = vpack.c.b16 %v1114, %v1113
    %1117 = vmatpush.bf16.xpose.msra.mxu0 0
    %1118 = vmatpush.bf16.xpose.msra.mxu0 0
    %1119 = vmatpush.bf16.xpose.msra.mxu0 0
    %1120 = vmatpush.bf16.xpose.msra.mxu0 0
    %1121 = vmatpush.bf16.xpose.msra.mxu0 0
    %1122 = vmatpush.bf16.xpose.msra.mxu0 0
    %1123 = vmatpush.bf16.xpose.msra.mxu0 0
    %1124 = vmatpush.bf16.xpose.msra.mxu0 %v1115
    %1125 = vmatmul.bf16.gmra.mxu0 %v1111
    %v1126 = vpop.f32.mrf.mxu0
    %v1127 = vadd.f32 0.0, %v1126
    %v1128 = vpop.f32.mrf.mxu0
    %v1129 = vadd.f32 0.0, %v1128
    %1130 = vdwg.mxu0
    %v1131 = vsel %vm1058, %v1127, -inf
    %1132 = vmax.xlane.f32.xlu0 %v1131
    %v1133 = vpop.xlane.xlu0 %1132
    %v1134 = vsel %vm1058, %v1129, -inf
    %1135 = vmax.xlane.f32.xlu0 %v1134
    %v1136 = vpop.xlane.xlu0 %1135
    %v1137 = vsub.f32 %v1127, %v1133
    %v1138 = vsub.f32 %v1129, %v1136
    %v1139 = vmul.f32 %v1137, 1.442695
    %v1140 = vpow.pop %v1139
    %v1141 = vmul.f32 %v1138, 1.442695
    %v1142 = vpow.pop %v1141
    %v1143 = vsel %vm1058, %v1140, 0.0
    %1144 = vadd.xlane.f32.xlu0 %v1143
    %v1145 = vpop.xlane.xlu0 %1144
    %v1146 = vsel %vm1058, %v1142, 0.0
    %1147 = vadd.xlane.f32.xlu0 %v1146
    %v1148 = vpop.xlane.xlu0 %1147
    %v1149 = vrcp.pop %v1145
    %v1150 = vrcp.pop %v1148
    %v1151 = vmul.f32 %v1140, %v1149
    %v1152 = vmul.f32 %v1142, %v1150
    %v1153 = vpack.c.bf16 %v1152, %v1151
    %v1154 = vunpack.c.h.b16 %v1022
    %v1155 = vunpack.c.h.b16 %v1025
    %v1156 = vpack.c.b16 %v1155, %v1154
    %v1159 = vsel %vm1058, %v1153, 0
    %1161 = vmatpush.bf16.msra.mxu0 0
    %1162 = vmatpush.bf16.msra.mxu0 0
    %1163 = vmatpush.bf16.msra.mxu0 0
    %1164 = vmatpush.bf16.msra.mxu0 0
    %1165 = vmatpush.bf16.msra.mxu0 0
    %1166 = vmatpush.bf16.msra.mxu0 0
    %1167 = vmatpush.bf16.msra.mxu0 0
    %1168 = vmatpush.bf16.msra.mxu0 %v1156
    %1169 = vmatmul.bf16.gmra.mxu0 %v1159
    %v1170 = vpop.f32.mrf.mxu0
    %v1171 = vadd.f32 0.0, %v1170
    %v1172 = vpop.f32.mrf.mxu0
    %v1173 = vadd.f32 0.0, %v1172
    %1174 = vdwg.mxu0
    %v1175 = vpack.c.bf16 %v1171, %v1171
    %v1176 = vpack.c.bf16 %v1173, %v1173
    %1177 = vst [vmem:[#allocation2 + $0x4] sm:$0xf] %v1175
    %1178 = vst [vmem:[#allocation2 + $0xc] sm:$0xf] %v1176
    %v1181 = vunpack.c.l.b16 %v1026
    %v1182 = vunpack.c.l.b16 %v1029
    %v1183 = vpack.c.b16 %v1182, %v1181
    %v1187 = vunpack.c.l.b16 %v1027
    %v1188 = vunpack.c.l.b16 %v1030
    %v1189 = vpack.c.b16 %v1188, %v1187
    %1191 = vmatpush.bf16.xpose.msra.mxu0 0
    %1192 = vmatpush.bf16.xpose.msra.mxu0 0
    %1193 = vmatpush.bf16.xpose.msra.mxu0 0
    %1194 = vmatpush.bf16.xpose.msra.mxu0 0
    %1195 = vmatpush.bf16.xpose.msra.mxu0 0
    %1196 = vmatpush.bf16.xpose.msra.mxu0 0
    %1197 = vmatpush.bf16.xpose.msra.mxu0 0
    %1198 = vmatpush.bf16.xpose.msra.mxu0 %v1189
    %1199 = vmatmul.bf16.gmra.mxu0 %v1183
    %v1200 = vpop.f32.mrf.mxu0
    %v1201 = vadd.f32 0.0, %v1200
    %v1202 = vpop.f32.mrf.mxu0
    %v1203 = vadd.f32 0.0, %v1202
    %1204 = vdwg.mxu0
    %v1205 = vsel %vm1058, %v1201, -inf
    %1206 = vmax.xlane.f32.xlu0 %v1205
    %v1207 = vpop.xlane.xlu0 %1206
    %v1208 = vsel %vm1058, %v1203, -inf
    %1209 = vmax.xlane.f32.xlu0 %v1208
    %v1210 = vpop.xlane.xlu0 %1209
    %v1211 = vsub.f32 %v1201, %v1207
    %v1212 = vsub.f32 %v1203, %v1210
    %v1213 = vmul.f32 %v1211, 1.442695
    %v1214 = vpow.pop %v1213
    %v1215 = vmul.f32 %v1212, 1.442695
    %v1216 = vpow.pop %v1215
    %v1217 = vsel %vm1058, %v1214, 0.0
    %1218 = vadd.xlane.f32.xlu0 %v1217
    %v1219 = vpop.xlane.xlu0 %1218
    %v1220 = vsel %vm1058, %v1216, 0.0
    %1221 = vadd.xlane.f32.xlu0 %v1220
    %v1222 = vpop.xlane.xlu0 %1221
    %v1223 = vrcp.pop %v1219
    %v1224 = vrcp.pop %v1222
    %v1225 = vmul.f32 %v1214, %v1223
    %v1226 = vmul.f32 %v1216, %v1224
    %v1227 = vpack.c.bf16 %v1226, %v1225
    %v1230 = vunpack.c.l.b16 %v1028
    %v1231 = vunpack.c.l.b16 %v1031
    %v1232 = vpack.c.b16 %v1231, %v1230
    %v1235 = vsel %vm1058, %v1227, 0
    %1237 = vmatpush.bf16.msra.mxu0 0
    %1238 = vmatpush.bf16.msra.mxu0 0
    %1239 = vmatpush.bf16.msra.mxu0 0
    %1240 = vmatpush.bf16.msra.mxu0 0
    %1241 = vmatpush.bf16.msra.mxu0 0
    %1242 = vmatpush.bf16.msra.mxu0 0
    %1243 = vmatpush.bf16.msra.mxu0 0
    %1244 = vmatpush.bf16.msra.mxu0 %v1232
    %1245 = vmatmul.bf16.gmra.mxu0 %v1235
    %v1246 = vpop.f32.mrf.mxu0
    %v1247 = vadd.f32 0.0, %v1246
    %v1248 = vpop.f32.mrf.mxu0
    %v1249 = vadd.f32 0.0, %v1248
    %1250 = vdwg.mxu0
    %v1251 = vpack.c.bf16 %v1247, %v1247
    %v1252 = vpack.c.bf16 %v1249, %v1249
    %1253 = vst [vmem:[#allocation2 + $0x10] sm:$0xf] %v1251
    %1254 = vst [vmem:[#allocation2 + $0x18] sm:$0xf] %v1252
    %v1255 = vunpack.c.h.b16 %v1026
    %v1256 = vunpack.c.h.b16 %v1029
    %v1257 = vpack.c.b16 %v1256, %v1255
    %v1259 = vunpack.c.h.b16 %v1027
    %v1260 = vunpack.c.h.b16 %v1030
    %v1261 = vpack.c.b16 %v1260, %v1259
    %1263 = vmatpush.bf16.xpose.msra.mxu0 0
    %1264 = vmatpush.bf16.xpose.msra.mxu0 0
    %1265 = vmatpush.bf16.xpose.msra.mxu0 0
    %1266 = vmatpush.bf16.xpose.msra.mxu0 0
    %1267 = vmatpush.bf16.xpose.msra.mxu0 0
    %1268 = vmatpush.bf16.xpose.msra.mxu0 0
    %1269 = vmatpush.bf16.xpose.msra.mxu0 0
    %1270 = vmatpush.bf16.xpose.msra.mxu0 %v1261
    %1271 = vmatmul.bf16.gmra.mxu0 %v1257
    %v1272 = vpop.f32.mrf.mxu0
    %v1273 = vadd.f32 0.0, %v1272
    %v1274 = vpop.f32.mrf.mxu0
    %v1275 = vadd.f32 0.0, %v1274
    %1276 = vdwg.mxu0
    %v1277 = vsel %vm1058, %v1273, -inf
    %1278 = vmax.xlane.f32.xlu0 %v1277
    %v1279 = vpop.xlane.xlu0 %1278
    %v1280 = vsel %vm1058, %v1275, -inf
    %1281 = vmax.xlane.f32.xlu0 %v1280
    %v1282 = vpop.xlane.xlu0 %1281
    %v1283 = vsub.f32 %v1273, %v1279
    %v1284 = vsub.f32 %v1275, %v1282
    %v1285 = vmul.f32 %v1283, 1.442695
    %v1286 = vpow.pop %v1285
    %v1287 = vmul.f32 %v1284, 1.442695
    %v1288 = vpow.pop %v1287
    %v1289 = vsel %vm1058, %v1286, 0.0
    %1290 = vadd.xlane.f32.xlu0 %v1289
    %v1291 = vpop.xlane.xlu0 %1290
    %v1292 = vsel %vm1058, %v1288, 0.0
    %1293 = vadd.xlane.f32.xlu0 %v1292
    %v1294 = vpop.xlane.xlu0 %1293
    %v1295 = vrcp.pop %v1291
    %v1296 = vrcp.pop %v1294
    %v1297 = vmul.f32 %v1286, %v1295
    %v1298 = vmul.f32 %v1288, %v1296
    %v1299 = vpack.c.bf16 %v1298, %v1297
    %v1300 = vunpack.c.h.b16 %v1028
    %v1301 = vunpack.c.h.b16 %v1031
    %v1302 = vpack.c.b16 %v1301, %v1300
    %v1305 = vsel %vm1058, %v1299, 0
    %1307 = vmatpush.bf16.msra.mxu0 0
    %1308 = vmatpush.bf16.msra.mxu0 0
    %1309 = vmatpush.bf16.msra.mxu0 0
    %1310 = vmatpush.bf16.msra.mxu0 0
    %1311 = vmatpush.bf16.msra.mxu0 0
    %1312 = vmatpush.bf16.msra.mxu0 0
    %1313 = vmatpush.bf16.msra.mxu0 0
    %1314 = vmatpush.bf16.msra.mxu0 %v1302
    %1315 = vmatmul.bf16.gmra.mxu0 %v1305
    %v1316 = vpop.f32.mrf.mxu0
    %v1317 = vadd.f32 0.0, %v1316
    %v1318 = vpop.f32.mrf.mxu0
    %v1319 = vadd.f32 0.0, %v1318
    %1320 = vdwg.mxu0
    %v1321 = vpack.c.bf16 %v1317, %v1317
    %v1322 = vpack.c.bf16 %v1319, %v1319
    %1323 = vst [vmem:[#allocation2 + $0x14] sm:$0xf] %v1321
    %1324 = vst [vmem:[#allocation2 + $0x1c] sm:$0xf] %v1322
    %v1325 = vld [vmem:[#allocation2] sm:$0xff]
    %v1326 = vld [vmem:[#allocation2 + $0x8] sm:$0xff]
    %v1327 = vld [vmem:[#allocation2 + $0x10] sm:$0xff]
    %v1328 = vld [vmem:[#allocation2 + $0x18] sm:$0xff]
    %v1329 = vld [vmem:[#allocation9] sm:$0xff]
    %v1330 = vld [vmem:[#allocation9 + $0x8] sm:$0xff]
    %v1331 = vld [vmem:[#allocation9 + $0x10] sm:$0xff]
    %v1332 = vld [vmem:[#allocation9 + $0x18] sm:$0xff]
    %v1333 = vld [vmem:[#allocation9 + $0x20] sm:$0xff]
    %v1334 = vld [vmem:[#allocation9 + $0x28] sm:$0xff]
    %v1335 = vld [vmem:[#allocation9 + $0x30] sm:$0xff]
    %v1336 = vld [vmem:[#allocation9 + $0x38] sm:$0xff]
    %v1337 = vld [vmem:[#allocation9 + $0x40] sm:$0xff]
    %v1338 = vld [vmem:[#allocation9 + $0x48] sm:$0xff]
    %v1339 = vld [vmem:[#allocation9 + $0x50] sm:$0xff]
    %v1340 = vld [vmem:[#allocation9 + $0x58] sm:$0xff]
    %v1341 = vld [vmem:[#allocation9 + $0x60] sm:$0xff]
    %v1342 = vld [vmem:[#allocation9 + $0x68] sm:$0xff]
    %v1343 = vld [vmem:[#allocation9 + $0x70] sm:$0xff]
    %v1344 = vld [vmem:[#allocation9 + $0x78] sm:$0xff]
    %v1345 = vld [vmem:[#allocation9 + $0x80] sm:$0xff]
    %v1346 = vld [vmem:[#allocation9 + $0x88] sm:$0xff]
    %v1347 = vld [vmem:[#allocation9 + $0x90] sm:$0xff]
    %v1348 = vld [vmem:[#allocation9 + $0x98] sm:$0xff]
    %v1349 = vld [vmem:[#allocation9 + $0xa0] sm:$0xff]
    %v1350 = vld [vmem:[#allocation9 + $0xa8] sm:$0xff]
    %v1351 = vld [vmem:[#allocation9 + $0xb0] sm:$0xff]
    %v1352 = vld [vmem:[#allocation9 + $0xb8] sm:$0xff]
    %v1353 = vld [vmem:[#allocation9 + $0xc0] sm:$0xff]
    %v1354 = vld [vmem:[#allocation9 + $0xc8] sm:$0xff]
    %v1355 = vld [vmem:[#allocation9 + $0xd0] sm:$0xff]
    %v1356 = vld [vmem:[#allocation9 + $0xd8] sm:$0xff]
    %v1357 = vld [vmem:[#allocation9 + $0xe0] sm:$0xff]
    %v1358 = vld [vmem:[#allocation9 + $0xe8] sm:$0xff]
    %v1359 = vld [vmem:[#allocation9 + $0xf0] sm:$0xff]
    %v1360 = vld [vmem:[#allocation9 + $0xf8] sm:$0xff]
    %v1361 = vld [vmem:[%s4] sm:$0x3]
    %v1363 = vperm.slane %v1361, 0
    %v1364 = vperm.slane %v1361, 1
    %v1371 = vunpack.c.l.b16 %v1325
    %v1372 = vunpack.c.h.b16 %v1325
    %v1373 = vunpack.c.l.b16 %v1326
    %v1374 = vunpack.c.h.b16 %v1326
    %v1375 = vunpack.c.l.b16 %v1327
    %v1376 = vunpack.c.h.b16 %v1327
    %v1377 = vunpack.c.l.b16 %v1328
    %v1378 = vunpack.c.h.b16 %v1328
    %v1379 = vpack.c.b16 %v1373, %v1371
    %v1380 = vpack.c.b16 %v1374, %v1372
    %v1381 = vpack.c.b16 %v1377, %v1375
    %v1382 = vpack.c.b16 %v1378, %v1376
    %v1419 = vunpack.c.l.b16 %v1329
    %v1420 = vunpack.c.h.b16 %v1329
    %v1421 = vunpack.c.l.b16 %v1330
    %v1422 = vunpack.c.h.b16 %v1330
    %v1423 = vunpack.c.l.b16 %v1331
    %v1424 = vunpack.c.h.b16 %v1331
    %v1425 = vunpack.c.l.b16 %v1332
    %v1426 = vunpack.c.h.b16 %v1332
    %v1427 = vunpack.c.l.b16 %v1333
    %v1428 = vunpack.c.h.b16 %v1333
    %v1429 = vunpack.c.l.b16 %v1334
    %v1430 = vunpack.c.h.b16 %v1334
    %v1431 = vunpack.c.l.b16 %v1335
    %v1432 = vunpack.c.h.b16 %v1335
    %v1433 = vunpack.c.l.b16 %v1336
    %v1434 = vunpack.c.h.b16 %v1336
    %v1435 = vunpack.c.l.b16 %v1337
    %v1436 = vunpack.c.h.b16 %v1337
    %v1437 = vunpack.c.l.b16 %v1338
    %v1438 = vunpack.c.h.b16 %v1338
    %v1439 = vunpack.c.l.b16 %v1339
    %v1440 = vunpack.c.h.b16 %v1339
    %v1441 = vunpack.c.l.b16 %v1340
    %v1442 = vunpack.c.h.b16 %v1340
    %v1443 = vunpack.c.l.b16 %v1341
    %v1444 = vunpack.c.h.b16 %v1341
    %v1445 = vunpack.c.l.b16 %v1342
    %v1446 = vunpack.c.h.b16 %v1342
    %v1447 = vunpack.c.l.b16 %v1343
    %v1448 = vunpack.c.h.b16 %v1343
    %v1449 = vunpack.c.l.b16 %v1344
    %v1450 = vunpack.c.h.b16 %v1344
    %v1451 = vunpack.c.l.b16 %v1345
    %v1452 = vunpack.c.h.b16 %v1345
    %v1453 = vunpack.c.l.b16 %v1346
    %v1454 = vunpack.c.h.b16 %v1346
    %v1455 = vunpack.c.l.b16 %v1347
    %v1456 = vunpack.c.h.b16 %v1347
    %v1457 = vunpack.c.l.b16 %v1348
    %v1458 = vunpack.c.h.b16 %v1348
    %v1459 = vunpack.c.l.b16 %v1349
    %v1460 = vunpack.c.h.b16 %v1349
    %v1461 = vunpack.c.l.b16 %v1350
    %v1462 = vunpack.c.h.b16 %v1350
    %v1463 = vunpack.c.l.b16 %v1351
    %v1464 = vunpack.c.h.b16 %v1351
    %v1465 = vunpack.c.l.b16 %v1352
    %v1466 = vunpack.c.h.b16 %v1352
    %v1467 = vunpack.c.l.b16 %v1353
    %v1468 = vunpack.c.h.b16 %v1353
    %v1469 = vunpack.c.l.b16 %v1354
    %v1470 = vunpack.c.h.b16 %v1354
    %v1471 = vunpack.c.l.b16 %v1355
    %v1472 = vunpack.c.h.b16 %v1355
    %v1473 = vunpack.c.l.b16 %v1356
    %v1474 = vunpack.c.h.b16 %v1356
    %v1475 = vunpack.c.l.b16 %v1357
    %v1476 = vunpack.c.h.b16 %v1357
    %v1477 = vunpack.c.l.b16 %v1358
    %v1478 = vunpack.c.h.b16 %v1358
    %v1479 = vunpack.c.l.b16 %v1359
    %v1480 = vunpack.c.h.b16 %v1359
    %v1481 = vunpack.c.l.b16 %v1360
    %v1482 = vunpack.c.h.b16 %v1360
    %v1483 = vpack.c.b16 %v1421, %v1419
    %v1484 = vpack.c.b16 %v1422, %v1420
    %v1485 = vpack.c.b16 %v1425, %v1423
    %v1486 = vpack.c.b16 %v1426, %v1424
    %v1487 = vpack.c.b16 %v1429, %v1427
    %v1488 = vpack.c.b16 %v1430, %v1428
    %v1489 = vpack.c.b16 %v1433, %v1431
    %v1490 = vpack.c.b16 %v1434, %v1432
    %v1491 = vpack.c.b16 %v1437, %v1435
    %v1492 = vpack.c.b16 %v1438, %v1436
    %v1493 = vpack.c.b16 %v1441, %v1439
    %v1494 = vpack.c.b16 %v1442, %v1440
    %v1495 = vpack.c.b16 %v1445, %v1443
    %v1496 = vpack.c.b16 %v1446, %v1444
    %v1497 = vpack.c.b16 %v1449, %v1447
    %v1498 = vpack.c.b16 %v1450, %v1448
    %v1499 = vpack.c.b16 %v1453, %v1451
    %v1500 = vpack.c.b16 %v1454, %v1452
    %v1501 = vpack.c.b16 %v1457, %v1455
    %v1502 = vpack.c.b16 %v1458, %v1456
    %v1503 = vpack.c.b16 %v1461, %v1459
    %v1504 = vpack.c.b16 %v1462, %v1460
    %v1505 = vpack.c.b16 %v1465, %v1463
    %v1506 = vpack.c.b16 %v1466, %v1464
    %v1507 = vpack.c.b16 %v1469, %v1467
    %v1508 = vpack.c.b16 %v1470, %v1468
    %v1509 = vpack.c.b16 %v1473, %v1471
    %v1510 = vpack.c.b16 %v1474, %v1472
    %v1511 = vpack.c.b16 %v1477, %v1475
    %v1512 = vpack.c.b16 %v1478, %v1476
    %v1513 = vpack.c.b16 %v1481, %v1479
    %v1514 = vpack.c.b16 %v1482, %v1480
    %1547 = vmatpush.bf16.msra.mxu0 %v1497
    %1548 = vmatpush.bf16.msra.mxu0 %v1495
    %1549 = vmatpush.bf16.msra.mxu0 %v1493
    %1550 = vmatpush.bf16.msra.mxu0 %v1491
    %1551 = vmatpush.bf16.msra.mxu0 %v1489
    %1552 = vmatpush.bf16.msra.mxu0 %v1487
    %1553 = vmatpush.bf16.msra.mxu0 %v1485
    %1554 = vmatpush.bf16.msra.mxu0 %v1483
    %1555 = vmatmul.bf16.gmra.mxu0 %v1379
    %v1556 = vpop.f32.mrf.mxu0
    %v1557 = vadd.f32 %v1363, %v1556
    %v1558 = vpop.f32.mrf.mxu0
    %v1559 = vadd.f32 %v1363, %v1558
    %1560 = vmatmul.bf16.gmra.mxu0 %v1381
    %v1561 = vpop.f32.mrf.mxu0
    %v1562 = vadd.f32 %v1363, %v1561
    %v1563 = vpop.f32.mrf.mxu0
    %v1564 = vadd.f32 %v1363, %v1563
    %1565 = vdwg.mxu0
    %1566 = vmatpush.bf16.msra.mxu0 %v1513
    %1567 = vmatpush.bf16.msra.mxu0 %v1511
    %1568 = vmatpush.bf16.msra.mxu0 %v1509
    %1569 = vmatpush.bf16.msra.mxu0 %v1507
    %1570 = vmatpush.bf16.msra.mxu0 %v1505
    %1571 = vmatpush.bf16.msra.mxu0 %v1503
    %1572 = vmatpush.bf16.msra.mxu0 %v1501
    %1573 = vmatpush.bf16.msra.mxu0 %v1499
    %1574 = vmatmul.bf16.gmra.mxu0 %v1380
    %v1575 = vpop.f32.mrf.mxu0
    %v1576 = vadd.f32 %v1557, %v1575
    %v1577 = vpop.f32.mrf.mxu0
    %v1578 = vadd.f32 %v1559, %v1577
    %1579 = vmatmul.bf16.gmra.mxu0 %v1382
    %v1580 = vpop.f32.mrf.mxu0
    %v1581 = vadd.f32 %v1562, %v1580
    %v1582 = vpop.f32.mrf.mxu0
    %v1583 = vadd.f32 %v1564, %v1582
    %1584 = vdwg.mxu0
    %1585 = vmatpush.bf16.msra.mxu0 %v1498
    %1586 = vmatpush.bf16.msra.mxu0 %v1496
    %1587 = vmatpush.bf16.msra.mxu0 %v1494
    %1588 = vmatpush.bf16.msra.mxu0 %v1492
    %1589 = vmatpush.bf16.msra.mxu0 %v1490
    %1590 = vmatpush.bf16.msra.mxu0 %v1488
    %1591 = vmatpush.bf16.msra.mxu0 %v1486
    %1592 = vmatpush.bf16.msra.mxu0 %v1484
    %1593 = vmatmul.bf16.gmra.mxu0 %v1379
    %v1594 = vpop.f32.mrf.mxu0
    %v1595 = vadd.f32 %v1364, %v1594
    %v1596 = vpop.f32.mrf.mxu0
    %v1597 = vadd.f32 %v1364, %v1596
    %1598 = vmatmul.bf16.gmra.mxu0 %v1381
    %v1599 = vpop.f32.mrf.mxu0
    %v1600 = vadd.f32 %v1364, %v1599
    %v1601 = vpop.f32.mrf.mxu0
    %v1602 = vadd.f32 %v1364, %v1601
    %1603 = vdwg.mxu0
    %1604 = vmatpush.bf16.msra.mxu0 %v1514
    %1605 = vmatpush.bf16.msra.mxu0 %v1512
    %1606 = vmatpush.bf16.msra.mxu0 %v1510
    %1607 = vmatpush.bf16.msra.mxu0 %v1508
    %1608 = vmatpush.bf16.msra.mxu0 %v1506
    %1609 = vmatpush.bf16.msra.mxu0 %v1504
    %1610 = vmatpush.bf16.msra.mxu0 %v1502
    %1611 = vmatpush.bf16.msra.mxu0 %v1500
    %1612 = vmatmul.bf16.gmra.mxu0 %v1380
    %v1613 = vpop.f32.mrf.mxu0
    %v1614 = vadd.f32 %v1595, %v1613
    %v1615 = vpop.f32.mrf.mxu0
    %v1616 = vadd.f32 %v1597, %v1615
    %1617 = vmatmul.bf16.gmra.mxu0 %v1382
    %v1618 = vpop.f32.mrf.mxu0
    %v1619 = vadd.f32 %v1600, %v1618
    %v1620 = vpop.f32.mrf.mxu0
    %v1621 = vadd.f32 %v1602, %v1620
    %1622 = vdwg.mxu0
    %v1623 = vunpack.c.l.bf16 %v178
    %v1624 = vunpack.c.h.bf16 %v178
    %v1625 = vunpack.c.l.bf16 %v179
    %v1626 = vunpack.c.h.bf16 %v179
    %v1627 = vunpack.c.l.bf16 %v180
    %v1628 = vunpack.c.h.bf16 %v180
    %v1629 = vunpack.c.l.bf16 %v181
    %v1630 = vunpack.c.h.bf16 %v181
    %v1631 = vadd.f32 %v1623, %v1576
    %v1632 = vadd.f32 %v1624, %v1614
    %v1633 = vadd.f32 %v1625, %v1578
    %v1634 = vadd.f32 %v1626, %v1616
    %v1635 = vadd.f32 %v1627, %v1581
    %v1636 = vadd.f32 %v1628, %v1619
    %v1637 = vadd.f32 %v1629, %v1583
    %v1638 = vadd.f32 %v1630, %v1621
    %v1639 = vld [vmem:[#allocation11] sm:$0x3]
    %v1640 = vld [vmem:[#allocation12] sm:$0x3]
    %v1641 = vadd.f32 %v1631, %v1632
    %1642 = vadd.xlane.f32.xlu0 %v1641
    %v1643 = vpop.xlane.xlu0 %1642
    %v1644 = vadd.f32 %v1633, %v1634
    %1645 = vadd.xlane.f32.xlu0 %v1644
    %v1646 = vpop.xlane.xlu0 %1645
    %v1647 = vadd.f32 %v1635, %v1636
    %1648 = vadd.xlane.f32.xlu0 %v1647
    %v1649 = vpop.xlane.xlu0 %1648
    %v1650 = vadd.f32 %v1637, %v1638
    %1651 = vadd.xlane.f32.xlu0 %v1650
    %v1652 = vpop.xlane.xlu0 %1651
    %v1653 = vrcp.pop 256.0
    %v1654 = vmul.f32 256.0, %v1653
    %v1655 = vsub.f32 1.0, %v1654
    %v1656 = vmul.f32 %v1653, %v1655
    %v1657 = vadd.f32 %v1653, %v1656
    %vm1658 = vweird.f32 %v1653
    %v1659 = vsel %vm1658, %v1653, %v1657
    %v1660 = vmul.f32 %v1643, %v1659
    %v1661 = vmul.f32 %v1646, %v1659
    %v1662 = vmul.f32 %v1649, %v1659
    %v1663 = vmul.f32 %v1652, %v1659
    %v1664 = vsub.f32 %v1631, %v1660
    %v1665 = vsub.f32 %v1632, %v1660
    %v1666 = vsub.f32 %v1633, %v1661
    %v1667 = vsub.f32 %v1634, %v1661
    %v1668 = vsub.f32 %v1635, %v1662
    %v1669 = vsub.f32 %v1636, %v1662
    %v1670 = vsub.f32 %v1637, %v1663
    %v1671 = vsub.f32 %v1638, %v1663
    %v1672 = vmul.f32 %v1664, %v1664
    %v1673 = vmul.f32 %v1665, %v1665
    %v1674 = vmul.f32 %v1666, %v1666
    %v1675 = vmul.f32 %v1667, %v1667
    %v1676 = vmul.f32 %v1668, %v1668
    %v1677 = vmul.f32 %v1669, %v1669
    %v1678 = vmul.f32 %v1670, %v1670
    %v1679 = vmul.f32 %v1671, %v1671
    %v1680 = vadd.f32 %v1672, %v1673
    %1681 = vadd.xlane.f32.xlu0 %v1680
    %v1682 = vpop.xlane.xlu0 %1681
    %v1683 = vadd.f32 %v1674, %v1675
    %1684 = vadd.xlane.f32.xlu0 %v1683
    %v1685 = vpop.xlane.xlu0 %1684
    %v1686 = vadd.f32 %v1676, %v1677
    %1687 = vadd.xlane.f32.xlu0 %v1686
    %v1688 = vpop.xlane.xlu0 %1687
    %v1689 = vadd.f32 %v1678, %v1679
    %1690 = vadd.xlane.f32.xlu0 %v1689
    %v1691 = vpop.xlane.xlu0 %1690
    %v1692 = vmul.f32 %v1682, %v1659
    %v1693 = vmul.f32 %v1685, %v1659
    %v1694 = vmul.f32 %v1688, %v1659
    %v1695 = vmul.f32 %v1691, %v1659
    %v1696 = vadd.f32 %v1692, 1e-05
    %v1697 = vadd.f32 %v1693, 1e-05
    %v1698 = vadd.f32 %v1694, 1e-05
    %v1699 = vadd.f32 %v1695, 1e-05
    %v1700 = vrsqrt.pop %v1696
    %v1701 = vmul.f32 %v1700, %v1696
    %v1702 = vmul.f32 %v1701, %v1700
    %v1703 = vmul.f32 0.5, %v1702
    %v1704 = vsub.f32 1.5, %v1703
    %v1705 = vmul.f32 %v1700, %v1704
    %vm1706 = vweird.f32 %v1696
    %vm1707 = vweird.f32 %v1700
    %vm1708 = vmor %vm1706, %vm1707
    %v1709 = vsel %vm1708, %v1700, %v1705
    %v1710 = vrsqrt.pop %v1697
    %v1711 = vmul.f32 %v1710, %v1697
    %v1712 = vmul.f32 %v1711, %v1710
    %v1713 = vmul.f32 0.5, %v1712
    %v1714 = vsub.f32 1.5, %v1713
    %v1715 = vmul.f32 %v1710, %v1714
    %vm1716 = vweird.f32 %v1697
    %vm1717 = vweird.f32 %v1710
    %vm1718 = vmor %vm1716, %vm1717
    %v1719 = vsel %vm1718, %v1710, %v1715
    %v1720 = vrsqrt.pop %v1698
    %v1721 = vmul.f32 %v1720, %v1698
    %v1722 = vmul.f32 %v1721, %v1720
    %v1723 = vmul.f32 0.5, %v1722
    %v1724 = vsub.f32 1.5, %v1723
    %v1725 = vmul.f32 %v1720, %v1724
    %vm1726 = vweird.f32 %v1698
    %vm1727 = vweird.f32 %v1720
    %vm1728 = vmor %vm1726, %vm1727
    %v1729 = vsel %vm1728, %v1720, %v1725
    %v1730 = vrsqrt.pop %v1699
    %v1731 = vmul.f32 %v1730, %v1699
    %v1732 = vmul.f32 %v1731, %v1730
    %v1733 = vmul.f32 0.5, %v1732
    %v1734 = vsub.f32 1.5, %v1733
    %v1735 = vmul.f32 %v1730, %v1734
    %vm1736 = vweird.f32 %v1699
    %vm1737 = vweird.f32 %v1730
    %vm1738 = vmor %vm1736, %vm1737
    %v1739 = vsel %vm1738, %v1730, %v1735
    %v1740 = vmul.f32 %v1664, %v1709
    %v1741 = vmul.f32 %v1665, %v1709
    %v1742 = vmul.f32 %v1666, %v1719
    %v1743 = vmul.f32 %v1667, %v1719
    %v1744 = vmul.f32 %v1668, %v1729
    %v1745 = vmul.f32 %v1669, %v1729
    %v1746 = vmul.f32 %v1670, %v1739
    %v1747 = vmul.f32 %v1671, %v1739
    %v1749 = vperm.slane %v1639, 0
    %v1750 = vperm.slane %v1639, 1
    %v1753 = vmul.f32 %v1740, %v1749
    %v1754 = vmul.f32 %v1741, %v1750
    %v1755 = vmul.f32 %v1742, %v1749
    %v1756 = vmul.f32 %v1743, %v1750
    %v1757 = vmul.f32 %v1744, %v1749
    %v1758 = vmul.f32 %v1745, %v1750
    %v1759 = vmul.f32 %v1746, %v1749
    %v1760 = vmul.f32 %v1747, %v1750
    %v1762 = vperm.slane %v1640, 0
    %v1763 = vperm.slane %v1640, 1
    %v1766 = vadd.f32 %v1753, %v1762
    %v1767 = vadd.f32 %v1754, %v1763
    %v1768 = vadd.f32 %v1755, %v1762
    %v1769 = vadd.f32 %v1756, %v1763
    %v1770 = vadd.f32 %v1757, %v1762
    %v1771 = vadd.f32 %v1758, %v1763
    %v1772 = vadd.f32 %v1759, %v1762
    %v1773 = vadd.f32 %v1760, %v1763
    %v1774 = vpack.c.bf16 %v1768, %v1766
    %v1775 = vpack.c.bf16 %v1769, %v1767
    %v1776 = vpack.c.bf16 %v1772, %v1770
    %v1777 = vpack.c.bf16 %v1773, %v1771
    %v1778 = vld [vmem:[#allocation14] sm:$0xff]
    %v1779 = vld [vmem:[#allocation14 + $0x8] sm:$0xff]
    %v1780 = vld [vmem:[#allocation14 + $0x10] sm:$0xff]
    %v1781 = vld [vmem:[#allocation14 + $0x18] sm:$0xff]
    %v1782 = vld [vmem:[#allocation14 + $0x20] sm:$0xff]
    %v1783 = vld [vmem:[#allocation14 + $0x28] sm:$0xff]
    %v1784 = vld [vmem:[#allocation14 + $0x30] sm:$0xff]
    %v1785 = vld [vmem:[#allocation14 + $0x38] sm:$0xff]
    %v1786 = vld [vmem:[#allocation14 + $0x40] sm:$0xff]
    %v1787 = vld [vmem:[#allocation14 + $0x48] sm:$0xff]
    %v1788 = vld [vmem:[#allocation14 + $0x50] sm:$0xff]
    %v1789 = vld [vmem:[#allocation14 + $0x58] sm:$0xff]
    %v1790 = vld [vmem:[#allocation14 + $0x60] sm:$0xff]
    %v1791 = vld [vmem:[#allocation14 + $0x68] sm:$0xff]
    %v1792 = vld [vmem:[#allocation14 + $0x70] sm:$0xff]
    %v1793 = vld [vmem:[#allocation14 + $0x78] sm:$0xff]
    %v1794 = vld [vmem:[#allocation14 + $0x80] sm:$0xff]
    %v1795 = vld [vmem:[#allocation14 + $0x88] sm:$0xff]
    %v1796 = vld [vmem:[#allocation14 + $0x90] sm:$0xff]
    %v1797 = vld [vmem:[#allocation14 + $0x98] sm:$0xff]
    %v1798 = vld [vmem:[#allocation14 + $0xa0] sm:$0xff]
    %v1799 = vld [vmem:[#allocation14 + $0xa8] sm:$0xff]
    %v1800 = vld [vmem:[#allocation14 + $0xb0] sm:$0xff]
    %v1801 = vld [vmem:[#allocation14 + $0xb8] sm:$0xff]
    %v1802 = vld [vmem:[#allocation14 + $0xc0] sm:$0xff]
    %v1803 = vld [vmem:[#allocation14 + $0xc8] sm:$0xff]
    %v1804 = vld [vmem:[#allocation14 + $0xd0] sm:$0xff]
    %v1805 = vld [vmem:[#allocation14 + $0xd8] sm:$0xff]
    %v1806 = vld [vmem:[#allocation14 + $0xe0] sm:$0xff]
    %v1807 = vld [vmem:[#allocation14 + $0xe8] sm:$0xff]
    %v1808 = vld [vmem:[#allocation14 + $0xf0] sm:$0xff]
    %v1809 = vld [vmem:[#allocation14 + $0xf8] sm:$0xff]
    %v1810 = vld [vmem:[#allocation14 + $0x100] sm:$0xff]
    %v1811 = vld [vmem:[#allocation14 + $0x108] sm:$0xff]
    %v1812 = vld [vmem:[#allocation14 + $0x110] sm:$0xff]
    %v1813 = vld [vmem:[#allocation14 + $0x118] sm:$0xff]
    %v1814 = vld [vmem:[#allocation14 + $0x120] sm:$0xff]
    %v1815 = vld [vmem:[#allocation14 + $0x128] sm:$0xff]
    %v1816 = vld [vmem:[#allocation14 + $0x130] sm:$0xff]
    %v1817 = vld [vmem:[#allocation14 + $0x138] sm:$0xff]
    %v1818 = vld [vmem:[#allocation14 + $0x140] sm:$0xff]
    %v1819 = vld [vmem:[#allocation14 + $0x148] sm:$0xff]
    %v1820 = vld [vmem:[#allocation14 + $0x150] sm:$0xff]
    %v1821 = vld [vmem:[#allocation14 + $0x158] sm:$0xff]
    %v1822 = vld [vmem:[#allocation14 + $0x160] sm:$0xff]
    %v1823 = vld [vmem:[#allocation14 + $0x168] sm:$0xff]
    %v1824 = vld [vmem:[#allocation14 + $0x170] sm:$0xff]
    %v1825 = vld [vmem:[#allocation14 + $0x178] sm:$0xff]
    %v1826 = vld [vmem:[#allocation14 + $0x180] sm:$0xff]
    %v1827 = vld [vmem:[#allocation14 + $0x188] sm:$0xff]
    %v1828 = vld [vmem:[#allocation14 + $0x190] sm:$0xff]
    %v1829 = vld [vmem:[#allocation14 + $0x198] sm:$0xff]
    %v1830 = vld [vmem:[#allocation14 + $0x1a0] sm:$0xff]
    %v1831 = vld [vmem:[#allocation14 + $0x1a8] sm:$0xff]
    %v1832 = vld [vmem:[#allocation14 + $0x1b0] sm:$0xff]
    %v1833 = vld [vmem:[#allocation14 + $0x1b8] sm:$0xff]
    %v1834 = vld [vmem:[#allocation14 + $0x1c0] sm:$0xff]
    %v1835 = vld [vmem:[#allocation14 + $0x1c8] sm:$0xff]
    %v1836 = vld [vmem:[#allocation14 + $0x1d0] sm:$0xff]
    %v1837 = vld [vmem:[#allocation14 + $0x1d8] sm:$0xff]
    %v1838 = vld [vmem:[#allocation14 + $0x1e0] sm:$0xff]
    %v1839 = vld [vmem:[#allocation14 + $0x1e8] sm:$0xff]
    %v1840 = vld [vmem:[#allocation14 + $0x1f0] sm:$0xff]
    %v1841 = vld [vmem:[#allocation14 + $0x1f8] sm:$0xff]
    %v1842 = vld [vmem:[%s8] sm:$0xf]
    %v1844 = vperm.slane %v1842, 0
    %v1845 = vperm.slane %v1842, 1
    %v1846 = vperm.slane %v1842, 2
    %v1847 = vperm.slane %v1842, 3
    %v1916 = vunpack.c.l.b16 %v1778
    %v1917 = vunpack.c.h.b16 %v1778
    %v1918 = vunpack.c.l.b16 %v1779
    %v1919 = vunpack.c.h.b16 %v1779
    %v1920 = vunpack.c.l.b16 %v1780
    %v1921 = vunpack.c.h.b16 %v1780
    %v1922 = vunpack.c.l.b16 %v1781
    %v1923 = vunpack.c.h.b16 %v1781
    %v1924 = vunpack.c.l.b16 %v1782
    %v1925 = vunpack.c.h.b16 %v1782
    %v1926 = vunpack.c.l.b16 %v1783
    %v1927 = vunpack.c.h.b16 %v1783
    %v1928 = vunpack.c.l.b16 %v1784
    %v1929 = vunpack.c.h.b16 %v1784
    %v1930 = vunpack.c.l.b16 %v1785
    %v1931 = vunpack.c.h.b16 %v1785
    %v1932 = vunpack.c.l.b16 %v1786
    %v1933 = vunpack.c.h.b16 %v1786
    %v1934 = vunpack.c.l.b16 %v1787
    %v1935 = vunpack.c.h.b16 %v1787
    %v1936 = vunpack.c.l.b16 %v1788
    %v1937 = vunpack.c.h.b16 %v1788
    %v1938 = vunpack.c.l.b16 %v1789
    %v1939 = vunpack.c.h.b16 %v1789
    %v1940 = vunpack.c.l.b16 %v1790
    %v1941 = vunpack.c.h.b16 %v1790
    %v1942 = vunpack.c.l.b16 %v1791
    %v1943 = vunpack.c.h.b16 %v1791
    %v1944 = vunpack.c.l.b16 %v1792
    %v1945 = vunpack.c.h.b16 %v1792
    %v1946 = vunpack.c.l.b16 %v1793
    %v1947 = vunpack.c.h.b16 %v1793
    %v1948 = vunpack.c.l.b16 %v1794
    %v1949 = vunpack.c.h.b16 %v1794
    %v1950 = vunpack.c.l.b16 %v1795
    %v1951 = vunpack.c.h.b16 %v1795
    %v1952 = vunpack.c.l.b16 %v1796
    %v1953 = vunpack.c.h.b16 %v1796
    %v1954 = vunpack.c.l.b16 %v1797
    %v1955 = vunpack.c.h.b16 %v1797
    %v1956 = vunpack.c.l.b16 %v1798
    %v1957 = vunpack.c.h.b16 %v1798
    %v1958 = vunpack.c.l.b16 %v1799
    %v1959 = vunpack.c.h.b16 %v1799
    %v1960 = vunpack.c.l.b16 %v1800
    %v1961 = vunpack.c.h.b16 %v1800
    %v1962 = vunpack.c.l.b16 %v1801
    %v1963 = vunpack.c.h.b16 %v1801
    %v1964 = vunpack.c.l.b16 %v1802
    %v1965 = vunpack.c.h.b16 %v1802
    %v1966 = vunpack.c.l.b16 %v1803
    %v1967 = vunpack.c.h.b16 %v1803
    %v1968 = vunpack.c.l.b16 %v1804
    %v1969 = vunpack.c.h.b16 %v1804
    %v1970 = vunpack.c.l.b16 %v1805
    %v1971 = vunpack.c.h.b16 %v1805
    %v1972 = vunpack.c.l.b16 %v1806
    %v1973 = vunpack.c.h.b16 %v1806
    %v1974 = vunpack.c.l.b16 %v1807
    %v1975 = vunpack.c.h.b16 %v1807
    %v1976 = vunpack.c.l.b16 %v1808
    %v1977 = vunpack.c.h.b16 %v1808
    %v1978 = vunpack.c.l.b16 %v1809
    %v1979 = vunpack.c.h.b16 %v1809
    %v1980 = vunpack.c.l.b16 %v1810
    %v1981 = vunpack.c.h.b16 %v1810
    %v1982 = vunpack.c.l.b16 %v1811
    %v1983 = vunpack.c.h.b16 %v1811
    %v1984 = vunpack.c.l.b16 %v1812
    %v1985 = vunpack.c.h.b16 %v1812
    %v1986 = vunpack.c.l.b16 %v1813
    %v1987 = vunpack.c.h.b16 %v1813
    %v1988 = vunpack.c.l.b16 %v1814
    %v1989 = vunpack.c.h.b16 %v1814
    %v1990 = vunpack.c.l.b16 %v1815
    %v1991 = vunpack.c.h.b16 %v1815
    %v1992 = vunpack.c.l.b16 %v1816
    %v1993 = vunpack.c.h.b16 %v1816
    %v1994 = vunpack.c.l.b16 %v1817
    %v1995 = vunpack.c.h.b16 %v1817
    %v1996 = vunpack.c.l.b16 %v1818
    %v1997 = vunpack.c.h.b16 %v1818
    %v1998 = vunpack.c.l.b16 %v1819
    %v1999 = vunpack.c.h.b16 %v1819
    %v2000 = vunpack.c.l.b16 %v1820
    %v2001 = vunpack.c.h.b16 %v1820
    %v2002 = vunpack.c.l.b16 %v1821
    %v2003 = vunpack.c.h.b16 %v1821
    %v2004 = vunpack.c.l.b16 %v1822
    %v2005 = vunpack.c.h.b16 %v1822
    %v2006 = vunpack.c.l.b16 %v1823
    %v2007 = vunpack.c.h.b16 %v1823
    %v2008 = vunpack.c.l.b16 %v1824
    %v2009 = vunpack.c.h.b16 %v1824
    %v2010 = vunpack.c.l.b16 %v1825
    %v2011 = vunpack.c.h.b16 %v1825
    %v2012 = vunpack.c.l.b16 %v1826
    %v2013 = vunpack.c.h.b16 %v1826
    %v2014 = vunpack.c.l.b16 %v1827
    %v2015 = vunpack.c.h.b16 %v1827
    %v2016 = vunpack.c.l.b16 %v1828
    %v2017 = vunpack.c.h.b16 %v1828
    %v2018 = vunpack.c.l.b16 %v1829
    %v2019 = vunpack.c.h.b16 %v1829
    %v2020 = vunpack.c.l.b16 %v1830
    %v2021 = vunpack.c.h.b16 %v1830
    %v2022 = vunpack.c.l.b16 %v1831
    %v2023 = vunpack.c.h.b16 %v1831
    %v2024 = vunpack.c.l.b16 %v1832
    %v2025 = vunpack.c.h.b16 %v1832
    %v2026 = vunpack.c.l.b16 %v1833
    %v2027 = vunpack.c.h.b16 %v1833
    %v2028 = vunpack.c.l.b16 %v1834
    %v2029 = vunpack.c.h.b16 %v1834
    %v2030 = vunpack.c.l.b16 %v1835
    %v2031 = vunpack.c.h.b16 %v1835
    %v2032 = vunpack.c.l.b16 %v1836
    %v2033 = vunpack.c.h.b16 %v1836
    %v2034 = vunpack.c.l.b16 %v1837
    %v2035 = vunpack.c.h.b16 %v1837
    %v2036 = vunpack.c.l.b16 %v1838
    %v2037 = vunpack.c.h.b16 %v1838
    %v2038 = vunpack.c.l.b16 %v1839
    %v2039 = vunpack.c.h.b16 %v1839
    %v2040 = vunpack.c.l.b16 %v1840
    %v2041 = vunpack.c.h.b16 %v1840
    %v2042 = vunpack.c.l.b16 %v1841
    %v2043 = vunpack.c.h.b16 %v1841
    %v2044 = vpack.c.b16 %v1920, %v1916
    %v2045 = vpack.c.b16 %v1921, %v1917
    %v2046 = vpack.c.b16 %v1922, %v1918
    %v2047 = vpack.c.b16 %v1923, %v1919
    %v2048 = vpack.c.b16 %v1928, %v1924
    %v2049 = vpack.c.b16 %v1929, %v1925
    %v2050 = vpack.c.b16 %v1930, %v1926
    %v2051 = vpack.c.b16 %v1931, %v1927
    %v2052 = vpack.c.b16 %v1936, %v1932
    %v2053 = vpack.c.b16 %v1937, %v1933
    %v2054 = vpack.c.b16 %v1938, %v1934
    %v2055 = vpack.c.b16 %v1939, %v1935
    %v2056 = vpack.c.b16 %v1944, %v1940
    %v2057 = vpack.c.b16 %v1945, %v1941
    %v2058 = vpack.c.b16 %v1946, %v1942
    %v2059 = vpack.c.b16 %v1947, %v1943
    %v2060 = vpack.c.b16 %v1952, %v1948
    %v2061 = vpack.c.b16 %v1953, %v1949
    %v2062 = vpack.c.b16 %v1954, %v1950
    %v2063 = vpack.c.b16 %v1955, %v1951
    %v2064 = vpack.c.b16 %v1960, %v1956
    %v2065 = vpack.c.b16 %v1961, %v1957
    %v2066 = vpack.c.b16 %v1962, %v1958
    %v2067 = vpack.c.b16 %v1963, %v1959
    %v2068 = vpack.c.b16 %v1968, %v1964
    %v2069 = vpack.c.b16 %v1969, %v1965
    %v2070 = vpack.c.b16 %v1970, %v1966
    %v2071 = vpack.c.b16 %v1971, %v1967
    %v2072 = vpack.c.b16 %v1976, %v1972
    %v2073 = vpack.c.b16 %v1977, %v1973
    %v2074 = vpack.c.b16 %v1978, %v1974
    %v2075 = vpack.c.b16 %v1979, %v1975
    %v2076 = vpack.c.b16 %v1984, %v1980
    %v2077 = vpack.c.b16 %v1985, %v1981
    %v2078 = vpack.c.b16 %v1986, %v1982
    %v2079 = vpack.c.b16 %v1987, %v1983
    %v2080 = vpack.c.b16 %v1992, %v1988
    %v2081 = vpack.c.b16 %v1993, %v1989
    %v2082 = vpack.c.b16 %v1994, %v1990
    %v2083 = vpack.c.b16 %v1995, %v1991
    %v2084 = vpack.c.b16 %v2000, %v1996
    %v2085 = vpack.c.b16 %v2001, %v1997
    %v2086 = vpack.c.b16 %v2002, %v1998
    %v2087 = vpack.c.b16 %v2003, %v1999
    %v2088 = vpack.c.b16 %v2008, %v2004
    %v2089 = vpack.c.b16 %v2009, %v2005
    %v2090 = vpack.c.b16 %v2010, %v2006
    %v2091 = vpack.c.b16 %v2011, %v2007
    %v2092 = vpack.c.b16 %v2016, %v2012
    %v2093 = vpack.c.b16 %v2017, %v2013
    %v2094 = vpack.c.b16 %v2018, %v2014
    %v2095 = vpack.c.b16 %v2019, %v2015
    %v2096 = vpack.c.b16 %v2024, %v2020
    %v2097 = vpack.c.b16 %v2025, %v2021
    %v2098 = vpack.c.b16 %v2026, %v2022
    %v2099 = vpack.c.b16 %v2027, %v2023
    %v2100 = vpack.c.b16 %v2032, %v2028
    %v2101 = vpack.c.b16 %v2033, %v2029
    %v2102 = vpack.c.b16 %v2034, %v2030
    %v2103 = vpack.c.b16 %v2035, %v2031
    %v2104 = vpack.c.b16 %v2040, %v2036
    %v2105 = vpack.c.b16 %v2041, %v2037
    %v2106 = vpack.c.b16 %v2042, %v2038
    %v2107 = vpack.c.b16 %v2043, %v2039
    %2172 = vmatpush.bf16.msra.mxu0 %v2072
    %2173 = vmatpush.bf16.msra.mxu0 %v2068
    %2174 = vmatpush.bf16.msra.mxu0 %v2064
    %2175 = vmatpush.bf16.msra.mxu0 %v2060
    %2176 = vmatpush.bf16.msra.mxu0 %v2056
    %2177 = vmatpush.bf16.msra.mxu0 %v2052
    %2178 = vmatpush.bf16.msra.mxu0 %v2048
    %2179 = vmatpush.bf16.msra.mxu0 %v2044
    %2180 = vmatmul.bf16.gmra.mxu0 %v1774
    %v2181 = vpop.f32.mrf.mxu0
    %v2182 = vadd.f32 %v1844, %v2181
    %v2183 = vpop.f32.mrf.mxu0
    %v2184 = vadd.f32 %v1844, %v2183
    %2185 = vmatmul.bf16.gmra.mxu0 %v1776
    %v2186 = vpop.f32.mrf.mxu0
    %v2187 = vadd.f32 %v1844, %v2186
    %v2188 = vpop.f32.mrf.mxu0
    %v2189 = vadd.f32 %v1844, %v2188
    %2190 = vdwg.mxu0
    %2191 = vmatpush.bf16.msra.mxu0 %v2104
    %2192 = vmatpush.bf16.msra.mxu0 %v2100
    %2193 = vmatpush.bf16.msra.mxu0 %v2096
    %2194 = vmatpush.bf16.msra.mxu0 %v2092
    %2195 = vmatpush.bf16.msra.mxu0 %v2088
    %2196 = vmatpush.bf16.msra.mxu0 %v2084
    %2197 = vmatpush.bf16.msra.mxu0 %v2080
    %2198 = vmatpush.bf16.msra.mxu0 %v2076
    %2199 = vmatmul.bf16.gmra.mxu0 %v1775
    %v2200 = vpop.f32.mrf.mxu0
    %v2201 = vadd.f32 %v2182, %v2200
    %v2202 = vpop.f32.mrf.mxu0
    %v2203 = vadd.f32 %v2184, %v2202
    %2204 = vmatmul.bf16.gmra.mxu0 %v1777
    %v2205 = vpop.f32.mrf.mxu0
    %v2206 = vadd.f32 %v2187, %v2205
    %v2207 = vpop.f32.mrf.mxu0
    %v2208 = vadd.f32 %v2189, %v2207
    %2209 = vdwg.mxu0
    %2210 = vmatpush.bf16.msra.mxu0 %v2073
    %2211 = vmatpush.bf16.msra.mxu0 %v2069
    %2212 = vmatpush.bf16.msra.mxu0 %v2065
    %2213 = vmatpush.bf16.msra.mxu0 %v2061
    %2214 = vmatpush.bf16.msra.mxu0 %v2057
    %2215 = vmatpush.bf16.msra.mxu0 %v2053
    %2216 = vmatpush.bf16.msra.mxu0 %v2049
    %2217 = vmatpush.bf16.msra.mxu0 %v2045
    %2218 = vmatmul.bf16.gmra.mxu0 %v1774
    %v2219 = vpop.f32.mrf.mxu0
    %v2220 = vadd.f32 %v1845, %v2219
    %v2221 = vpop.f32.mrf.mxu0
    %v2222 = vadd.f32 %v1845, %v2221
    %2223 = vmatmul.bf16.gmra.mxu0 %v1776
    %v2224 = vpop.f32.mrf.mxu0
    %v2225 = vadd.f32 %v1845, %v2224
    %v2226 = vpop.f32.mrf.mxu0
    %v2227 = vadd.f32 %v1845, %v2226
    %2228 = vdwg.mxu0
    %2229 = vmatpush.bf16.msra.mxu0 %v2105
    %2230 = vmatpush.bf16.msra.mxu0 %v2101
    %2231 = vmatpush.bf16.msra.mxu0 %v2097
    %2232 = vmatpush.bf16.msra.mxu0 %v2093
    %2233 = vmatpush.bf16.msra.mxu0 %v2089
    %2234 = vmatpush.bf16.msra.mxu0 %v2085
    %2235 = vmatpush.bf16.msra.mxu0 %v2081
    %2236 = vmatpush.bf16.msra.mxu0 %v2077
    %2237 = vmatmul.bf16.gmra.mxu0 %v1775
    %v2238 = vpop.f32.mrf.mxu0
    %v2239 = vadd.f32 %v2220, %v2238
    %v2240 = vpop.f32.mrf.mxu0
    %v2241 = vadd.f32 %v2222, %v2240
    %2242 = vmatmul.bf16.gmra.mxu0 %v1777
    %v2243 = vpop.f32.mrf.mxu0
    %v2244 = vadd.f32 %v2225, %v2243
    %v2245 = vpop.f32.mrf.mxu0
    %v2246 = vadd.f32 %v2227, %v2245
    %2247 = vdwg.mxu0
    %2248 = vmatpush.bf16.msra.mxu0 %v2074
    %2249 = vmatpush.bf16.msra.mxu0 %v2070
    %2250 = vmatpush.bf16.msra.mxu0 %v2066
    %2251 = vmatpush.bf16.msra.mxu0 %v2062
    %2252 = vmatpush.bf16.msra.mxu0 %v2058
    %2253 = vmatpush.bf16.msra.mxu0 %v2054
    %2254 = vmatpush.bf16.msra.mxu0 %v2050
    %2255 = vmatpush.bf16.msra.mxu0 %v2046
    %2256 = vmatmul.bf16.gmra.mxu0 %v1774
    %v2257 = vpop.f32.mrf.mxu0
    %v2258 = vadd.f32 %v1846, %v2257
    %v2259 = vpop.f32.mrf.mxu0
    %v2260 = vadd.f32 %v1846, %v2259
    %2261 = vmatmul.bf16.gmra.mxu0 %v1776
    %v2262 = vpop.f32.mrf.mxu0
    %v2263 = vadd.f32 %v1846, %v2262
    %v2264 = vpop.f32.mrf.mxu0
    %v2265 = vadd.f32 %v1846, %v2264
    %2266 = vdwg.mxu0
    %2267 = vmatpush.bf16.msra.mxu0 %v2106
    %2268 = vmatpush.bf16.msra.mxu0 %v2102
    %2269 = vmatpush.bf16.msra.mxu0 %v2098
    %2270 = vmatpush.bf16.msra.mxu0 %v2094
    %2271 = vmatpush.bf16.msra.mxu0 %v2090
    %2272 = vmatpush.bf16.msra.mxu0 %v2086
    %2273 = vmatpush.bf16.msra.mxu0 %v2082
    %2274 = vmatpush.bf16.msra.mxu0 %v2078
    %2275 = vmatmul.bf16.gmra.mxu0 %v1775
    %v2276 = vpop.f32.mrf.mxu0
    %v2277 = vadd.f32 %v2258, %v2276
    %v2278 = vpop.f32.mrf.mxu0
    %v2279 = vadd.f32 %v2260, %v2278
    %2280 = vmatmul.bf16.gmra.mxu0 %v1777
    %v2281 = vpop.f32.mrf.mxu0
    %v2282 = vadd.f32 %v2263, %v2281
    %v2283 = vpop.f32.mrf.mxu0
    %v2284 = vadd.f32 %v2265, %v2283
    %2285 = vdwg.mxu0
    %2286 = vmatpush.bf16.msra.mxu0 %v2075
    %2287 = vmatpush.bf16.msra.mxu0 %v2071
    %2288 = vmatpush.bf16.msra.mxu0 %v2067
    %2289 = vmatpush.bf16.msra.mxu0 %v2063
    %2290 = vmatpush.bf16.msra.mxu0 %v2059
    %2291 = vmatpush.bf16.msra.mxu0 %v2055
    %2292 = vmatpush.bf16.msra.mxu0 %v2051
    %2293 = vmatpush.bf16.msra.mxu0 %v2047
    %2294 = vmatmul.bf16.gmra.mxu0 %v1774
    %v2295 = vpop.f32.mrf.mxu0
    %v2296 = vadd.f32 %v1847, %v2295
    %v2297 = vpop.f32.mrf.mxu0
    %v2298 = vadd.f32 %v1847, %v2297
    %2299 = vmatmul.bf16.gmra.mxu0 %v1776
    %v2300 = vpop.f32.mrf.mxu0
    %v2301 = vadd.f32 %v1847, %v2300
    %v2302 = vpop.f32.mrf.mxu0
    %v2303 = vadd.f32 %v1847, %v2302
    %2304 = vdwg.mxu0
    %2305 = vmatpush.bf16.msra.mxu0 %v2107
    %2306 = vmatpush.bf16.msra.mxu0 %v2103
    %2307 = vmatpush.bf16.msra.mxu0 %v2099
    %2308 = vmatpush.bf16.msra.mxu0 %v2095
    %2309 = vmatpush.bf16.msra.mxu0 %v2091
    %2310 = vmatpush.bf16.msra.mxu0 %v2087
    %2311 = vmatpush.bf16.msra.mxu0 %v2083
    %2312 = vmatpush.bf16.msra.mxu0 %v2079
    %2313 = vmatmul.bf16.gmra.mxu0 %v1775
    %v2314 = vpop.f32.mrf.mxu0
    %v2315 = vadd.f32 %v2296, %v2314
    %v2316 = vpop.f32.mrf.mxu0
    %v2317 = vadd.f32 %v2298, %v2316
    %2318 = vmatmul.bf16.gmra.mxu0 %v1777
    %v2319 = vpop.f32.mrf.mxu0
    %v2320 = vadd.f32 %v2301, %v2319
    %v2321 = vpop.f32.mrf.mxu0
    %v2322 = vadd.f32 %v2303, %v2321
    %2323 = vdwg.mxu0
    %v2324 = vmax.f32 %v2201, 0.0
    %v2325 = vmax.f32 %v2239, 0.0
    %v2326 = vmax.f32 %v2277, 0.0
    %v2327 = vmax.f32 %v2315, 0.0
    %v2328 = vmax.f32 %v2203, 0.0
    %v2329 = vmax.f32 %v2241, 0.0
    %v2330 = vmax.f32 %v2279, 0.0
    %v2331 = vmax.f32 %v2317, 0.0
    %v2332 = vmax.f32 %v2206, 0.0
    %v2333 = vmax.f32 %v2244, 0.0
    %v2334 = vmax.f32 %v2282, 0.0
    %v2335 = vmax.f32 %v2320, 0.0
    %v2336 = vmax.f32 %v2208, 0.0
    %v2337 = vmax.f32 %v2246, 0.0
    %v2338 = vmax.f32 %v2284, 0.0
    %v2339 = vmax.f32 %v2322, 0.0
    %v2340 = vpack.c.bf16 %v2328, %v2324
    %v2341 = vpack.c.bf16 %v2329, %v2325
    %v2342 = vpack.c.bf16 %v2330, %v2326
    %v2343 = vpack.c.bf16 %v2331, %v2327
    %v2344 = vpack.c.bf16 %v2336, %v2332
    %v2345 = vpack.c.bf16 %v2337, %v2333
    %v2346 = vpack.c.bf16 %v2338, %v2334
    %v2347 = vpack.c.bf16 %v2339, %v2335
    %v2348 = vld [vmem:[#allocation15] sm:$0xff]
    %v2349 = vld [vmem:[#allocation15 + $0x8] sm:$0xff]
    %v2350 = vld [vmem:[#allocation15 + $0x10] sm:$0xff]
    %v2351 = vld [vmem:[#allocation15 + $0x18] sm:$0xff]
    %v2352 = vld [vmem:[#allocation15 + $0x20] sm:$0xff]
    %v2353 = vld [vmem:[#allocation15 + $0x28] sm:$0xff]
    %v2354 = vld [vmem:[#allocation15 + $0x30] sm:$0xff]
    %v2355 = vld [vmem:[#allocation15 + $0x38] sm:$0xff]
    %v2356 = vld [vmem:[#allocation15 + $0x40] sm:$0xff]
    %v2357 = vld [vmem:[#allocation15 + $0x48] sm:$0xff]
    %v2358 = vld [vmem:[#allocation15 + $0x50] sm:$0xff]
    %v2359 = vld [vmem:[#allocation15 + $0x58] sm:$0xff]
    %v2360 = vld [vmem:[#allocation15 + $0x60] sm:$0xff]
    %v2361 = vld [vmem:[#allocation15 + $0x68] sm:$0xff]
    %v2362 = vld [vmem:[#allocation15 + $0x70] sm:$0xff]
    %v2363 = vld [vmem:[#allocation15 + $0x78] sm:$0xff]
    %v2364 = vld [vmem:[#allocation15 + $0x80] sm:$0xff]
    %v2365 = vld [vmem:[#allocation15 + $0x88] sm:$0xff]
    %v2366 = vld [vmem:[#allocation15 + $0x90] sm:$0xff]
    %v2367 = vld [vmem:[#allocation15 + $0x98] sm:$0xff]
    %v2368 = vld [vmem:[#allocation15 + $0xa0] sm:$0xff]
    %v2369 = vld [vmem:[#allocation15 + $0xa8] sm:$0xff]
    %v2370 = vld [vmem:[#allocation15 + $0xb0] sm:$0xff]
    %v2371 = vld [vmem:[#allocation15 + $0xb8] sm:$0xff]
    %v2372 = vld [vmem:[#allocation15 + $0xc0] sm:$0xff]
    %v2373 = vld [vmem:[#allocation15 + $0xc8] sm:$0xff]
    %v2374 = vld [vmem:[#allocation15 + $0xd0] sm:$0xff]
    %v2375 = vld [vmem:[#allocation15 + $0xd8] sm:$0xff]
    %v2376 = vld [vmem:[#allocation15 + $0xe0] sm:$0xff]
    %v2377 = vld [vmem:[#allocation15 + $0xe8] sm:$0xff]
    %v2378 = vld [vmem:[#allocation15 + $0xf0] sm:$0xff]
    %v2379 = vld [vmem:[#allocation15 + $0xf8] sm:$0xff]
    %v2380 = vld [vmem:[#allocation15 + $0x100] sm:$0xff]
    %v2381 = vld [vmem:[#allocation15 + $0x108] sm:$0xff]
    %v2382 = vld [vmem:[#allocation15 + $0x110] sm:$0xff]
    %v2383 = vld [vmem:[#allocation15 + $0x118] sm:$0xff]
    %v2384 = vld [vmem:[#allocation15 + $0x120] sm:$0xff]
    %v2385 = vld [vmem:[#allocation15 + $0x128] sm:$0xff]
    %v2386 = vld [vmem:[#allocation15 + $0x130] sm:$0xff]
    %v2387 = vld [vmem:[#allocation15 + $0x138] sm:$0xff]
    %v2388 = vld [vmem:[#allocation15 + $0x140] sm:$0xff]
    %v2389 = vld [vmem:[#allocation15 + $0x148] sm:$0xff]
    %v2390 = vld [vmem:[#allocation15 + $0x150] sm:$0xff]
    %v2391 = vld [vmem:[#allocation15 + $0x158] sm:$0xff]
    %v2392 = vld [vmem:[#allocation15 + $0x160] sm:$0xff]
    %v2393 = vld [vmem:[#allocation15 + $0x168] sm:$0xff]
    %v2394 = vld [vmem:[#allocation15 + $0x170] sm:$0xff]
    %v2395 = vld [vmem:[#allocation15 + $0x178] sm:$0xff]
    %v2396 = vld [vmem:[#allocation15 + $0x180] sm:$0xff]
    %v2397 = vld [vmem:[#allocation15 + $0x188] sm:$0xff]
    %v2398 = vld [vmem:[#allocation15 + $0x190] sm:$0xff]
    %v2399 = vld [vmem:[#allocation15 + $0x198] sm:$0xff]
    %v2400 = vld [vmem:[#allocation15 + $0x1a0] sm:$0xff]
    %v2401 = vld [vmem:[#allocation15 + $0x1a8] sm:$0xff]
    %v2402 = vld [vmem:[#allocation15 + $0x1b0] sm:$0xff]
    %v2403 = vld [vmem:[#allocation15 + $0x1b8] sm:$0xff]
    %v2404 = vld [vmem:[#allocation15 + $0x1c0] sm:$0xff]
    %v2405 = vld [vmem:[#allocation15 + $0x1c8] sm:$0xff]
    %v2406 = vld [vmem:[#allocation15 + $0x1d0] sm:$0xff]
    %v2407 = vld [vmem:[#allocation15 + $0x1d8] sm:$0xff]
    %v2408 = vld [vmem:[#allocation15 + $0x1e0] sm:$0xff]
    %v2409 = vld [vmem:[#allocation15 + $0x1e8] sm:$0xff]
    %v2410 = vld [vmem:[#allocation15 + $0x1f0] sm:$0xff]
    %v2411 = vld [vmem:[#allocation15 + $0x1f8] sm:$0xff]
    %v2412 = vld [vmem:[%s10] sm:$0x3]
    %v2414 = vperm.slane %v2412, 0
    %v2415 = vperm.slane %v2412, 1
    %v2482 = vunpack.c.l.b16 %v2348
    %v2483 = vunpack.c.h.b16 %v2348
    %v2484 = vunpack.c.l.b16 %v2349
    %v2485 = vunpack.c.h.b16 %v2349
    %v2486 = vunpack.c.l.b16 %v2350
    %v2487 = vunpack.c.h.b16 %v2350
    %v2488 = vunpack.c.l.b16 %v2351
    %v2489 = vunpack.c.h.b16 %v2351
    %v2490 = vunpack.c.l.b16 %v2352
    %v2491 = vunpack.c.h.b16 %v2352
    %v2492 = vunpack.c.l.b16 %v2353
    %v2493 = vunpack.c.h.b16 %v2353
    %v2494 = vunpack.c.l.b16 %v2354
    %v2495 = vunpack.c.h.b16 %v2354
    %v2496 = vunpack.c.l.b16 %v2355
    %v2497 = vunpack.c.h.b16 %v2355
    %v2498 = vunpack.c.l.b16 %v2356
    %v2499 = vunpack.c.h.b16 %v2356
    %v2500 = vunpack.c.l.b16 %v2357
    %v2501 = vunpack.c.h.b16 %v2357
    %v2502 = vunpack.c.l.b16 %v2358
    %v2503 = vunpack.c.h.b16 %v2358
    %v2504 = vunpack.c.l.b16 %v2359
    %v2505 = vunpack.c.h.b16 %v2359
    %v2506 = vunpack.c.l.b16 %v2360
    %v2507 = vunpack.c.h.b16 %v2360
    %v2508 = vunpack.c.l.b16 %v2361
    %v2509 = vunpack.c.h.b16 %v2361
    %v2510 = vunpack.c.l.b16 %v2362
    %v2511 = vunpack.c.h.b16 %v2362
    %v2512 = vunpack.c.l.b16 %v2363
    %v2513 = vunpack.c.h.b16 %v2363
    %v2514 = vunpack.c.l.b16 %v2364
    %v2515 = vunpack.c.h.b16 %v2364
    %v2516 = vunpack.c.l.b16 %v2365
    %v2517 = vunpack.c.h.b16 %v2365
    %v2518 = vunpack.c.l.b16 %v2366
    %v2519 = vunpack.c.h.b16 %v2366
    %v2520 = vunpack.c.l.b16 %v2367
    %v2521 = vunpack.c.h.b16 %v2367
    %v2522 = vunpack.c.l.b16 %v2368
    %v2523 = vunpack.c.h.b16 %v2368
    %v2524 = vunpack.c.l.b16 %v2369
    %v2525 = vunpack.c.h.b16 %v2369
    %v2526 = vunpack.c.l.b16 %v2370
    %v2527 = vunpack.c.h.b16 %v2370
    %v2528 = vunpack.c.l.b16 %v2371
    %v2529 = vunpack.c.h.b16 %v2371
    %v2530 = vunpack.c.l.b16 %v2372
    %v2531 = vunpack.c.h.b16 %v2372
    %v2532 = vunpack.c.l.b16 %v2373
    %v2533 = vunpack.c.h.b16 %v2373
    %v2534 = vunpack.c.l.b16 %v2374
    %v2535 = vunpack.c.h.b16 %v2374
    %v2536 = vunpack.c.l.b16 %v2375
    %v2537 = vunpack.c.h.b16 %v2375
    %v2538 = vunpack.c.l.b16 %v2376
    %v2539 = vunpack.c.h.b16 %v2376
    %v2540 = vunpack.c.l.b16 %v2377
    %v2541 = vunpack.c.h.b16 %v2377
    %v2542 = vunpack.c.l.b16 %v2378
    %v2543 = vunpack.c.h.b16 %v2378
    %v2544 = vunpack.c.l.b16 %v2379
    %v2545 = vunpack.c.h.b16 %v2379
    %v2546 = vunpack.c.l.b16 %v2380
    %v2547 = vunpack.c.h.b16 %v2380
    %v2548 = vunpack.c.l.b16 %v2381
    %v2549 = vunpack.c.h.b16 %v2381
    %v2550 = vunpack.c.l.b16 %v2382
    %v2551 = vunpack.c.h.b16 %v2382
    %v2552 = vunpack.c.l.b16 %v2383
    %v2553 = vunpack.c.h.b16 %v2383
    %v2554 = vunpack.c.l.b16 %v2384
    %v2555 = vunpack.c.h.b16 %v2384
    %v2556 = vunpack.c.l.b16 %v2385
    %v2557 = vunpack.c.h.b16 %v2385
    %v2558 = vunpack.c.l.b16 %v2386
    %v2559 = vunpack.c.h.b16 %v2386
    %v2560 = vunpack.c.l.b16 %v2387
    %v2561 = vunpack.c.h.b16 %v2387
    %v2562 = vunpack.c.l.b16 %v2388
    %v2563 = vunpack.c.h.b16 %v2388
    %v2564 = vunpack.c.l.b16 %v2389
    %v2565 = vunpack.c.h.b16 %v2389
    %v2566 = vunpack.c.l.b16 %v2390
    %v2567 = vunpack.c.h.b16 %v2390
    %v2568 = vunpack.c.l.b16 %v2391
    %v2569 = vunpack.c.h.b16 %v2391
    %v2570 = vunpack.c.l.b16 %v2392
    %v2571 = vunpack.c.h.b16 %v2392
    %v2572 = vunpack.c.l.b16 %v2393
    %v2573 = vunpack.c.h.b16 %v2393
    %v2574 = vunpack.c.l.b16 %v2394
    %v2575 = vunpack.c.h.b16 %v2394
    %v2576 = vunpack.c.l.b16 %v2395
    %v2577 = vunpack.c.h.b16 %v2395
    %v2578 = vunpack.c.l.b16 %v2396
    %v2579 = vunpack.c.h.b16 %v2396
    %v2580 = vunpack.c.l.b16 %v2397
    %v2581 = vunpack.c.h.b16 %v2397
    %v2582 = vunpack.c.l.b16 %v2398
    %v2583 = vunpack.c.h.b16 %v2398
    %v2584 = vunpack.c.l.b16 %v2399
    %v2585 = vunpack.c.h.b16 %v2399
    %v2586 = vunpack.c.l.b16 %v2400
    %v2587 = vunpack.c.h.b16 %v2400
    %v2588 = vunpack.c.l.b16 %v2401
    %v2589 = vunpack.c.h.b16 %v2401
    %v2590 = vunpack.c.l.b16 %v2402
    %v2591 = vunpack.c.h.b16 %v2402
    %v2592 = vunpack.c.l.b16 %v2403
    %v2593 = vunpack.c.h.b16 %v2403
    %v2594 = vunpack.c.l.b16 %v2404
    %v2595 = vunpack.c.h.b16 %v2404
    %v2596 = vunpack.c.l.b16 %v2405
    %v2597 = vunpack.c.h.b16 %v2405
    %v2598 = vunpack.c.l.b16 %v2406
    %v2599 = vunpack.c.h.b16 %v2406
    %v2600 = vunpack.c.l.b16 %v2407
    %v2601 = vunpack.c.h.b16 %v2407
    %v2602 = vunpack.c.l.b16 %v2408
    %v2603 = vunpack.c.h.b16 %v2408
    %v2604 = vunpack.c.l.b16 %v2409
    %v2605 = vunpack.c.h.b16 %v2409
    %v2606 = vunpack.c.l.b16 %v2410
    %v2607 = vunpack.c.h.b16 %v2410
    %v2608 = vunpack.c.l.b16 %v2411
    %v2609 = vunpack.c.h.b16 %v2411
    %v2610 = vpack.c.b16 %v2484, %v2482
    %v2611 = vpack.c.b16 %v2485, %v2483
    %v2612 = vpack.c.b16 %v2488, %v2486
    %v2613 = vpack.c.b16 %v2489, %v2487
    %v2614 = vpack.c.b16 %v2492, %v2490
    %v2615 = vpack.c.b16 %v2493, %v2491
    %v2616 = vpack.c.b16 %v2496, %v2494
    %v2617 = vpack.c.b16 %v2497, %v2495
    %v2618 = vpack.c.b16 %v2500, %v2498
    %v2619 = vpack.c.b16 %v2501, %v2499
    %v2620 = vpack.c.b16 %v2504, %v2502
    %v2621 = vpack.c.b16 %v2505, %v2503
    %v2622 = vpack.c.b16 %v2508, %v2506
    %v2623 = vpack.c.b16 %v2509, %v2507
    %v2624 = vpack.c.b16 %v2512, %v2510
    %v2625 = vpack.c.b16 %v2513, %v2511
    %v2626 = vpack.c.b16 %v2516, %v2514
    %v2627 = vpack.c.b16 %v2517, %v2515
    %v2628 = vpack.c.b16 %v2520, %v2518
    %v2629 = vpack.c.b16 %v2521, %v2519
    %v2630 = vpack.c.b16 %v2524, %v2522
    %v2631 = vpack.c.b16 %v2525, %v2523
    %v2632 = vpack.c.b16 %v2528, %v2526
    %v2633 = vpack.c.b16 %v2529, %v2527
    %v2634 = vpack.c.b16 %v2532, %v2530
    %v2635 = vpack.c.b16 %v2533, %v2531
    %v2636 = vpack.c.b16 %v2536, %v2534
    %v2637 = vpack.c.b16 %v2537, %v2535
    %v2638 = vpack.c.b16 %v2540, %v2538
    %v2639 = vpack.c.b16 %v2541, %v2539
    %v2640 = vpack.c.b16 %v2544, %v2542
    %v2641 = vpack.c.b16 %v2545, %v2543
    %v2642 = vpack.c.b16 %v2548, %v2546
    %v2643 = vpack.c.b16 %v2549, %v2547
    %v2644 = vpack.c.b16 %v2552, %v2550
    %v2645 = vpack.c.b16 %v2553, %v2551
    %v2646 = vpack.c.b16 %v2556, %v2554
    %v2647 = vpack.c.b16 %v2557, %v2555
    %v2648 = vpack.c.b16 %v2560, %v2558
    %v2649 = vpack.c.b16 %v2561, %v2559
    %v2650 = vpack.c.b16 %v2564, %v2562
    %v2651 = vpack.c.b16 %v2565, %v2563
    %v2652 = vpack.c.b16 %v2568, %v2566
    %v2653 = vpack.c.b16 %v2569, %v2567
    %v2654 = vpack.c.b16 %v2572, %v2570
    %v2655 = vpack.c.b16 %v2573, %v2571
    %v2656 = vpack.c.b16 %v2576, %v2574
    %v2657 = vpack.c.b16 %v2577, %v2575
    %v2658 = vpack.c.b16 %v2580, %v2578
    %v2659 = vpack.c.b16 %v2581, %v2579
    %v2660 = vpack.c.b16 %v2584, %v2582
    %v2661 = vpack.c.b16 %v2585, %v2583
    %v2662 = vpack.c.b16 %v2588, %v2586
    %v2663 = vpack.c.b16 %v2589, %v2587
    %v2664 = vpack.c.b16 %v2592, %v2590
    %v2665 = vpack.c.b16 %v2593, %v2591
    %v2666 = vpack.c.b16 %v2596, %v2594
    %v2667 = vpack.c.b16 %v2597, %v2595
    %v2668 = vpack.c.b16 %v2600, %v2598
    %v2669 = vpack.c.b16 %v2601, %v2599
    %v2670 = vpack.c.b16 %v2604, %v2602
    %v2671 = vpack.c.b16 %v2605, %v2603
    %v2672 = vpack.c.b16 %v2608, %v2606
    %v2673 = vpack.c.b16 %v2609, %v2607
    %2738 = vmatpush.bf16.msra.mxu0 %v2624
    %2739 = vmatpush.bf16.msra.mxu0 %v2622
    %2740 = vmatpush.bf16.msra.mxu0 %v2620
    %2741 = vmatpush.bf16.msra.mxu0 %v2618
    %2742 = vmatpush.bf16.msra.mxu0 %v2616
    %2743 = vmatpush.bf16.msra.mxu0 %v2614
    %2744 = vmatpush.bf16.msra.mxu0 %v2612
    %2745 = vmatpush.bf16.msra.mxu0 %v2610
    %2746 = vmatmul.bf16.gmra.mxu0 %v2340
    %v2747 = vpop.f32.mrf.mxu0
    %v2748 = vadd.f32 %v2414, %v2747
    %v2749 = vpop.f32.mrf.mxu0
    %v2750 = vadd.f32 %v2414, %v2749
    %2751 = vmatmul.bf16.gmra.mxu0 %v2344
    %v2752 = vpop.f32.mrf.mxu0
    %v2753 = vadd.f32 %v2414, %v2752
    %v2754 = vpop.f32.mrf.mxu0
    %v2755 = vadd.f32 %v2414, %v2754
    %2756 = vdwg.mxu0
    %2757 = vmatpush.bf16.msra.mxu0 %v2640
    %2758 = vmatpush.bf16.msra.mxu0 %v2638
    %2759 = vmatpush.bf16.msra.mxu0 %v2636
    %2760 = vmatpush.bf16.msra.mxu0 %v2634
    %2761 = vmatpush.bf16.msra.mxu0 %v2632
    %2762 = vmatpush.bf16.msra.mxu0 %v2630
    %2763 = vmatpush.bf16.msra.mxu0 %v2628
    %2764 = vmatpush.bf16.msra.mxu0 %v2626
    %2765 = vmatmul.bf16.gmra.mxu0 %v2341
    %v2766 = vpop.f32.mrf.mxu0
    %v2767 = vadd.f32 %v2748, %v2766
    %v2768 = vpop.f32.mrf.mxu0
    %v2769 = vadd.f32 %v2750, %v2768
    %2770 = vmatmul.bf16.gmra.mxu0 %v2345
    %v2771 = vpop.f32.mrf.mxu0
    %v2772 = vadd.f32 %v2753, %v2771
    %v2773 = vpop.f32.mrf.mxu0
    %v2774 = vadd.f32 %v2755, %v2773
    %2775 = vdwg.mxu0
    %2776 = vmatpush.bf16.msra.mxu0 %v2656
    %2777 = vmatpush.bf16.msra.mxu0 %v2654
    %2778 = vmatpush.bf16.msra.mxu0 %v2652
    %2779 = vmatpush.bf16.msra.mxu0 %v2650
    %2780 = vmatpush.bf16.msra.mxu0 %v2648
    %2781 = vmatpush.bf16.msra.mxu0 %v2646
    %2782 = vmatpush.bf16.msra.mxu0 %v2644
    %2783 = vmatpush.bf16.msra.mxu0 %v2642
    %2784 = vmatmul.bf16.gmra.mxu0 %v2342
    %v2785 = vpop.f32.mrf.mxu0
    %v2786 = vadd.f32 %v2767, %v2785
    %v2787 = vpop.f32.mrf.mxu0
    %v2788 = vadd.f32 %v2769, %v2787
    %2789 = vmatmul.bf16.gmra.mxu0 %v2346
    %v2790 = vpop.f32.mrf.mxu0
    %v2791 = vadd.f32 %v2772, %v2790
    %v2792 = vpop.f32.mrf.mxu0
    %v2793 = vadd.f32 %v2774, %v2792
    %2794 = vdwg.mxu0
    %2795 = vmatpush.bf16.msra.mxu0 %v2672
    %2796 = vmatpush.bf16.msra.mxu0 %v2670
    %2797 = vmatpush.bf16.msra.mxu0 %v2668
    %2798 = vmatpush.bf16.msra.mxu0 %v2666
    %2799 = vmatpush.bf16.msra.mxu0 %v2664
    %2800 = vmatpush.bf16.msra.mxu0 %v2662
    %2801 = vmatpush.bf16.msra.mxu0 %v2660
    %2802 = vmatpush.bf16.msra.mxu0 %v2658
    %2803 = vmatmul.bf16.gmra.mxu0 %v2343
    %v2804 = vpop.f32.mrf.mxu0
    %v2805 = vadd.f32 %v2786, %v2804
    %v2806 = vpop.f32.mrf.mxu0
    %v2807 = vadd.f32 %v2788, %v2806
    %2808 = vmatmul.bf16.gmra.mxu0 %v2347
    %v2809 = vpop.f32.mrf.mxu0
    %v2810 = vadd.f32 %v2791, %v2809
    %v2811 = vpop.f32.mrf.mxu0
    %v2812 = vadd.f32 %v2793, %v2811
    %2813 = vdwg.mxu0
    %2814 = vmatpush.bf16.msra.mxu0 %v2625
    %2815 = vmatpush.bf16.msra.mxu0 %v2623
    %2816 = vmatpush.bf16.msra.mxu0 %v2621
    %2817 = vmatpush.bf16.msra.mxu0 %v2619
    %2818 = vmatpush.bf16.msra.mxu0 %v2617
    %2819 = vmatpush.bf16.msra.mxu0 %v2615
    %2820 = vmatpush.bf16.msra.mxu0 %v2613
    %2821 = vmatpush.bf16.msra.mxu0 %v2611
    %2822 = vmatmul.bf16.gmra.mxu0 %v2340
    %v2823 = vpop.f32.mrf.mxu0
    %v2824 = vadd.f32 %v2415, %v2823
    %v2825 = vpop.f32.mrf.mxu0
    %v2826 = vadd.f32 %v2415, %v2825
    %2827 = vmatmul.bf16.gmra.mxu0 %v2344
    %v2828 = vpop.f32.mrf.mxu0
    %v2829 = vadd.f32 %v2415, %v2828
    %v2830 = vpop.f32.mrf.mxu0
    %v2831 = vadd.f32 %v2415, %v2830
    %2832 = vdwg.mxu0
    %2833 = vmatpush.bf16.msra.mxu0 %v2641
    %2834 = vmatpush.bf16.msra.mxu0 %v2639
    %2835 = vmatpush.bf16.msra.mxu0 %v2637
    %2836 = vmatpush.bf16.msra.mxu0 %v2635
    %2837 = vmatpush.bf16.msra.mxu0 %v2633
    %2838 = vmatpush.bf16.msra.mxu0 %v2631
    %2839 = vmatpush.bf16.msra.mxu0 %v2629
    %2840 = vmatpush.bf16.msra.mxu0 %v2627
    %2841 = vmatmul.bf16.gmra.mxu0 %v2341
    %v2842 = vpop.f32.mrf.mxu0
    %v2843 = vadd.f32 %v2824, %v2842
    %v2844 = vpop.f32.mrf.mxu0
    %v2845 = vadd.f32 %v2826, %v2844
    %2846 = vmatmul.bf16.gmra.mxu0 %v2345
    %v2847 = vpop.f32.mrf.mxu0
    %v2848 = vadd.f32 %v2829, %v2847
    %v2849 = vpop.f32.mrf.mxu0
    %v2850 = vadd.f32 %v2831, %v2849
    %2851 = vdwg.mxu0
    %2852 = vmatpush.bf16.msra.mxu0 %v2657
    %2853 = vmatpush.bf16.msra.mxu0 %v2655
    %2854 = vmatpush.bf16.msra.mxu0 %v2653
    %2855 = vmatpush.bf16.msra.mxu0 %v2651
    %2856 = vmatpush.bf16.msra.mxu0 %v2649
    %2857 = vmatpush.bf16.msra.mxu0 %v2647
    %2858 = vmatpush.bf16.msra.mxu0 %v2645
    %2859 = vmatpush.bf16.msra.mxu0 %v2643
    %2860 = vmatmul.bf16.gmra.mxu0 %v2342
    %v2861 = vpop.f32.mrf.mxu0
    %v2862 = vadd.f32 %v2843, %v2861
    %v2863 = vpop.f32.mrf.mxu0
    %v2864 = vadd.f32 %v2845, %v2863
    %2865 = vmatmul.bf16.gmra.mxu0 %v2346
    %v2866 = vpop.f32.mrf.mxu0
    %v2867 = vadd.f32 %v2848, %v2866
    %v2868 = vpop.f32.mrf.mxu0
    %v2869 = vadd.f32 %v2850, %v2868
    %2870 = vdwg.mxu0
    %2871 = vmatpush.bf16.msra.mxu0 %v2673
    %2872 = vmatpush.bf16.msra.mxu0 %v2671
    %2873 = vmatpush.bf16.msra.mxu0 %v2669
    %2874 = vmatpush.bf16.msra.mxu0 %v2667
    %2875 = vmatpush.bf16.msra.mxu0 %v2665
    %2876 = vmatpush.bf16.msra.mxu0 %v2663
    %2877 = vmatpush.bf16.msra.mxu0 %v2661
    %2878 = vmatpush.bf16.msra.mxu0 %v2659
    %2879 = vmatmul.bf16.gmra.mxu0 %v2343
    %v2880 = vpop.f32.mrf.mxu0
    %v2881 = vadd.f32 %v2862, %v2880
    %v2882 = vpop.f32.mrf.mxu0
    %v2883 = vadd.f32 %v2864, %v2882
    %2884 = vmatmul.bf16.gmra.mxu0 %v2347
    %v2885 = vpop.f32.mrf.mxu0
    %v2886 = vadd.f32 %v2867, %v2885
    %v2887 = vpop.f32.mrf.mxu0
    %v2888 = vadd.f32 %v2869, %v2887
    %2889 = vdwg.mxu0
    %v2890 = vadd.f32 %v1766, %v2805
    %v2891 = vadd.f32 %v1767, %v2881
    %v2892 = vadd.f32 %v1768, %v2807
    %v2893 = vadd.f32 %v1769, %v2883
    %v2894 = vadd.f32 %v1770, %v2810
    %v2895 = vadd.f32 %v1771, %v2886
    %v2896 = vadd.f32 %v1772, %v2812
    %v2897 = vadd.f32 %v1773, %v2888
    %v2898 = vld [vmem:[%s11] sm:$0x3]
    %v2899 = vld [vmem:[#allocation17] sm:$0x3]
    %v2900 = vadd.f32 %v2890, %v2891
    %2901 = vadd.xlane.f32.xlu0 %v2900
    %v2902 = vpop.xlane.xlu0 %2901
    %v2903 = vadd.f32 %v2892, %v2893
    %2904 = vadd.xlane.f32.xlu0 %v2903
    %v2905 = vpop.xlane.xlu0 %2904
    %v2906 = vadd.f32 %v2894, %v2895
    %2907 = vadd.xlane.f32.xlu0 %v2906
    %v2908 = vpop.xlane.xlu0 %2907
    %v2909 = vadd.f32 %v2896, %v2897
    %2910 = vadd.xlane.f32.xlu0 %v2909
    %v2911 = vpop.xlane.xlu0 %2910
    %v2912 = vmul.f32 %v2902, %v1659
    %v2913 = vmul.f32 %v2905, %v1659
    %v2914 = vmul.f32 %v2908, %v1659
    %v2915 = vmul.f32 %v2911, %v1659
    %v2916 = vsub.f32 %v2890, %v2912
    %v2917 = vsub.f32 %v2891, %v2912
    %v2918 = vsub.f32 %v2892, %v2913
    %v2919 = vsub.f32 %v2893, %v2913
    %v2920 = vsub.f32 %v2894, %v2914
    %v2921 = vsub.f32 %v2895, %v2914
    %v2922 = vsub.f32 %v2896, %v2915
    %v2923 = vsub.f32 %v2897, %v2915
    %v2924 = vmul.f32 %v2916, %v2916
    %v2925 = vmul.f32 %v2917, %v2917
    %v2926 = vmul.f32 %v2918, %v2918
    %v2927 = vmul.f32 %v2919, %v2919
    %v2928 = vmul.f32 %v2920, %v2920
    %v2929 = vmul.f32 %v2921, %v2921
    %v2930 = vmul.f32 %v2922, %v2922
    %v2931 = vmul.f32 %v2923, %v2923
    %v2932 = vadd.f32 %v2924, %v2925
    %2933 = vadd.xlane.f32.xlu0 %v2932
    %v2934 = vpop.xlane.xlu0 %2933
    %v2935 = vadd.f32 %v2926, %v2927
    %2936 = vadd.xlane.f32.xlu0 %v2935
    %v2937 = vpop.xlane.xlu0 %2936
    %v2938 = vadd.f32 %v2928, %v2929
    %2939 = vadd.xlane.f32.xlu0 %v2938
    %v2940 = vpop.xlane.xlu0 %2939
    %v2941 = vadd.f32 %v2930, %v2931
    %2942 = vadd.xlane.f32.xlu0 %v2941
    %v2943 = vpop.xlane.xlu0 %2942
    %v2944 = vmul.f32 %v2934, %v1659
    %v2945 = vmul.f32 %v2937, %v1659
    %v2946 = vmul.f32 %v2940, %v1659
    %v2947 = vmul.f32 %v2943, %v1659
    %v2948 = vadd.f32 %v2944, 1e-05
    %v2949 = vadd.f32 %v2945, 1e-05
    %v2950 = vadd.f32 %v2946, 1e-05
    %v2951 = vadd.f32 %v2947, 1e-05
    %v2952 = vrsqrt.pop %v2948
    %v2953 = vmul.f32 %v2952, %v2948
    %v2954 = vmul.f32 %v2953, %v2952
    %v2955 = vmul.f32 0.5, %v2954
    %v2956 = vsub.f32 1.5, %v2955
    %v2957 = vmul.f32 %v2952, %v2956
    %vm2958 = vweird.f32 %v2948
    %vm2959 = vweird.f32 %v2952
    %vm2960 = vmor %vm2958, %vm2959
    %v2961 = vsel %vm2960, %v2952, %v2957
    %v2962 = vrsqrt.pop %v2949
    %v2963 = vmul.f32 %v2962, %v2949
    %v2964 = vmul.f32 %v2963, %v2962
    %v2965 = vmul.f32 0.5, %v2964
    %v2966 = vsub.f32 1.5, %v2965
    %v2967 = vmul.f32 %v2962, %v2966
    %vm2968 = vweird.f32 %v2949
    %vm2969 = vweird.f32 %v2962
    %vm2970 = vmor %vm2968, %vm2969
    %v2971 = vsel %vm2970, %v2962, %v2967
    %v2972 = vrsqrt.pop %v2950
    %v2973 = vmul.f32 %v2972, %v2950
    %v2974 = vmul.f32 %v2973, %v2972
    %v2975 = vmul.f32 0.5, %v2974
    %v2976 = vsub.f32 1.5, %v2975
    %v2977 = vmul.f32 %v2972, %v2976
    %vm2978 = vweird.f32 %v2950
    %vm2979 = vweird.f32 %v2972
    %vm2980 = vmor %vm2978, %vm2979
    %v2981 = vsel %vm2980, %v2972, %v2977
    %v2982 = vrsqrt.pop %v2951
    %v2983 = vmul.f32 %v2982, %v2951
    %v2984 = vmul.f32 %v2983, %v2982
    %v2985 = vmul.f32 0.5, %v2984
    %v2986 = vsub.f32 1.5, %v2985
    %v2987 = vmul.f32 %v2982, %v2986
    %vm2988 = vweird.f32 %v2951
    %vm2989 = vweird.f32 %v2982
    %vm2990 = vmor %vm2988, %vm2989
    %v2991 = vsel %vm2990, %v2982, %v2987
    %v2992 = vmul.f32 %v2916, %v2961
    %v2993 = vmul.f32 %v2917, %v2961
    %v2994 = vmul.f32 %v2918, %v2971
    %v2995 = vmul.f32 %v2919, %v2971
    %v2996 = vmul.f32 %v2920, %v2981
    %v2997 = vmul.f32 %v2921, %v2981
    %v2998 = vmul.f32 %v2922, %v2991
    %v2999 = vmul.f32 %v2923, %v2991
    %v3001 = vperm.slane %v2898, 0
    %v3002 = vperm.slane %v2898, 1
    %v3005 = vmul.f32 %v2992, %v3001
    %v3006 = vmul.f32 %v2993, %v3002
    %v3007 = vmul.f32 %v2994, %v3001
    %v3008 = vmul.f32 %v2995, %v3002
    %v3009 = vmul.f32 %v2996, %v3001
    %v3010 = vmul.f32 %v2997, %v3002
    %v3011 = vmul.f32 %v2998, %v3001
    %v3012 = vmul.f32 %v2999, %v3002
    %v3014 = vperm.slane %v2899, 0
    %v3015 = vperm.slane %v2899, 1
    %v3018 = vadd.f32 %v3005, %v3014
    %v3019 = vadd.f32 %v3006, %v3015
    %v3020 = vadd.f32 %v3007, %v3014
    %v3021 = vadd.f32 %v3008, %v3015
    %v3022 = vadd.f32 %v3009, %v3014
    %v3023 = vadd.f32 %v3010, %v3015
    %v3024 = vadd.f32 %v3011, %v3014
    %v3025 = vadd.f32 %v3012, %v3015
    %v3026 = vpack.c.bf16 %v3019, %v3018
    %v3027 = vpack.c.bf16 %v3021, %v3020
    %v3028 = vpack.c.bf16 %v3023, %v3022
    %v3029 = vpack.c.bf16 %v3025, %v3024
    %3030 = vst [vmem:[#allocation18] sm:$0xff] %v3026
    %3031 = vst [vmem:[#allocation18 + $0x8] sm:$0xff] %v3027
    %3032 = vst [vmem:[#allocation18 + $0x10] sm:$0xff] %v3028
    %3033 = vst [vmem:[#allocation18 + $0x18] sm:$0xff] %v3029
    // Predicated region
    $region90: #{tpu_custom_call.1} parent=1 // pred_check
      _
    $region91: #{tpu_custom_call.1} parent=1 // pred_check_branch
      %3035 = sbr.rel (0) target = $region93
    $region92: #{tpu_custom_call.1} parent=1 // pred_region
      %3037 = vsyncadd [#allocation5], 0
      %s3038 = sshll.u32 [#allocation18], 4
      %s3039 = int_to_ptr.vmem [resolvable:$true] %s3038
      %s3040 = sshll.u32 %s13, 4
      %s3041 = int_to_ptr.hbm [resolvable:$true] %s3040
      %3046 = dma.vmem_to_hbm [thread:$0]  %s3039, 512, %s3041, [#allocation5], 128, 128, 8
    $region93: #{tpu_custom_call.1} parent=1 // pred_fallthru
      _
    // Predicated region
    $region94: #{tpu_custom_call.1} parent=1 // pred_check
      _
    $region95: #{tpu_custom_call.1} parent=1 // pred_check_branch
      %3048 = sbr.rel (0) target = $region97
    $region96: #{tpu_custom_call.1} parent=1 // pred_region
      %3050 = dma.done [#allocation5], 512
    $region97: #{tpu_custom_call.1} parent=1 // pred_fallthru
      _
    %3051 = vsyncpa [#allocation4], 1
    %3052 = vsyncpa [#allocation7], 1
    %3053 = vsyncpa [#allocation10], 1
    %3054 = vsyncpa [#allocation13], 1
    %3055 = vsyncpa [#allocation16], 1
    %3056 = vsyncpa [#allocation5], 1

// kernel: tpu_custom_call.1
$region0: #{tpu_custom_call.1}
  #allocation0 [shape = 'u32[]', space=smem, size = 0x4, offset = 0x4, fixed_abs, tag = 'smem constant byte address 0x4 - core index']
  #allocation1 [shape = 'u32[72,128]{1,0:T(1,128)}', space=vmem, size = 0x9000, scoped, tag = 'internal scratch']
  #allocation2 [shape = 'bf16[32,256]{1,0:T(8,128)(2,1)}', space=vmem, size = 0x4000, scoped, tag = 'scratch operand']
  %s0 = inlined_call_operand.hbm [shape: bf16[2,16,256], index: 0, kind: input, shape index: {}]
  %s1 = inlined_call_operand.hbm [shape: bf16[256,768], index: 1, kind: input, shape index: {}]
  %s2 = inlined_call_operand.hbm [shape: f32[1,768], index: 2, kind: input, shape index: {}]
  %s3 = inlined_call_operand.hbm [shape: bf16[256,256], index: 3, kind: input, shape index: {}]
  %s4 = inlined_call_operand.vmem [shape: f32[1,256], index: 4, kind: input, shape index: {}]
  %s5 = inlined_call_operand.hbm [shape: f32[1,256], index: 5, kind: input, shape index: {}]
  %s6 = inlined_call_operand.hbm [shape: f32[1,256], index: 6, kind: input, shape index: {}]
  %s7 = inlined_call_operand.hbm [shape: bf16[256,512], index: 7, kind: input, shape index: {}]
  %s8 = inlined_call_operand.vmem [shape: f32[1,512], index: 8, kind: input, shape index: {}]
  %s9 = inlined_call_operand.hbm [shape: bf16[512,256], index: 9, kind: input, shape index: {}]
  %s10 = inlined_call_operand.vmem [shape: f32[1,256], index: 10, kind: input, shape index: {}]
  %s11 = inlined_call_operand.vmem [shape: f32[1,256], index: 11, kind: input, shape index: {}]
  %s12 = inlined_call_operand.hbm [shape: f32[1,256], index: 12, kind: input, shape index: {}]
  %s13 = inlined_call_operand.hbm [shape: bf16[2,16,256], index: 13, kind: output, shape index: {}]
  %s14 = sld [smem:[#allocation0]]
  $region98: #{tpu_custom_call.1} parent=0
    _
  %s16 = ssub.s32 1, %s14
  %s17 = scalar_select 0, %s16, %s14
  $region1: #{tpu_custom_call.1} parent=0
    #allocation3 [shape = 'u8[16384]{0}', space=vmem, size = 0x4000, scoped, tag = 'input window, operand 0, single buffered']
    #allocation4 [shape = 's32[1]{0}', space=sflag, size = 0x4, scoped, tag = 'scoped memory for tpu_custom_call.1']
    #allocation5 [shape = 's32[1]{0}', space=sflag, size = 0x4, scoped, tag = 'scoped memory for tpu_custom_call.1']
    #allocation6 [shape = 'u8[393216]{0}', space=vmem, size = 0x60000, scoped, tag = 'input window, operand 1, single buffered']
    #allocation7 [shape = 's32[1]{0}', space=sflag, size = 0x4, scoped, tag = 'scoped memory for tpu_custom_call.1']
    #allocation8 [shape = 'u8[3072]{0}', space=vmem, size = 0xc00, scoped, tag = 'input window, operand 2, single buffered']
    #allocation9 [shape = 'u8[131072]{0}', space=vmem, size = 0x20000, scoped, tag = 'input window, operand 3, single buffered']
    #allocation10 [shape = 's32[1]{0}', space=sflag, size = 0x4, scoped, tag = 'scoped memory for tpu_custom_call.1']
    #allocation11 [shape = 'u8[1024]{0}', space=vmem, size = 0x400, scoped, tag = 'input window, operand 5, single buffered']
    #allocation12 [shape = 'u8[1024]{0}', space=vmem, size = 0x400, scoped, tag = 'input window, operand 6, single buffered']
    #allocation13 [shape = 's32[1]{0}', space=sflag, size = 0x4, scoped, tag = 'scoped memory for tpu_custom_call.1']
    #allocation14 [shape = 'u8[262144]{0}', space=vmem, size = 0x40000, scoped, tag = 'input window, operand 7, single buffered']
    #allocation15 [shape = 'u8[262144]{0}', space=vmem, size = 0x40000, scoped, tag = 'input window, operand 9, single buffered']
    #allocation16 [shape = 's32[1]{0}', space=sflag, size = 0x4, scoped, tag = 'scoped memory for tpu_custom_call.1']
    #allocation17 [shape = 'u8[1024]{0}', space=vmem, size = 0x400, scoped, tag = 'input window, operand 12, single buffered']
    #allocation18 [shape = 'u8[16384]{0}', space=vmem, size = 0x4000, scoped, tag = 'output window, operand 0, single buffered']
    %18 = vsyncpa [#allocation4], 0
    %19 = vsyncpa [#allocation7], 0
    %20 = vsyncpa [#allocation10], 0
    %21 = vsyncpa [#allocation13], 0
    %22 = vsyncpa [#allocation16], 0
    %23 = vsyncpa [#allocation5], 0
    // Predicated region
    $region2: #{tpu_custom_call.1} parent=1 // pred_check
      _
    $region3: #{tpu_custom_call.1} parent=1 // pred_check_branch
      %25 = sbr.rel (0) target = $region5
    $region4: #{tpu_custom_call.1} parent=1 // pred_region
      %27 = vsyncadd [#allocation4], 0
      %s28 = sshll.u32 %s0, 4
      %s29 = int_to_ptr.hbm [resolvable:$true] %s28
      %s30 = sshll.u32 [#allocation3], 4
      %s31 = int_to_ptr.vmem [resolvable:$true] %s30
      %36 = dma.hbm_to_vmem [thread:$0]  %s29, 512, %s31, [#allocation4], 128, 128, 8
    $region5: #{tpu_custom_call.1} parent=1 // pred_fallthru
      _
    // Predicated region
    $region6: #{tpu_custom_call.1} parent=1 // pred_check
      _
    $region7: #{tpu_custom_call.1} parent=1 // pred_check_branch
      %38 = sbr.rel (0) target = $region9
    $region8: #{tpu_custom_call.1} parent=1 // pred_region
      %40 = vsyncadd [#allocation7], 0
      %s41 = sshll.u32 %s1, 4
      %s42 = int_to_ptr.hbm [resolvable:$true] %s41
      %s43 = sshll.u32 [#allocation6], 4
      %s44 = int_to_ptr.vmem [resolvable:$true] %s43
      %49 = dma.hbm_to_vmem [thread:$0]  %s42, 12288, %s44, [#allocation7], 384, 384, 24
    $region9: #{tpu_custom_call.1} parent=1 // pred_fallthru
      _
    // Predicated region
    $region10: #{tpu_custom_call.1} parent=1 // pred_check
      _
    $region11: #{tpu_custom_call.1} parent=1 // pred_check_branch
      %51 = sbr.rel (0) target = $region13
    $region12: #{tpu_custom_call.1} parent=1 // pred_region
      %53 = vsyncadd [#allocation7], 0
      %s55 = sshll.u32 %s2, 4
      %s56 = int_to_ptr.hbm [resolvable:$true] %s55
      %s57 = sshll.u32 [#allocation8], 4
      %s58 = int_to_ptr.vmem [resolvable:$true] %s57
      %60 = dma.hbm_to_vmem [thread:$0]  %s56, 96, %s58, [#allocation7]
    $region13: #{tpu_custom_call.1} parent=1 // pred_fallthru
      _
    // Predicated region
    $region14: #{tpu_custom_call.1} parent=1 // pred_check
      _
    $region15: #{tpu_custom_call.1} parent=1 // pred_check_branch
      %62 = sbr.rel (0) target = $region17
    $region16: #{tpu_custom_call.1} parent=1 // pred_region
      %64 = vsyncadd [#allocation10], 0
      %s65 = sshll.u32 %s3, 4
      %s66 = int_to_ptr.hbm [resolvable:$true] %s65
      %s67 = sshll.u32 [#allocation9], 4
      %s68 = int_to_ptr.vmem [resolvable:$true] %s67
      %73 = dma.hbm_to_vmem [thread:$0]  %s66, 4096, %s68, [#allocation10], 128, 128, 8
    $region17: #{tpu_custom_call.1} parent=1 // pred_fallthru
      _
    // Predicated region
    $region18: #{tpu_custom_call.1} parent=1 // pred_check
      _
    $region19: #{tpu_custom_call.1} parent=1 // pred_check_branch
      %75 = sbr.rel (0) target = $region21
    $region20: #{tpu_custom_call.1} parent=1 // pred_region
      _
    $region21: #{tpu_custom_call.1} parent=1 // pred_fallthru
      _
    // Predicated region
    $region22: #{tpu_custom_call.1} parent=1 // pred_check
      _
    $region23: #{tpu_custom_call.1} parent=1 // pred_check_branch
      %77 = sbr.rel (0) target = $region25
    $region24: #{tpu_custom_call.1} parent=1 // pred_region
      %79 = vsyncadd [#allocation10], 0
      %s81 = sshll.u32 %s5, 4
      %s82 = int_to_ptr.hbm [resolvable:$true] %s81
      %s83 = sshll.u32 [#allocation11], 4
      %s84 = int_to_ptr.vmem [resolvable:$true] %s83
      %86 = dma.hbm_to_vmem [thread:$0]  %s82, 32, %s84, [#allocation10]
    $region25: #{tpu_custom_call.1} parent=1 // pred_fallthru
      _
    // Predicated region
    $region26: #{tpu_custom_call.1} parent=1 // pred_check
      _
    $region27: #{tpu_custom_call.1} parent=1 // pred_check_branch
      %88 = sbr.rel (0) target = $region29
    $region28: #{tpu_custom_call.1} parent=1 // pred_region
      %90 = vsyncadd [#allocation13], 0
      %s92 = sshll.u32 %s6, 4
      %s93 = int_to_ptr.hbm [resolvable:$true] %s92
      %s94 = sshll.u32 [#allocation12], 4
      %s95 = int_to_ptr.vmem [resolvable:$true] %s94
      %97 = dma.hbm_to_vmem [thread:$0]  %s93, 32, %s95, [#allocation13]
    $region29: #{tpu_custom_call.1} parent=1 // pred_fallthru
      _
    // Predicated region
    $region30: #{tpu_custom_call.1} parent=1 // pred_check
      _
    $region31: #{tpu_custom_call.1} parent=1 // pred_check_branch
      %99 = sbr.rel (0) target = $region33
    $region32: #{tpu_custom_call.1} parent=1 // pred_region
      %101 = vsyncadd [#allocation13], 0
      %s102 = sshll.u32 %s7, 4
      %s103 = int_to_ptr.hbm [resolvable:$true] %s102
      %s104 = sshll.u32 [#allocation14], 4
      %s105 = int_to_ptr.vmem [resolvable:$true] %s104
      %110 = dma.hbm_to_vmem [thread:$0]  %s103, 8192, %s105, [#allocation13], 256, 256, 16
    $region33: #{tpu_custom_call.1} parent=1 // pred_fallthru
      _
    // Predicated region
    $region34: #{tpu_custom_call.1} parent=1 // pred_check
      _
    $region35: #{tpu_custom_call.1} parent=1 // pred_check_branch
      %112 = sbr.rel (0) target = $region37
    $region36: #{tpu_custom_call.1} parent=1 // pred_region
      _
    $region37: #{tpu_custom_call.1} parent=1 // pred_fallthru
      _
    // Predicated region
    $region38: #{tpu_custom_call.1} parent=1 // pred_check
      _
    $region39: #{tpu_custom_call.1} parent=1 // pred_check_branch
      %114 = sbr.rel (0) target = $region41
    $region40: #{tpu_custom_call.1} parent=1 // pred_region
      %116 = vsyncadd [#allocation16], 0
      %s117 = sshll.u32 %s9, 4
      %s118 = int_to_ptr.hbm [resolvable:$true] %s117
      %s119 = sshll.u32 [#allocation15], 4
      %s120 = int_to_ptr.vmem [resolvable:$true] %s119
      %125 = dma.hbm_to_vmem [thread:$0]  %s118, 8192, %s120, [#allocation16], 128, 128, 8
    $region41: #{tpu_custom_call.1} parent=1 // pred_fallthru
      _
    // Predicated region
    $region42: #{tpu_custom_call.1} parent=1 // pred_check
      _
    $region43: #{tpu_custom_call.1} parent=1 // pred_check_branch
      %127 = sbr.rel (0) target = $region45
    $region44: #{tpu_custom_call.1} parent=1 // pred_region
      _
    $region45: #{tpu_custom_call.1} parent=1 // pred_fallthru
      _
    // Predicated region
    $region46: #{tpu_custom_call.1} parent=1 // pred_check
      _
    $region47: #{tpu_custom_call.1} parent=1 // pred_check_branch
      %129 = sbr.rel (0) target = $region49
    $region48: #{tpu_custom_call.1} parent=1 // pred_region
      _
    $region49: #{tpu_custom_call.1} parent=1 // pred_fallthru
      _
    // Predicated region
    $region50: #{tpu_custom_call.1} parent=1 // pred_check
      _
    $region51: #{tpu_custom_call.1} parent=1 // pred_check_branch
      %131 = sbr.rel (0) target = $region53
    $region52: #{tpu_custom_call.1} parent=1 // pred_region
      %133 = vsyncadd [#allocation16], 0
      %s135 = sshll.u32 %s12, 4
      %s136 = int_to_ptr.hbm [resolvable:$true] %s135
      %s137 = sshll.u32 [#allocation17], 4
      %s138 = int_to_ptr.vmem [resolvable:$true] %s137
      %140 = dma.hbm_to_vmem [thread:$0]  %s136, 32, %s138, [#allocation16]
    $region53: #{tpu_custom_call.1} parent=1 // pred_fallthru
      _
    // Predicated region
    $region54: #{tpu_custom_call.1} parent=1 // pred_check
      _
    $region55: #{tpu_custom_call.1} parent=1 // pred_check_branch
      %142 = sbr.rel (0) target = $region57
    $region56: #{tpu_custom_call.1} parent=1 // pred_region
      %144 = dma.done [#allocation4], 512
    $region57: #{tpu_custom_call.1} parent=1 // pred_fallthru
      _
    // Predicated region
    $region58: #{tpu_custom_call.1} parent=1 // pred_check
      _
    $region59: #{tpu_custom_call.1} parent=1 // pred_check_branch
      %146 = sbr.rel (0) target = $region61
    $region60: #{tpu_custom_call.1} parent=1 // pred_region
      %148 = dma.done [#allocation7], 12288
    $region61: #{tpu_custom_call.1} parent=1 // pred_fallthru
      _
    // Predicated region
    $region62: #{tpu_custom_call.1} parent=1 // pred_check
      _
    $region63: #{tpu_custom_call.1} parent=1 // pred_check_branch
      %150 = sbr.rel (0) target = $region65
    $region64: #{tpu_custom_call.1} parent=1 // pred_region
      %152 = dma.done [#allocation7], 96
    $region65: #{tpu_custom_call.1} parent=1 // pred_fallthru
      _
    // Predicated region
    $region66: #{tpu_custom_call.1} parent=1 // pred_check
      _
    $region67: #{tpu_custom_call.1} parent=1 // pred_check_branch
      %154 = sbr.rel (0) target = $region69
    $region68: #{tpu_custom_call.1} parent=1 // pred_region
      %156 = dma.done [#allocation10], 4096
    $region69: #{tpu_custom_call.1} parent=1 // pred_fallthru
      _
    // Predicated region
    $region70: #{tpu_custom_call.1} parent=1 // pred_check
      _
    $region71: #{tpu_custom_call.1} parent=1 // pred_check_branch
      %158 = sbr.rel (0) target = $region73
    $region72: #{tpu_custom_call.1} parent=1 // pred_region
      %160 = dma.done [#allocation10], 32
    $region73: #{tpu_custom_call.1} parent=1 // pred_fallthru
      _
    // Predicated region
    $region74: #{tpu_custom_call.1} parent=1 // pred_check
      _
    $region75: #{tpu_custom_call.1} parent=1 // pred_check_branch
      %162 = sbr.rel (0) target = $region77
    $region76: #{tpu_custom_call.1} parent=1 // pred_region
      %164 = dma.done [#allocation13], 32
    $region77: #{tpu_custom_call.1} parent=1 // pred_fallthru
      _
    // Predicated region
    $region78: #{tpu_custom_call.1} parent=1 // pred_check
      _
    $region79: #{tpu_custom_call.1} parent=1 // pred_check_branch
      %166 = sbr.rel (0) target = $region81
    $region80: #{tpu_custom_call.1} parent=1 // pred_region
      %168 = dma.done [#allocation13], 8192
    $region81: #{tpu_custom_call.1} parent=1 // pred_fallthru
      _
    // Predicated region
    $region82: #{tpu_custom_call.1} parent=1 // pred_check
      _
    $region83: #{tpu_custom_call.1} parent=1 // pred_check_branch
      %170 = sbr.rel (0) target = $region85
    $region84: #{tpu_custom_call.1} parent=1 // pred_region
      %172 = dma.done [#allocation16], 8192
    $region85: #{tpu_custom_call.1} parent=1 // pred_fallthru
      _
    // Predicated region
    $region86: #{tpu_custom_call.1} parent=1 // pred_check
      _
    $region87: #{tpu_custom_call.1} parent=1 // pred_check_branch
      %174 = sbr.rel (0) target = $region89
    $region88: #{tpu_custom_call.1} parent=1 // pred_region
      %176 = dma.done [#allocation16], 32
    $region89: #{tpu_custom_call.1} parent=1 // pred_fallthru
      _
    %v178 = vld [vmem:[#allocation3] sm:$0xff]
    %v179 = vld [vmem:[#allocation3 + $0x8] sm:$0xff]
    %v180 = vld [vmem:[#allocation3 + $0x10] sm:$0xff]
    %v181 = vld [vmem:[#allocation3 + $0x18] sm:$0xff]
    %v182 = vld [vmem:[#allocation6] sm:$0xff]
    %v183 = vld [vmem:[#allocation6 + $0x8] sm:$0xff]
    %v184 = vld [vmem:[#allocation6 + $0x10] sm:$0xff]
    %v185 = vld [vmem:[#allocation6 + $0x18] sm:$0xff]
    %v186 = vld [vmem:[#allocation6 + $0x20] sm:$0xff]
    %v187 = vld [vmem:[#allocation6 + $0x28] sm:$0xff]
    %v188 = vld [vmem:[#allocation6 + $0x30] sm:$0xff]
    %v189 = vld [vmem:[#allocation6 + $0x38] sm:$0xff]
    %v190 = vld [vmem:[#allocation6 + $0x40] sm:$0xff]
    %v191 = vld [vmem:[#allocation6 + $0x48] sm:$0xff]
    %v192 = vld [vmem:[#allocation6 + $0x50] sm:$0xff]
    %v193 = vld [vmem:[#allocation6 + $0x58] sm:$0xff]
    %v194 = vld [vmem:[#allocation6 + $0x60] sm:$0xff]
    %v195 = vld [vmem:[#allocation6 + $0x68] sm:$0xff]
    %v196 = vld [vmem:[#allocation6 + $0x70] sm:$0xff]
    %v197 = vld [vmem:[#allocation6 + $0x78] sm:$0xff]
    %v198 = vld [vmem:[#allocation6 + $0x80] sm:$0xff]
    %v199 = vld [vmem:[#allocation6 + $0x88] sm:$0xff]
    %v200 = vld [vmem:[#allocation6 + $0x90] sm:$0xff]
    %v201 = vld [vmem:[#allocation6 + $0x98] sm:$0xff]
    %v202 = vld [vmem:[#allocation6 + $0xa0] sm:$0xff]
    %v203 = vld [vmem:[#allocation6 + $0xa8] sm:$0xff]
    %v204 = vld [vmem:[#allocation6 + $0xb0] sm:$0xff]
    %v205 = vld [vmem:[#allocation6 + $0xb8] sm:$0xff]
    %v206 = vld [vmem:[#allocation6 + $0xc0] sm:$0xff]
    %v207 = vld [vmem:[#allocation6 + $0xc8] sm:$0xff]
    %v208 = vld [vmem:[#allocation6 + $0xd0] sm:$0xff]
    %v209 = vld [vmem:[#allocation6 + $0xd8] sm:$0xff]
    %v210 = vld [vmem:[#allocation6 + $0xe0] sm:$0xff]
    %v211 = vld [vmem:[#allocation6 + $0xe8] sm:$0xff]
    %v212 = vld [vmem:[#allocation6 + $0xf0] sm:$0xff]
    %v213 = vld [vmem:[#allocation6 + $0xf8] sm:$0xff]
    %v214 = vld [vmem:[#allocation6 + $0x100] sm:$0xff]
    %v215 = vld [vmem:[#allocation6 + $0x108] sm:$0xff]
    %v216 = vld [vmem:[#allocation6 + $0x110] sm:$0xff]
    %v217 = vld [vmem:[#allocation6 + $0x118] sm:$0xff]
    %v218 = vld [vmem:[#allocation6 + $0x120] sm:$0xff]
    %v219 = vld [vmem:[#allocation6 + $0x128] sm:$0xff]
    %v220 = vld [vmem:[#allocation6 + $0x130] sm:$0xff]
    %v221 = vld [vmem:[#allocation6 + $0x138] sm:$0xff]
    %v222 = vld [vmem:[#allocation6 + $0x140] sm:$0xff]
    %v223 = vld [vmem:[#allocation6 + $0x148] sm:$0xff]
    %v224 = vld [vmem:[#allocation6 + $0x150] sm:$0xff]
    %v225 = vld [vmem:[#allocation6 + $0x158] sm:$0xff]
    %v226 = vld [vmem:[#allocation6 + $0x160] sm:$0xff]
    %v227 = vld [vmem:[#allocation6 + $0x168] sm:$0xff]
    %v228 = vld [vmem:[#allocation6 + $0x170] sm:$0xff]
    %v229 = vld [vmem:[#allocation6 + $0x178] sm:$0xff]
    %v230 = vld [vmem:[#allocation6 + $0x180] sm:$0xff]
    %v231 = vld [vmem:[#allocation6 + $0x188] sm:$0xff]
    %v232 = vld [vmem:[#allocation6 + $0x190] sm:$0xff]
    %v233 = vld [vmem:[#allocation6 + $0x198] sm:$0xff]
    %v234 = vld [vmem:[#allocation6 + $0x1a0] sm:$0xff]
    %v235 = vld [vmem:[#allocation6 + $0x1a8] sm:$0xff]
    %v236 = vld [vmem:[#allocation6 + $0x1b0] sm:$0xff]
    %v237 = vld [vmem:[#allocation6 + $0x1b8] sm:$0xff]
    %v238 = vld [vmem:[#allocation6 + $0x1c0] sm:$0xff]
    %v239 = vld [vmem:[#allocation6 + $0x1c8] sm:$0xff]
    %v240 = vld [vmem:[#allocation6 + $0x1d0] sm:$0xff]
    %v241 = vld [vmem:[#allocation6 + $0x1d8] sm:$0xff]
    %v242 = vld [vmem:[#allocation6 + $0x1e0] sm:$0xff]
    %v243 = vld [vmem:[#allocation6 + $0x1e8] sm:$0xff]
    %v244 = vld [vmem:[#allocation6 + $0x1f0] sm:$0xff]
    %v245 = vld [vmem:[#allocation6 + $0x1f8] sm:$0xff]
    %v246 = vld [vmem:[#allocation6 + $0x200] sm:$0xff]
    %v247 = vld [vmem:[#allocation6 + $0x208] sm:$0xff]
    %v248 = vld [vmem:[#allocation6 + $0x210] sm:$0xff]
    %v249 = vld [vmem:[#allocation6 + $0x218] sm:$0xff]
    %v250 = vld [vmem:[#allocation6 + $0x220] sm:$0xff]
    %v251 = vld [vmem:[#allocation6 + $0x228] sm:$0xff]
    %v252 = vld [vmem:[#allocation6 + $0x230] sm:$0xff]
    %v253 = vld [vmem:[#allocation6 + $0x238] sm:$0xff]
    %v254 = vld [vmem:[#allocation6 + $0x240] sm:$0xff]
    %v255 = vld [vmem:[#allocation6 + $0x248] sm:$0xff]
    %v256 = vld [vmem:[#allocation6 + $0x250] sm:$0xff]
    %v257 = vld [vmem:[#allocation6 + $0x258] sm:$0xff]
    %v258 = vld [vmem:[#allocation6 + $0x260] sm:$0xff]
    %v259 = vld [vmem:[#allocation6 + $0x268] sm:$0xff]
    %v260 = vld [vmem:[#allocation6 + $0x270] sm:$0xff]
    %v261 = vld [vmem:[#allocation6 + $0x278] sm:$0xff]
    %v262 = vld [vmem:[#allocation6 + $0x280] sm:$0xff]
    %v263 = vld [vmem:[#allocation6 + $0x288] sm:$0xff]
    %v264 = vld [vmem:[#allocation6 + $0x290] sm:$0xff]
    %v265 = vld [vmem:[#allocation6 + $0x298] sm:$0xff]
    %v266 = vld [vmem:[#allocation6 + $0x2a0] sm:$0xff]
    %v267 = vld [vmem:[#allocation6 + $0x2a8] sm:$0xff]
    %v268 = vld [vmem:[#allocation6 + $0x2b0] sm:$0xff]
    %v269 = vld [vmem:[#allocation6 + $0x2b8] sm:$0xff]
    %v270 = vld [vmem:[#allocation6 + $0x2c0] sm:$0xff]
    %v271 = vld [vmem:[#allocation6 + $0x2c8] sm:$0xff]
    %v272 = vld [vmem:[#allocation6 + $0x2d0] sm:$0xff]
    %v273 = vld [vmem:[#allocation6 + $0x2d8] sm:$0xff]
    %v274 = vld [vmem:[#allocation6 + $0x2e0] sm:$0xff]
    %v275 = vld [vmem:[#allocation6 + $0x2e8] sm:$0xff]
    %v276 = vld [vmem:[#allocation6 + $0x2f0] sm:$0xff]
    %v277 = vld [vmem:[#allocation6 + $0x2f8] sm:$0xff]
    %v278 = vld [vmem:[#allocation8] sm:$0x3f]
    %v280 = vperm.slane %v278, 0
    %v281 = vperm.slane %v278, 1
    %v282 = vperm.slane %v278, 2
    %v283 = vperm.slane %v278, 3
    %v284 = vperm.slane %v278, 4
    %v285 = vperm.slane %v278, 5
    %v296 = vunpack.c.l.b16 %v178
    %v297 = vunpack.c.h.b16 %v178
    %v298 = vunpack.c.l.b16 %v179
    %v299 = vunpack.c.h.b16 %v179
    %v300 = vunpack.c.l.b16 %v180
    %v301 = vunpack.c.h.b16 %v180
    %v302 = vunpack.c.l.b16 %v181
    %v303 = vunpack.c.h.b16 %v181
    %v304 = vpack.c.b16 %v298, %v296
    %v305 = vpack.c.b16 %v299, %v297
    %v306 = vpack.c.b16 %v302, %v300
    %v307 = vpack.c.b16 %v303, %v301
    %v408 = vunpack.c.l.b16 %v182
    %v409 = vunpack.c.h.b16 %v182
    %v410 = vunpack.c.l.b16 %v183
    %v411 = vunpack.c.h.b16 %v183
    %v412 = vunpack.c.l.b16 %v184
    %v413 = vunpack.c.h.b16 %v184
    %v414 = vunpack.c.l.b16 %v185
    %v415 = vunpack.c.h.b16 %v185
    %v416 = vunpack.c.l.b16 %v186
    %v417 = vunpack.c.h.b16 %v186
    %v418 = vunpack.c.l.b16 %v187
    %v419 = vunpack.c.h.b16 %v187
    %v420 = vunpack.c.l.b16 %v188
    %v421 = vunpack.c.h.b16 %v188
    %v422 = vunpack.c.l.b16 %v189
    %v423 = vunpack.c.h.b16 %v189
    %v424 = vunpack.c.l.b16 %v190
    %v425 = vunpack.c.h.b16 %v190
    %v426 = vunpack.c.l.b16 %v191
    %v427 = vunpack.c.h.b16 %v191
    %v428 = vunpack.c.l.b16 %v192
    %v429 = vunpack.c.h.b16 %v192
    %v430 = vunpack.c.l.b16 %v193
    %v431 = vunpack.c.h.b16 %v193
    %v432 = vunpack.c.l.b16 %v194
    %v433 = vunpack.c.h.b16 %v194
    %v434 = vunpack.c.l.b16 %v195
    %v435 = vunpack.c.h.b16 %v195
    %v436 = vunpack.c.l.b16 %v196
    %v437 = vunpack.c.h.b16 %v196
    %v438 = vunpack.c.l.b16 %v197
    %v439 = vunpack.c.h.b16 %v197
    %v440 = vunpack.c.l.b16 %v198
    %v441 = vunpack.c.h.b16 %v198
    %v442 = vunpack.c.l.b16 %v199
    %v443 = vunpack.c.h.b16 %v199
    %v444 = vunpack.c.l.b16 %v200
    %v445 = vunpack.c.h.b16 %v200
    %v446 = vunpack.c.l.b16 %v201
    %v447 = vunpack.c.h.b16 %v201
    %v448 = vunpack.c.l.b16 %v202
    %v449 = vunpack.c.h.b16 %v202
    %v450 = vunpack.c.l.b16 %v203
    %v451 = vunpack.c.h.b16 %v203
    %v452 = vunpack.c.l.b16 %v204
    %v453 = vunpack.c.h.b16 %v204
    %v454 = vunpack.c.l.b16 %v205
    %v455 = vunpack.c.h.b16 %v205
    %v456 = vunpack.c.l.b16 %v206
    %v457 = vunpack.c.h.b16 %v206
    %v458 = vunpack.c.l.b16 %v207
    %v459 = vunpack.c.h.b16 %v207
    %v460 = vunpack.c.l.b16 %v208
    %v461 = vunpack.c.h.b16 %v208
    %v462 = vunpack.c.l.b16 %v209
    %v463 = vunpack.c.h.b16 %v209
    %v464 = vunpack.c.l.b16 %v210
    %v465 = vunpack.c.h.b16 %v210
    %v466 = vunpack.c.l.b16 %v211
    %v467 = vunpack.c.h.b16 %v211
    %v468 = vunpack.c.l.b16 %v212
    %v469 = vunpack.c.h.b16 %v212
    %v470 = vunpack.c.l.b16 %v213
    %v471 = vunpack.c.h.b16 %v213
    %v472 = vunpack.c.l.b16 %v214
    %v473 = vunpack.c.h.b16 %v214
    %v474 = vunpack.c.l.b16 %v215
    %v475 = vunpack.c.h.b16 %v215
    %v476 = vunpack.c.l.b16 %v216
    %v477 = vunpack.c.h.b16 %v216
    %v478 = vunpack.c.l.b16 %v217
    %v479 = vunpack.c.h.b16 %v217
    %v480 = vunpack.c.l.b16 %v218
    %v481 = vunpack.c.h.b16 %v218
    %v482 = vunpack.c.l.b16 %v219
    %v483 = vunpack.c.h.b16 %v219
    %v484 = vunpack.c.l.b16 %v220
    %v485 = vunpack.c.h.b16 %v220
    %v486 = vunpack.c.l.b16 %v221
    %v487 = vunpack.c.h.b16 %v221
    %v488 = vunpack.c.l.b16 %v222
    %v489 = vunpack.c.h.b16 %v222
    %v490 = vunpack.c.l.b16 %v223
    %v491 = vunpack.c.h.b16 %v223
    %v492 = vunpack.c.l.b16 %v224
    %v493 = vunpack.c.h.b16 %v224
    %v494 = vunpack.c.l.b16 %v225
    %v495 = vunpack.c.h.b16 %v225
    %v496 = vunpack.c.l.b16 %v226
    %v497 = vunpack.c.h.b16 %v226
    %v498 = vunpack.c.l.b16 %v227
    %v499 = vunpack.c.h.b16 %v227
    %v500 = vunpack.c.l.b16 %v228
    %v501 = vunpack.c.h.b16 %v228
    %v502 = vunpack.c.l.b16 %v229
    %v503 = vunpack.c.h.b16 %v229
    %v504 = vunpack.c.l.b16 %v230
    %v505 = vunpack.c.h.b16 %v230
    %v506 = vunpack.c.l.b16 %v231
    %v507 = vunpack.c.h.b16 %v231
    %v508 = vunpack.c.l.b16 %v232
    %v509 = vunpack.c.h.b16 %v232
    %v510 = vunpack.c.l.b16 %v233
    %v511 = vunpack.c.h.b16 %v233
    %v512 = vunpack.c.l.b16 %v234
    %v513 = vunpack.c.h.b16 %v234
    %v514 = vunpack.c.l.b16 %v235
    %v515 = vunpack.c.h.b16 %v235
    %v516 = vunpack.c.l.b16 %v236
    %v517 = vunpack.c.h.b16 %v236
    %v518 = vunpack.c.l.b16 %v237
    %v519 = vunpack.c.h.b16 %v237
    %v520 = vunpack.c.l.b16 %v238
    %v521 = vunpack.c.h.b16 %v238
    %v522 = vunpack.c.l.b16 %v239
    %v523 = vunpack.c.h.b16 %v239
    %v524 = vunpack.c.l.b16 %v240
    %v525 = vunpack.c.h.b16 %v240
    %v526 = vunpack.c.l.b16 %v241
    %v527 = vunpack.c.h.b16 %v241
    %v528 = vunpack.c.l.b16 %v242
    %v529 = vunpack.c.h.b16 %v242
    %v530 = vunpack.c.l.b16 %v243
    %v531 = vunpack.c.h.b16 %v243
    %v532 = vunpack.c.l.b16 %v244
    %v533 = vunpack.c.h.b16 %v244
    %v534 = vunpack.c.l.b16 %v245
    %v535 = vunpack.c.h.b16 %v245
    %v536 = vunpack.c.l.b16 %v246
    %v537 = vunpack.c.h.b16 %v246
    %v538 = vunpack.c.l.b16 %v247
    %v539 = vunpack.c.h.b16 %v247
    %v540 = vunpack.c.l.b16 %v248
    %v541 = vunpack.c.h.b16 %v248
    %v542 = vunpack.c.l.b16 %v249
    %v543 = vunpack.c.h.b16 %v249
    %v544 = vunpack.c.l.b16 %v250
    %v545 = vunpack.c.h.b16 %v250
    %v546 = vunpack.c.l.b16 %v251
    %v547 = vunpack.c.h.b16 %v251
    %v548 = vunpack.c.l.b16 %v252
    %v549 = vunpack.c.h.b16 %v252
    %v550 = vunpack.c.l.b16 %v253
    %v551 = vunpack.c.h.b16 %v253
    %v552 = vunpack.c.l.b16 %v254
    %v553 = vunpack.c.h.b16 %v254
    %v554 = vunpack.c.l.b16 %v255
    %v555 = vunpack.c.h.b16 %v255
    %v556 = vunpack.c.l.b16 %v256
    %v557 = vunpack.c.h.b16 %v256
    %v558 = vunpack.c.l.b16 %v257
    %v559 = vunpack.c.h.b16 %v257
    %v560 = vunpack.c.l.b16 %v258
    %v561 = vunpack.c.h.b16 %v258
    %v562 = vunpack.c.l.b16 %v259
    %v563 = vunpack.c.h.b16 %v259
    %v564 = vunpack.c.l.b16 %v260
    %v565 = vunpack.c.h.b16 %v260
    %v566 = vunpack.c.l.b16 %v261
    %v567 = vunpack.c.h.b16 %v261
    %v568 = vunpack.c.l.b16 %v262
    %v569 = vunpack.c.h.b16 %v262
    %v570 = vunpack.c.l.b16 %v263
    %v571 = vunpack.c.h.b16 %v263
    %v572 = vunpack.c.l.b16 %v264
    %v573 = vunpack.c.h.b16 %v264
    %v574 = vunpack.c.l.b16 %v265
    %v575 = vunpack.c.h.b16 %v265
    %v576 = vunpack.c.l.b16 %v266
    %v577 = vunpack.c.h.b16 %v266
    %v578 = vunpack.c.l.b16 %v267
    %v579 = vunpack.c.h.b16 %v267
    %v580 = vunpack.c.l.b16 %v268
    %v581 = vunpack.c.h.b16 %v268
    %v582 = vunpack.c.l.b16 %v269
    %v583 = vunpack.c.h.b16 %v269
    %v584 = vunpack.c.l.b16 %v270
    %v585 = vunpack.c.h.b16 %v270
    %v586 = vunpack.c.l.b16 %v271
    %v587 = vunpack.c.h.b16 %v271
    %v588 = vunpack.c.l.b16 %v272
    %v589 = vunpack.c.h.b16 %v272
    %v590 = vunpack.c.l.b16 %v273
    %v591 = vunpack.c.h.b16 %v273
    %v592 = vunpack.c.l.b16 %v274
    %v593 = vunpack.c.h.b16 %v274
    %v594 = vunpack.c.l.b16 %v275
    %v595 = vunpack.c.h.b16 %v275
    %v596 = vunpack.c.l.b16 %v276
    %v597 = vunpack.c.h.b16 %v276
    %v598 = vunpack.c.l.b16 %v277
    %v599 = vunpack.c.h.b16 %v277
    %v600 = vpack.c.b16 %v414, %v408
    %v601 = vpack.c.b16 %v415, %v409
    %v602 = vpack.c.b16 %v416, %v410
    %v603 = vpack.c.b16 %v417, %v411
    %v604 = vpack.c.b16 %v418, %v412
    %v605 = vpack.c.b16 %v419, %v413
    %v606 = vpack.c.b16 %v426, %v420
    %v607 = vpack.c.b16 %v427, %v421
    %v608 = vpack.c.b16 %v428, %v422
    %v609 = vpack.c.b16 %v429, %v423
    %v610 = vpack.c.b16 %v430, %v424
    %v611 = vpack.c.b16 %v431, %v425
    %v612 = vpack.c.b16 %v438, %v432
    %v613 = vpack.c.b16 %v439, %v433
    %v614 = vpack.c.b16 %v440, %v434
    %v615 = vpack.c.b16 %v441, %v435
    %v616 = vpack.c.b16 %v442, %v436
    %v617 = vpack.c.b16 %v443, %v437
    %v618 = vpack.c.b16 %v450, %v444
    %v619 = vpack.c.b16 %v451, %v445
    %v620 = vpack.c.b16 %v452, %v446
    %v621 = vpack.c.b16 %v453, %v447
    %v622 = vpack.c.b16 %v454, %v448
    %v623 = vpack.c.b16 %v455, %v449
    %v624 = vpack.c.b16 %v462, %v456
    %v625 = vpack.c.b16 %v463, %v457
    %v626 = vpack.c.b16 %v464, %v458
    %v627 = vpack.c.b16 %v465, %v459
    %v628 = vpack.c.b16 %v466, %v460
    %v629 = vpack.c.b16 %v467, %v461
    %v630 = vpack.c.b16 %v474, %v468
    %v631 = vpack.c.b16 %v475, %v469
    %v632 = vpack.c.b16 %v476, %v470
    %v633 = vpack.c.b16 %v477, %v471
    %v634 = vpack.c.b16 %v478, %v472
    %v635 = vpack.c.b16 %v479, %v473
    %v636 = vpack.c.b16 %v486, %v480
    %v637 = vpack.c.b16 %v487, %v481
    %v638 = vpack.c.b16 %v488, %v482
    %v639 = vpack.c.b16 %v489, %v483
    %v640 = vpack.c.b16 %v490, %v484
    %v641 = vpack.c.b16 %v491, %v485
    %v642 = vpack.c.b16 %v498, %v492
    %v643 = vpack.c.b16 %v499, %v493
    %v644 = vpack.c.b16 %v500, %v494
    %v645 = vpack.c.b16 %v501, %v495
    %v646 = vpack.c.b16 %v502, %v496
    %v647 = vpack.c.b16 %v503, %v497
    %v648 = vpack.c.b16 %v510, %v504
    %v649 = vpack.c.b16 %v511, %v505
    %v650 = vpack.c.b16 %v512, %v506
    %v651 = vpack.c.b16 %v513, %v507
    %v652 = vpack.c.b16 %v514, %v508
    %v653 = vpack.c.b16 %v515, %v509
    %v654 = vpack.c.b16 %v522, %v516
    %v655 = vpack.c.b16 %v523, %v517
    %v656 = vpack.c.b16 %v524, %v518
    %v657 = vpack.c.b16 %v525, %v519
    %v658 = vpack.c.b16 %v526, %v520
    %v659 = vpack.c.b16 %v527, %v521
    %v660 = vpack.c.b16 %v534, %v528
    %v661 = vpack.c.b16 %v535, %v529
    %v662 = vpack.c.b16 %v536, %v530
    %v663 = vpack.c.b16 %v537, %v531
    %v664 = vpack.c.b16 %v538, %v532
    %v665 = vpack.c.b16 %v539, %v533
    %v666 = vpack.c.b16 %v546, %v540
    %v667 = vpack.c.b16 %v547, %v541
    %v668 = vpack.c.b16 %v548, %v542
    %v669 = vpack.c.b16 %v549, %v543
    %v670 = vpack.c.b16 %v550, %v544
    %v671 = vpack.c.b16 %v551, %v545
    %v672 = vpack.c.b16 %v558, %v552
    %v673 = vpack.c.b16 %v559, %v553
    %v674 = vpack.c.b16 %v560, %v554
    %v675 = vpack.c.b16 %v561, %v555
    %v676 = vpack.c.b16 %v562, %v556
    %v677 = vpack.c.b16 %v563, %v557
    %v678 = vpack.c.b16 %v570, %v564
    %v679 = vpack.c.b16 %v571, %v565
    %v680 = vpack.c.b16 %v572, %v566
    %v681 = vpack.c.b16 %v573, %v567
    %v682 = vpack.c.b16 %v574, %v568
    %v683 = vpack.c.b16 %v575, %v569
    %v684 = vpack.c.b16 %v582, %v576
    %v685 = vpack.c.b16 %v583, %v577
    %v686 = vpack.c.b16 %v584, %v578
    %v687 = vpack.c.b16 %v585, %v579
    %v688 = vpack.c.b16 %v586, %v580
    %v689 = vpack.c.b16 %v587, %v581
    %v690 = vpack.c.b16 %v594, %v588
    %v691 = vpack.c.b16 %v595, %v589
    %v692 = vpack.c.b16 %v596, %v590
    %v693 = vpack.c.b16 %v597, %v591
    %v694 = vpack.c.b16 %v598, %v592
    %v695 = vpack.c.b16 %v599, %v593
    %792 = vmatpush.bf16.msra.mxu0 %v642
    %793 = vmatpush.bf16.msra.mxu0 %v636
    %794 = vmatpush.bf16.msra.mxu0 %v630
    %795 = vmatpush.bf16.msra.mxu0 %v624
    %796 = vmatpush.bf16.msra.mxu0 %v618
    %797 = vmatpush.bf16.msra.mxu0 %v612
    %798 = vmatpush.bf16.msra.mxu0 %v606
    %799 = vmatpush.bf16.msra.mxu0 %v600
    %800 = vmatmul.bf16.gmra.mxu0 %v304
    %v801 = vpop.f32.mrf.mxu0
    %v802 = vadd.f32 %v280, %v801
    %v803 = vpop.f32.mrf.mxu0
    %v804 = vadd.f32 %v280, %v803
    %805 = vmatmul.bf16.gmra.mxu0 %v306
    %v806 = vpop.f32.mrf.mxu0
    %v807 = vadd.f32 %v280, %v806
    %v808 = vpop.f32.mrf.mxu0
    %v809 = vadd.f32 %v280, %v808
    %810 = vdwg.mxu0
    %811 = vmatpush.bf16.msra.mxu0 %v690
    %812 = vmatpush.bf16.msra.mxu0 %v684
    %813 = vmatpush.bf16.msra.mxu0 %v678
    %814 = vmatpush.bf16.msra.mxu0 %v672
    %815 = vmatpush.bf16.msra.mxu0 %v666
    %816 = vmatpush.bf16.msra.mxu0 %v660
    %817 = vmatpush.bf16.msra.mxu0 %v654
    %818 = vmatpush.bf16.msra.mxu0 %v648
    %819 = vmatmul.bf16.gmra.mxu0 %v305
    %v820 = vpop.f32.mrf.mxu0
    %v821 = vadd.f32 %v802, %v820
    %v822 = vpop.f32.mrf.mxu0
    %v823 = vadd.f32 %v804, %v822
    %824 = vmatmul.bf16.gmra.mxu0 %v307
    %v825 = vpop.f32.mrf.mxu0
    %v826 = vadd.f32 %v807, %v825
    %v827 = vpop.f32.mrf.mxu0
    %v828 = vadd.f32 %v809, %v827
    %829 = vdwg.mxu0
    %830 = vmatpush.bf16.msra.mxu0 %v643
    %831 = vmatpush.bf16.msra.mxu0 %v637
    %832 = vmatpush.bf16.msra.mxu0 %v631
    %833 = vmatpush.bf16.msra.mxu0 %v625
    %834 = vmatpush.bf16.msra.mxu0 %v619
    %835 = vmatpush.bf16.msra.mxu0 %v613
    %836 = vmatpush.bf16.msra.mxu0 %v607
    %837 = vmatpush.bf16.msra.mxu0 %v601
    %838 = vmatmul.bf16.gmra.mxu0 %v304
    %v839 = vpop.f32.mrf.mxu0
    %v840 = vadd.f32 %v281, %v839
    %v841 = vpop.f32.mrf.mxu0
    %v842 = vadd.f32 %v281, %v841
    %843 = vmatmul.bf16.gmra.mxu0 %v306
    %v844 = vpop.f32.mrf.mxu0
    %v845 = vadd.f32 %v281, %v844
    %v846 = vpop.f32.mrf.mxu0
    %v847 = vadd.f32 %v281, %v846
    %848 = vdwg.mxu0
    %849 = vmatpush.bf16.msra.mxu0 %v691
    %850 = vmatpush.bf16.msra.mxu0 %v685
    %851 = vmatpush.bf16.msra.mxu0 %v679
    %852 = vmatpush.bf16.msra.mxu0 %v673
    %853 = vmatpush.bf16.msra.mxu0 %v667
    %854 = vmatpush.bf16.msra.mxu0 %v661
    %855 = vmatpush.bf16.msra.mxu0 %v655
    %856 = vmatpush.bf16.msra.mxu0 %v649
    %857 = vmatmul.bf16.gmra.mxu0 %v305
    %v858 = vpop.f32.mrf.mxu0
    %v859 = vadd.f32 %v840, %v858
    %v860 = vpop.f32.mrf.mxu0
    %v861 = vadd.f32 %v842, %v860
    %862 = vmatmul.bf16.gmra.mxu0 %v307
    %v863 = vpop.f32.mrf.mxu0
    %v864 = vadd.f32 %v845, %v863
    %v865 = vpop.f32.mrf.mxu0
    %v866 = vadd.f32 %v847, %v865
    %867 = vdwg.mxu0
    %868 = vmatpush.bf16.msra.mxu0 %v644
    %869 = vmatpush.bf16.msra.mxu0 %v638
    %870 = vmatpush.bf16.msra.mxu0 %v632
    %871 = vmatpush.bf16.msra.mxu0 %v626
    %872 = vmatpush.bf16.msra.mxu0 %v620
    %873 = vmatpush.bf16.msra.mxu0 %v614
    %874 = vmatpush.bf16.msra.mxu0 %v608
    %875 = vmatpush.bf16.msra.mxu0 %v602
    %876 = vmatmul.bf16.gmra.mxu0 %v304
    %v877 = vpop.f32.mrf.mxu0
    %v878 = vadd.f32 %v282, %v877
    %v879 = vpop.f32.mrf.mxu0
    %v880 = vadd.f32 %v282, %v879
    %881 = vmatmul.bf16.gmra.mxu0 %v306
    %v882 = vpop.f32.mrf.mxu0
    %v883 = vadd.f32 %v282, %v882
    %v884 = vpop.f32.mrf.mxu0
    %v885 = vadd.f32 %v282, %v884
    %886 = vdwg.mxu0
    %887 = vmatpush.bf16.msra.mxu0 %v692
    %888 = vmatpush.bf16.msra.mxu0 %v686
    %889 = vmatpush.bf16.msra.mxu0 %v680
    %890 = vmatpush.bf16.msra.mxu0 %v674
    %891 = vmatpush.bf16.msra.mxu0 %v668
    %892 = vmatpush.bf16.msra.mxu0 %v662
    %893 = vmatpush.bf16.msra.mxu0 %v656
    %894 = vmatpush.bf16.msra.mxu0 %v650
    %895 = vmatmul.bf16.gmra.mxu0 %v305
    %v896 = vpop.f32.mrf.mxu0
    %v897 = vadd.f32 %v878, %v896
    %v898 = vpop.f32.mrf.mxu0
    %v899 = vadd.f32 %v880, %v898
    %900 = vmatmul.bf16.gmra.mxu0 %v307
    %v901 = vpop.f32.mrf.mxu0
    %v902 = vadd.f32 %v883, %v901
    %v903 = vpop.f32.mrf.mxu0
    %v904 = vadd.f32 %v885, %v903
    %905 = vdwg.mxu0
    %906 = vmatpush.bf16.msra.mxu0 %v645
    %907 = vmatpush.bf16.msra.mxu0 %v639
    %908 = vmatpush.bf16.msra.mxu0 %v633
    %909 = vmatpush.bf16.msra.mxu0 %v627
    %910 = vmatpush.bf16.msra.mxu0 %v621
    %911 = vmatpush.bf16.msra.mxu0 %v615
    %912 = vmatpush.bf16.msra.mxu0 %v609
    %913 = vmatpush.bf16.msra.mxu0 %v603
    %914 = vmatmul.bf16.gmra.mxu0 %v304
    %v915 = vpop.f32.mrf.mxu0
    %v916 = vadd.f32 %v283, %v915
    %v917 = vpop.f32.mrf.mxu0
    %v918 = vadd.f32 %v283, %v917
    %919 = vmatmul.bf16.gmra.mxu0 %v306
    %v920 = vpop.f32.mrf.mxu0
    %v921 = vadd.f32 %v283, %v920
    %v922 = vpop.f32.mrf.mxu0
    %v923 = vadd.f32 %v283, %v922
    %924 = vdwg.mxu0
    %925 = vmatpush.bf16.msra.mxu0 %v693
    %926 = vmatpush.bf16.msra.mxu0 %v687
    %927 = vmatpush.bf16.msra.mxu0 %v681
    %928 = vmatpush.bf16.msra.mxu0 %v675
    %929 = vmatpush.bf16.msra.mxu0 %v669
    %930 = vmatpush.bf16.msra.mxu0 %v663
    %931 = vmatpush.bf16.msra.mxu0 %v657
    %932 = vmatpush.bf16.msra.mxu0 %v651
    %933 = vmatmul.bf16.gmra.mxu0 %v305
    %v934 = vpop.f32.mrf.mxu0
    %v935 = vadd.f32 %v916, %v934
    %v936 = vpop.f32.mrf.mxu0
    %v937 = vadd.f32 %v918, %v936
    %938 = vmatmul.bf16.gmra.mxu0 %v307
    %v939 = vpop.f32.mrf.mxu0
    %v940 = vadd.f32 %v921, %v939
    %v941 = vpop.f32.mrf.mxu0
    %v942 = vadd.f32 %v923, %v941
    %943 = vdwg.mxu0
    %944 = vmatpush.bf16.msra.mxu0 %v646
    %945 = vmatpush.bf16.msra.mxu0 %v640
    %946 = vmatpush.bf16.msra.mxu0 %v634
    %947 = vmatpush.bf16.msra.mxu0 %v628
    %948 = vmatpush.bf16.msra.mxu0 %v622
    %949 = vmatpush.bf16.msra.mxu0 %v616
    %950 = vmatpush.bf16.msra.mxu0 %v610
    %951 = vmatpush.bf16.msra.mxu0 %v604
    %952 = vmatmul.bf16.gmra.mxu0 %v304
    %v953 = vpop.f32.mrf.mxu0
    %v954 = vadd.f32 %v284, %v953
    %v955 = vpop.f32.mrf.mxu0
    %v956 = vadd.f32 %v284, %v955
    %957 = vmatmul.bf16.gmra.mxu0 %v306
    %v958 = vpop.f32.mrf.mxu0
    %v959 = vadd.f32 %v284, %v958
    %v960 = vpop.f32.mrf.mxu0
    %v961 = vadd.f32 %v284, %v960
    %962 = vdwg.mxu0
    %963 = vmatpush.bf16.msra.mxu0 %v694
    %964 = vmatpush.bf16.msra.mxu0 %v688
    %965 = vmatpush.bf16.msra.mxu0 %v682
    %966 = vmatpush.bf16.msra.mxu0 %v676
    %967 = vmatpush.bf16.msra.mxu0 %v670
    %968 = vmatpush.bf16.msra.mxu0 %v664
    %969 = vmatpush.bf16.msra.mxu0 %v658
    %970 = vmatpush.bf16.msra.mxu0 %v652
    %971 = vmatmul.bf16.gmra.mxu0 %v305
    %v972 = vpop.f32.mrf.mxu0
    %v973 = vadd.f32 %v954, %v972
    %v974 = vpop.f32.mrf.mxu0
    %v975 = vadd.f32 %v956, %v974
    %976 = vmatmul.bf16.gmra.mxu0 %v307
    %v977 = vpop.f32.mrf.mxu0
    %v978 = vadd.f32 %v959, %v977
    %v979 = vpop.f32.mrf.mxu0
    %v980 = vadd.f32 %v961, %v979
    %981 = vdwg.mxu0
    %982 = vmatpush.bf16.msra.mxu0 %v647
    %983 = vmatpush.bf16.msra.mxu0 %v641
    %984 = vmatpush.bf16.msra.mxu0 %v635
    %985 = vmatpush.bf16.msra.mxu0 %v629
    %986 = vmatpush.bf16.msra.mxu0 %v623
    %987 = vmatpush.bf16.msra.mxu0 %v617
    %988 = vmatpush.bf16.msra.mxu0 %v611
    %989 = vmatpush.bf16.msra.mxu0 %v605
    %990 = vmatmul.bf16.gmra.mxu0 %v304
    %v991 = vpop.f32.mrf.mxu0
    %v992 = vadd.f32 %v285, %v991
    %v993 = vpop.f32.mrf.mxu0
    %v994 = vadd.f32 %v285, %v993
    %995 = vmatmul.bf16.gmra.mxu0 %v306
    %v996 = vpop.f32.mrf.mxu0
    %v997 = vadd.f32 %v285, %v996
    %v998 = vpop.f32.mrf.mxu0
    %v999 = vadd.f32 %v285, %v998
    %1000 = vdwg.mxu0
    %1001 = vmatpush.bf16.msra.mxu0 %v695
    %1002 = vmatpush.bf16.msra.mxu0 %v689
    %1003 = vmatpush.bf16.msra.mxu0 %v683
    %1004 = vmatpush.bf16.msra.mxu0 %v677
    %1005 = vmatpush.bf16.msra.mxu0 %v671
    %1006 = vmatpush.bf16.msra.mxu0 %v665
    %1007 = vmatpush.bf16.msra.mxu0 %v659
    %1008 = vmatpush.bf16.msra.mxu0 %v653
    %1009 = vmatmul.bf16.gmra.mxu0 %v305
    %v1010 = vpop.f32.mrf.mxu0
    %v1011 = vadd.f32 %v992, %v1010
    %v1012 = vpop.f32.mrf.mxu0
    %v1013 = vadd.f32 %v994, %v1012
    %1014 = vmatmul.bf16.gmra.mxu0 %v307
    %v1015 = vpop.f32.mrf.mxu0
    %v1016 = vadd.f32 %v997, %v1015
    %v1017 = vpop.f32.mrf.mxu0
    %v1018 = vadd.f32 %v999, %v1017
    %1019 = vdwg.mxu0
    %v1020 = vpack.c.bf16 %v859, %v821
    %v1021 = vpack.c.bf16 %v935, %v897
    %v1022 = vpack.c.bf16 %v1011, %v973
    %v1023 = vpack.c.bf16 %v861, %v823
    %v1024 = vpack.c.bf16 %v937, %v899
    %v1025 = vpack.c.bf16 %v1013, %v975
    %v1026 = vpack.c.bf16 %v864, %v826
    %v1027 = vpack.c.bf16 %v940, %v902
    %v1028 = vpack.c.bf16 %v1016, %v978
    %v1029 = vpack.c.bf16 %v866, %v828
    %v1030 = vpack.c.bf16 %v942, %v904
    %v1031 = vpack.c.bf16 %v1018, %v980
    %v1034 = vunpack.c.l.b16 %v1020
    %v1035 = vunpack.c.l.b16 %v1023
    %v1036 = vpack.c.b16 %v1035, %v1034
    %v1040 = vunpack.c.l.b16 %v1021
    %v1041 = vunpack.c.l.b16 %v1024
    %v1042 = vpack.c.b16 %v1041, %v1040
    %1044 = vmatpush.bf16.xpose.msra.mxu0 0
    %1045 = vmatpush.bf16.xpose.msra.mxu0 0
    %1046 = vmatpush.bf16.xpose.msra.mxu0 0
    %1047 = vmatpush.bf16.xpose.msra.mxu0 0
    %1048 = vmatpush.bf16.xpose.msra.mxu0 0
    %1049 = vmatpush.bf16.xpose.msra.mxu0 0
    %1050 = vmatpush.bf16.xpose.msra.mxu0 0
    %1051 = vmatpush.bf16.xpose.msra.mxu0 %v1042
    %1052 = vmatmul.bf16.gmra.mxu0 %v1036
    %v1053 = vpop.f32.mrf.mxu0
    %v1054 = vadd.f32 0.0, %v1053
    %v1055 = vpop.f32.mrf.mxu0
    %v1056 = vadd.f32 0.0, %v1055
    %1057 = vdwg.mxu0
    %vm1058 = vcmask 130048
    %v1059 = vsel %vm1058, %v1054, -inf
    %1060 = vmax.xlane.f32.xlu0 %v1059
    %v1061 = vpop.xlane.xlu0 %1060
    %v1062 = vsel %vm1058, %v1056, -inf
    %1063 = vmax.xlane.f32.xlu0 %v1062
    %v1064 = vpop.xlane.xlu0 %1063
    %v1065 = vsub.f32 %v1054, %v1061
    %v1066 = vsub.f32 %v1056, %v1064
    %v1067 = vmul.f32 %v1065, 1.442695
    %v1068 = vpow.pop %v1067
    %v1069 = vmul.f32 %v1066, 1.442695
    %v1070 = vpow.pop %v1069
    %v1071 = vsel %vm1058, %v1068, 0.0
    %1072 = vadd.xlane.f32.xlu0 %v1071
    %v1073 = vpop.xlane.xlu0 %1072
    %v1074 = vsel %vm1058, %v1070, 0.0
    %1075 = vadd.xlane.f32.xlu0 %v1074
    %v1076 = vpop.xlane.xlu0 %1075
    %v1077 = vrcp.pop %v1073
    %v1078 = vrcp.pop %v1076
    %v1079 = vmul.f32 %v1068, %v1077
    %v1080 = vmul.f32 %v1070, %v1078
    %v1081 = vpack.c.bf16 %v1080, %v1079
    %v1084 = vunpack.c.l.b16 %v1022
    %v1085 = vunpack.c.l.b16 %v1025
    %v1086 = vpack.c.b16 %v1085, %v1084
    %v1089 = vsel %vm1058, %v1081, 0
    %1091 = vmatpush.bf16.msra.mxu0 0
    %1092 = vmatpush.bf16.msra.mxu0 0
    %1093 = vmatpush.bf16.msra.mxu0 0
    %1094 = vmatpush.bf16.msra.mxu0 0
    %1095 = vmatpush.bf16.msra.mxu0 0
    %1096 = vmatpush.bf16.msra.mxu0 0
    %1097 = vmatpush.bf16.msra.mxu0 0
    %1098 = vmatpush.bf16.msra.mxu0 %v1086
    %1099 = vmatmul.bf16.gmra.mxu0 %v1089
    %v1100 = vpop.f32.mrf.mxu0
    %v1101 = vadd.f32 0.0, %v1100
    %v1102 = vpop.f32.mrf.mxu0
    %v1103 = vadd.f32 0.0, %v1102
    %1104 = vdwg.mxu0
    %v1105 = vpack.c.bf16 %v1101, %v1101
    %v1106 = vpack.c.bf16 %v1103, %v1103
    %1107 = vst [vmem:[#allocation2] sm:$0xf] %v1105
    %1108 = vst [vmem:[#allocation2 + $0x8] sm:$0xf] %v1106
    %v1109 = vunpack.c.h.b16 %v1020
    %v1110 = vunpack.c.h.b16 %v1023
    %v1111 = vpack.c.b16 %v1110, %v1109
    %v1113 = vunpack.c.h.b16 %v1021
    %v1114 = vunpack.c.h.b16 %v1024
    %v1115 = vpack.c.b16 %v1114, %v1113
    %1117 = vmatpush.bf16.xpose.msra.mxu0 0
    %1118 = vmatpush.bf16.xpose.msra.mxu0 0
    %1119 = vmatpush.bf16.xpose.msra.mxu0 0
    %1120 = vmatpush.bf16.xpose.msra.mxu0 0
    %1121 = vmatpush.bf16.xpose.msra.mxu0 0
    %1122 = vmatpush.bf16.xpose.msra.mxu0 0
    %1123 = vmatpush.bf16.xpose.msra.mxu0 0
    %1124 = vmatpush.bf16.xpose.msra.mxu0 %v1115
    %1125 = vmatmul.bf16.gmra.mxu0 %v1111
    %v1126 = vpop.f32.mrf.mxu0
    %v1127 = vadd.f32 0.0, %v1126
    %v1128 = vpop.f32.mrf.mxu0
    %v1129 = vadd.f32 0.0, %v1128
    %1130 = vdwg.mxu0
    %v1131 = vsel %vm1058, %v1127, -inf
    %1132 = vmax.xlane.f32.xlu0 %v1131
    %v1133 = vpop.xlane.xlu0 %1132
    %v1134 = vsel %vm1058, %v1129, -inf
    %1135 = vmax.xlane.f32.xlu0 %v1134
    %v1136 = vpop.xlane.xlu0 %1135
    %v1137 = vsub.f32 %v1127, %v1133
    %v1138 = vsub.f32 %v1129, %v1136
    %v1139 = vmul.f32 %v1137, 1.442695
    %v1140 = vpow.pop %v1139
    %v1141 = vmul.f32 %v1138, 1.442695
    %v1142 = vpow.pop %v1141
    %v1143 = vsel %vm1058, %v1140, 0.0
    %1144 = vadd.xlane.f32.xlu0 %v1143
    %v1145 = vpop.xlane.xlu0 %1144
    %v1146 = vsel %vm1058, %v1142, 0.0
    %1147 = vadd.xlane.f32.xlu0 %v1146
    %v1148 = vpop.xlane.xlu0 %1147
    %v1149 = vrcp.pop %v1145
    %v1150 = vrcp.pop %v1148
    %v1151 = vmul.f32 %v1140, %v1149
    %v1152 = vmul.f32 %v1142, %v1150
    %v1153 = vpack.c.bf16 %v1152, %v1151
    %v1154 = vunpack.c.h.b16 %v1022
    %v1155 = vunpack.c.h.b16 %v1025
    %v1156 = vpack.c.b16 %v1155, %v1154
    %v1159 = vsel %vm1058, %v1153, 0
    %1161 = vmatpush.bf16.msra.mxu0 0
    %1162 = vmatpush.bf16.msra.mxu0 0
    %1163 = vmatpush.bf16.msra.mxu0 0
    %1164 = vmatpush.bf16.msra.mxu0 0
    %1165 = vmatpush.bf16.msra.mxu0 0
    %1166 = vmatpush.bf16.msra.mxu0 0
    %1167 = vmatpush.bf16.msra.mxu0 0
    %1168 = vmatpush.bf16.msra.mxu0 %v1156
    %1169 = vmatmul.bf16.gmra.mxu0 %v1159
    %v1170 = vpop.f32.mrf.mxu0
    %v1171 = vadd.f32 0.0, %v1170
    %v1172 = vpop.f32.mrf.mxu0
    %v1173 = vadd.f32 0.0, %v1172
    %1174 = vdwg.mxu0
    %v1175 = vpack.c.bf16 %v1171, %v1171
    %v1176 = vpack.c.bf16 %v1173, %v1173
    %1177 = vst [vmem:[#allocation2 + $0x4] sm:$0xf] %v1175
    %1178 = vst [vmem:[#allocation2 + $0xc] sm:$0xf] %v1176
    %v1181 = vunpack.c.l.b16 %v1026
    %v1182 = vunpack.c.l.b16 %v1029
    %v1183 = vpack.c.b16 %v1182, %v1181
    %v1187 = vunpack.c.l.b16 %v1027
    %v1188 = vunpack.c.l.b16 %v1030
    %v1189 = vpack.c.b16 %v1188, %v1187
    %1191 = vmatpush.bf16.xpose.msra.mxu0 0
    %1192 = vmatpush.bf16.xpose.msra.mxu0 0
    %1193 = vmatpush.bf16.xpose.msra.mxu0 0
    %1194 = vmatpush.bf16.xpose.msra.mxu0 0
    %1195 = vmatpush.bf16.xpose.msra.mxu0 0
    %1196 = vmatpush.bf16.xpose.msra.mxu0 0
    %1197 = vmatpush.bf16.xpose.msra.mxu0 0
    %1198 = vmatpush.bf16.xpose.msra.mxu0 %v1189
    %1199 = vmatmul.bf16.gmra.mxu0 %v1183
    %v1200 = vpop.f32.mrf.mxu0
    %v1201 = vadd.f32 0.0, %v1200
    %v1202 = vpop.f32.mrf.mxu0
    %v1203 = vadd.f32 0.0, %v1202
    %1204 = vdwg.mxu0
    %v1205 = vsel %vm1058, %v1201, -inf
    %1206 = vmax.xlane.f32.xlu0 %v1205
    %v1207 = vpop.xlane.xlu0 %1206
    %v1208 = vsel %vm1058, %v1203, -inf
    %1209 = vmax.xlane.f32.xlu0 %v1208
    %v1210 = vpop.xlane.xlu0 %1209
    %v1211 = vsub.f32 %v1201, %v1207
    %v1212 = vsub.f32 %v1203, %v1210
    %v1213 = vmul.f32 %v1211, 1.442695
    %v1214 = vpow.pop %v1213
    %v1215 = vmul.f32 %v1212, 1.442695
    %v1216 = vpow.pop %v1215
    %v1217 = vsel %vm1058, %v1214, 0.0
    %1218 = vadd.xlane.f32.xlu0 %v1217
    %v1219 = vpop.xlane.xlu0 %1218
    %v1220 = vsel %vm1058, %v1216, 0.0
    %1221 = vadd.xlane.f32.xlu0 %v1220
    %v1222 = vpop.xlane.xlu0 %1221
    %v1223 = vrcp.pop %v1219
    %v1224 = vrcp.pop %v1222
    %v1225 = vmul.f32 %v1214, %v1223
    %v1226 = vmul.f32 %v1216, %v1224
    %v1227 = vpack.c.bf16 %v1226, %v1225
    %v1230 = vunpack.c.l.b16 %v1028
    %v1231 = vunpack.c.l.b16 %v1031
    %v1232 = vpack.c.b16 %v1231, %v1230
    %v1235 = vsel %vm1058, %v1227, 0
    %1237 = vmatpush.bf16.msra.mxu0 0
    %1238 = vmatpush.bf16.msra.mxu0 0
    %1239 = vmatpush.bf16.msra.mxu0 0
    %1240 = vmatpush.bf16.msra.mxu0 0
    %1241 = vmatpush.bf16.msra.mxu0 0
    %1242 = vmatpush.bf16.msra.mxu0 0
    %1243 = vmatpush.bf16.msra.mxu0 0
    %1244 = vmatpush.bf16.msra.mxu0 %v1232
    %1245 = vmatmul.bf16.gmra.mxu0 %v1235
    %v1246 = vpop.f32.mrf.mxu0
    %v1247 = vadd.f32 0.0, %v1246
    %v1248 = vpop.f32.mrf.mxu0
    %v1249 = vadd.f32 0.0, %v1248
    %1250 = vdwg.mxu0
    %v1251 = vpack.c.bf16 %v1247, %v1247
    %v1252 = vpack.c.bf16 %v1249, %v1249
    %1253 = vst [vmem:[#allocation2 + $0x10] sm:$0xf] %v1251
    %1254 = vst [vmem:[#allocation2 + $0x18] sm:$0xf] %v1252
    %v1255 = vunpack.c.h.b16 %v1026
    %v1256 = vunpack.c.h.b16 %v1029
    %v1257 = vpack.c.b16 %v1256, %v1255
    %v1259 = vunpack.c.h.b16 %v1027
    %v1260 = vunpack.c.h.b16 %v1030
    %v1261 = vpack.c.b16 %v1260, %v1259
    %1263 = vmatpush.bf16.xpose.msra.mxu0 0
    %1264 = vmatpush.bf16.xpose.msra.mxu0 0
    %1265 = vmatpush.bf16.xpose.msra.mxu0 0
    %1266 = vmatpush.bf16.xpose.msra.mxu0 0
    %1267 = vmatpush.bf16.xpose.msra.mxu0 0
    %1268 = vmatpush.bf16.xpose.msra.mxu0 0
    %1269 = vmatpush.bf16.xpose.msra.mxu0 0
    %1270 = vmatpush.bf16.xpose.msra.mxu0 %v1261
    %1271 = vmatmul.bf16.gmra.mxu0 %v1257
    %v1272 = vpop.f32.mrf.mxu0
    %v1273 = vadd.f32 0.0, %v1272
    %v1274 = vpop.f32.mrf.mxu0
    %v1275 = vadd.f32 0.0, %v1274
    %1276 = vdwg.mxu0
    %v1277 = vsel %vm1058, %v1273, -inf
    %1278 = vmax.xlane.f32.xlu0 %v1277
    %v1279 = vpop.xlane.xlu0 %1278
    %v1280 = vsel %vm1058, %v1275, -inf
    %1281 = vmax.xlane.f32.xlu0 %v1280
    %v1282 = vpop.xlane.xlu0 %1281
    %v1283 = vsub.f32 %v1273, %v1279
    %v1284 = vsub.f32 %v1275, %v1282
    %v1285 = vmul.f32 %v1283, 1.442695
    %v1286 = vpow.pop %v1285
    %v1287 = vmul.f32 %v1284, 1.442695
    %v1288 = vpow.pop %v1287
    %v1289 = vsel %vm1058, %v1286, 0.0
    %1290 = vadd.xlane.f32.xlu0 %v1289
    %v1291 = vpop.xlane.xlu0 %1290
    %v1292 = vsel %vm1058, %v1288, 0.0
    %1293 = vadd.xlane.f32.xlu0 %v1292
    %v1294 = vpop.xlane.xlu0 %1293
    %v1295 = vrcp.pop %v1291
    %v1296 = vrcp.pop %v1294
    %v1297 = vmul.f32 %v1286, %v1295
    %v1298 = vmul.f32 %v1288, %v1296
    %v1299 = vpack.c.bf16 %v1298, %v1297
    %v1300 = vunpack.c.h.b16 %v1028
    %v1301 = vunpack.c.h.b16 %v1031
    %v1302 = vpack.c.b16 %v1301, %v1300
    %v1305 = vsel %vm1058, %v1299, 0
    %1307 = vmatpush.bf16.msra.mxu0 0
    %1308 = vmatpush.bf16.msra.mxu0 0
    %1309 = vmatpush.bf16.msra.mxu0 0
    %1310 = vmatpush.bf16.msra.mxu0 0
    %1311 = vmatpush.bf16.msra.mxu0 0
    %1312 = vmatpush.bf16.msra.mxu0 0
    %1313 = vmatpush.bf16.msra.mxu0 0
    %1314 = vmatpush.bf16.msra.mxu0 %v1302
    %1315 = vmatmul.bf16.gmra.mxu0 %v1305
    %v1316 = vpop.f32.mrf.mxu0
    %v1317 = vadd.f32 0.0, %v1316
    %v1318 = vpop.f32.mrf.mxu0
    %v1319 = vadd.f32 0.0, %v1318
    %1320 = vdwg.mxu0
    %v1321 = vpack.c.bf16 %v1317, %v1317
    %v1322 = vpack.c.bf16 %v1319, %v1319
    %1323 = vst [vmem:[#allocation2 + $0x14] sm:$0xf] %v1321
    %1324 = vst [vmem:[#allocation2 + $0x1c] sm:$0xf] %v1322
    %v1325 = vld [vmem:[#allocation2] sm:$0xff]
    %v1326 = vld [vmem:[#allocation2 + $0x8] sm:$0xff]
    %v1327 = vld [vmem:[#allocation2 + $0x10] sm:$0xff]
    %v1328 = vld [vmem:[#allocation2 + $0x18] sm:$0xff]
    %v1329 = vld [vmem:[#allocation9] sm:$0xff]
    %v1330 = vld [vmem:[#allocation9 + $0x8] sm:$0xff]
    %v1331 = vld [vmem:[#allocation9 + $0x10] sm:$0xff]
    %v1332 = vld [vmem:[#allocation9 + $0x18] sm:$0xff]
    %v1333 = vld [vmem:[#allocation9 + $0x20] sm:$0xff]
    %v1334 = vld [vmem:[#allocation9 + $0x28] sm:$0xff]
    %v1335 = vld [vmem:[#allocation9 + $0x30] sm:$0xff]
    %v1336 = vld [vmem:[#allocation9 + $0x38] sm:$0xff]
    %v1337 = vld [vmem:[#allocation9 + $0x40] sm:$0xff]
    %v1338 = vld [vmem:[#allocation9 + $0x48] sm:$0xff]
    %v1339 = vld [vmem:[#allocation9 + $0x50] sm:$0xff]
    %v1340 = vld [vmem:[#allocation9 + $0x58] sm:$0xff]
    %v1341 = vld [vmem:[#allocation9 + $0x60] sm:$0xff]
    %v1342 = vld [vmem:[#allocation9 + $0x68] sm:$0xff]
    %v1343 = vld [vmem:[#allocation9 + $0x70] sm:$0xff]
    %v1344 = vld [vmem:[#allocation9 + $0x78] sm:$0xff]
    %v1345 = vld [vmem:[#allocation9 + $0x80] sm:$0xff]
    %v1346 = vld [vmem:[#allocation9 + $0x88] sm:$0xff]
    %v1347 = vld [vmem:[#allocation9 + $0x90] sm:$0xff]
    %v1348 = vld [vmem:[#allocation9 + $0x98] sm:$0xff]
    %v1349 = vld [vmem:[#allocation9 + $0xa0] sm:$0xff]
    %v1350 = vld [vmem:[#allocation9 + $0xa8] sm:$0xff]
    %v1351 = vld [vmem:[#allocation9 + $0xb0] sm:$0xff]
    %v1352 = vld [vmem:[#allocation9 + $0xb8] sm:$0xff]
    %v1353 = vld [vmem:[#allocation9 + $0xc0] sm:$0xff]
    %v1354 = vld [vmem:[#allocation9 + $0xc8] sm:$0xff]
    %v1355 = vld [vmem:[#allocation9 + $0xd0] sm:$0xff]
    %v1356 = vld [vmem:[#allocation9 + $0xd8] sm:$0xff]
    %v1357 = vld [vmem:[#allocation9 + $0xe0] sm:$0xff]
    %v1358 = vld [vmem:[#allocation9 + $0xe8] sm:$0xff]
    %v1359 = vld [vmem:[#allocation9 + $0xf0] sm:$0xff]
    %v1360 = vld [vmem:[#allocation9 + $0xf8] sm:$0xff]
    %v1361 = vld [vmem:[%s4] sm:$0x3]
    %v1363 = vperm.slane %v1361, 0
    %v1364 = vperm.slane %v1361, 1
    %v1371 = vunpack.c.l.b16 %v1325
    %v1372 = vunpack.c.h.b16 %v1325
    %v1373 = vunpack.c.l.b16 %v1326
    %v1374 = vunpack.c.h.b16 %v1326
    %v1375 = vunpack.c.l.b16 %v1327
    %v1376 = vunpack.c.h.b16 %v1327
    %v1377 = vunpack.c.l.b16 %v1328
    %v1378 = vunpack.c.h.b16 %v1328
    %v1379 = vpack.c.b16 %v1373, %v1371
    %v1380 = vpack.c.b16 %v1374, %v1372
    %v1381 = vpack.c.b16 %v1377, %v1375
    %v1382 = vpack.c.b16 %v1378, %v1376
    %v1419 = vunpack.c.l.b16 %v1329
    %v1420 = vunpack.c.h.b16 %v1329
    %v1421 = vunpack.c.l.b16 %v1330
    %v1422 = vunpack.c.h.b16 %v1330
    %v1423 = vunpack.c.l.b16 %v1331
    %v1424 = vunpack.c.h.b16 %v1331
    %v1425 = vunpack.c.l.b16 %v1332
    %v1426 = vunpack.c.h.b16 %v1332
    %v1427 = vunpack.c.l.b16 %v1333
    %v1428 = vunpack.c.h.b16 %v1333
    %v1429 = vunpack.c.l.b16 %v1334
    %v1430 = vunpack.c.h.b16 %v1334
    %v1431 = vunpack.c.l.b16 %v1335
    %v1432 = vunpack.c.h.b16 %v1335
    %v1433 = vunpack.c.l.b16 %v1336
    %v1434 = vunpack.c.h.b16 %v1336
    %v1435 = vunpack.c.l.b16 %v1337
    %v1436 = vunpack.c.h.b16 %v1337
    %v1437 = vunpack.c.l.b16 %v1338
    %v1438 = vunpack.c.h.b16 %v1338
    %v1439 = vunpack.c.l.b16 %v1339
    %v1440 = vunpack.c.h.b16 %v1339
    %v1441 = vunpack.c.l.b16 %v1340
    %v1442 = vunpack.c.h.b16 %v1340
    %v1443 = vunpack.c.l.b16 %v1341
    %v1444 = vunpack.c.h.b16 %v1341
    %v1445 = vunpack.c.l.b16 %v1342
    %v1446 = vunpack.c.h.b16 %v1342
    %v1447 = vunpack.c.l.b16 %v1343
    %v1448 = vunpack.c.h.b16 %v1343
    %v1449 = vunpack.c.l.b16 %v1344
    %v1450 = vunpack.c.h.b16 %v1344
    %v1451 = vunpack.c.l.b16 %v1345
    %v1452 = vunpack.c.h.b16 %v1345
    %v1453 = vunpack.c.l.b16 %v1346
    %v1454 = vunpack.c.h.b16 %v1346
    %v1455 = vunpack.c.l.b16 %v1347
    %v1456 = vunpack.c.h.b16 %v1347
    %v1457 = vunpack.c.l.b16 %v1348
    %v1458 = vunpack.c.h.b16 %v1348
    %v1459 = vunpack.c.l.b16 %v1349
    %v1460 = vunpack.c.h.b16 %v1349
    %v1461 = vunpack.c.l.b16 %v1350
    %v1462 = vunpack.c.h.b16 %v1350
    %v1463 = vunpack.c.l.b16 %v1351
    %v1464 = vunpack.c.h.b16 %v1351
    %v1465 = vunpack.c.l.b16 %v1352
    %v1466 = vunpack.c.h.b16 %v1352
    %v1467 = vunpack.c.l.b16 %v1353
    %v1468 = vunpack.c.h.b16 %v1353
    %v1469 = vunpack.c.l.b16 %v1354
    %v1470 = vunpack.c.h.b16 %v1354
    %v1471 = vunpack.c.l.b16 %v1355
    %v1472 = vunpack.c.h.b16 %v1355
    %v1473 = vunpack.c.l.b16 %v1356
    %v1474 = vunpack.c.h.b16 %v1356
    %v1475 = vunpack.c.l.b16 %v1357
    %v1476 = vunpack.c.h.b16 %v1357
    %v1477 = vunpack.c.l.b16 %v1358
    %v1478 = vunpack.c.h.b16 %v1358
    %v1479 = vunpack.c.l.b16 %v1359
    %v1480 = vunpack.c.h.b16 %v1359
    %v1481 = vunpack.c.l.b16 %v1360
    %v1482 = vunpack.c.h.b16 %v1360
    %v1483 = vpack.c.b16 %v1421, %v1419
    %v1484 = vpack.c.b16 %v1422, %v1420
    %v1485 = vpack.c.b16 %v1425, %v1423
    %v1486 = vpack.c.b16 %v1426, %v1424
    %v1487 = vpack.c.b16 %v1429, %v1427
    %v1488 = vpack.c.b16 %v1430, %v1428
    %v1489 = vpack.c.b16 %v1433, %v1431
    %v1490 = vpack.c.b16 %v1434, %v1432
    %v1491 = vpack.c.b16 %v1437, %v1435
    %v1492 = vpack.c.b16 %v1438, %v1436
    %v1493 = vpack.c.b16 %v1441, %v1439
    %v1494 = vpack.c.b16 %v1442, %v1440
    %v1495 = vpack.c.b16 %v1445, %v1443
    %v1496 = vpack.c.b16 %v1446, %v1444
    %v1497 = vpack.c.b16 %v1449, %v1447
    %v1498 = vpack.c.b16 %v1450, %v1448
    %v1499 = vpack.c.b16 %v1453, %v1451
    %v1500 = vpack.c.b16 %v1454, %v1452
    %v1501 = vpack.c.b16 %v1457, %v1455
    %v1502 = vpack.c.b16 %v1458, %v1456
    %v1503 = vpack.c.b16 %v1461, %v1459
    %v1504 = vpack.c.b16 %v1462, %v1460
    %v1505 = vpack.c.b16 %v1465, %v1463
    %v1506 = vpack.c.b16 %v1466, %v1464
    %v1507 = vpack.c.b16 %v1469, %v1467
    %v1508 = vpack.c.b16 %v1470, %v1468
    %v1509 = vpack.c.b16 %v1473, %v1471
    %v1510 = vpack.c.b16 %v1474, %v1472
    %v1511 = vpack.c.b16 %v1477, %v1475
    %v1512 = vpack.c.b16 %v1478, %v1476
    %v1513 = vpack.c.b16 %v1481, %v1479
    %v1514 = vpack.c.b16 %v1482, %v1480
    %1547 = vmatpush.bf16.msra.mxu0 %v1497
    %1548 = vmatpush.bf16.msra.mxu0 %v1495
    %1549 = vmatpush.bf16.msra.mxu0 %v1493
    %1550 = vmatpush.bf16.msra.mxu0 %v1491
    %1551 = vmatpush.bf16.msra.mxu0 %v1489
    %1552 = vmatpush.bf16.msra.mxu0 %v1487
    %1553 = vmatpush.bf16.msra.mxu0 %v1485
    %1554 = vmatpush.bf16.msra.mxu0 %v1483
    %1555 = vmatmul.bf16.gmra.mxu0 %v1379
    %v1556 = vpop.f32.mrf.mxu0
    %v1557 = vadd.f32 %v1363, %v1556
    %v1558 = vpop.f32.mrf.mxu0
    %v1559 = vadd.f32 %v1363, %v1558
    %1560 = vmatmul.bf16.gmra.mxu0 %v1381
    %v1561 = vpop.f32.mrf.mxu0
    %v1562 = vadd.f32 %v1363, %v1561
    %v1563 = vpop.f32.mrf.mxu0
    %v1564 = vadd.f32 %v1363, %v1563
    %1565 = vdwg.mxu0
    %1566 = vmatpush.bf16.msra.mxu0 %v1513
    %1567 = vmatpush.bf16.msra.mxu0 %v1511
    %1568 = vmatpush.bf16.msra.mxu0 %v1509
    %1569 = vmatpush.bf16.msra.mxu0 %v1507
    %1570 = vmatpush.bf16.msra.mxu0 %v1505
    %1571 = vmatpush.bf16.msra.mxu0 %v1503
    %1572 = vmatpush.bf16.msra.mxu0 %v1501
    %1573 = vmatpush.bf16.msra.mxu0 %v1499
    %1574 = vmatmul.bf16.gmra.mxu0 %v1380
    %v1575 = vpop.f32.mrf.mxu0
    %v1576 = vadd.f32 %v1557, %v1575
    %v1577 = vpop.f32.mrf.mxu0
    %v1578 = vadd.f32 %v1559, %v1577
    %1579 = vmatmul.bf16.gmra.mxu0 %v1382
    %v1580 = vpop.f32.mrf.mxu0
    %v1581 = vadd.f32 %v1562, %v1580
    %v1582 = vpop.f32.mrf.mxu0
    %v1583 = vadd.f32 %v1564, %v1582
    %1584 = vdwg.mxu0
    %1585 = vmatpush.bf16.msra.mxu0 %v1498
    %1586 = vmatpush.bf16.msra.mxu0 %v1496
    %1587 = vmatpush.bf16.msra.mxu0 %v1494
    %1588 = vmatpush.bf16.msra.mxu0 %v1492
    %1589 = vmatpush.bf16.msra.mxu0 %v1490
    %1590 = vmatpush.bf16.msra.mxu0 %v1488
    %1591 = vmatpush.bf16.msra.mxu0 %v1486
    %1592 = vmatpush.bf16.msra.mxu0 %v1484
    %1593 = vmatmul.bf16.gmra.mxu0 %v1379
    %v1594 = vpop.f32.mrf.mxu0
    %v1595 = vadd.f32 %v1364, %v1594
    %v1596 = vpop.f32.mrf.mxu0
    %v1597 = vadd.f32 %v1364, %v1596
    %1598 = vmatmul.bf16.gmra.mxu0 %v1381
    %v1599 = vpop.f32.mrf.mxu0
    %v1600 = vadd.f32 %v1364, %v1599
    %v1601 = vpop.f32.mrf.mxu0
    %v1602 = vadd.f32 %v1364, %v1601
    %1603 = vdwg.mxu0
    %1604 = vmatpush.bf16.msra.mxu0 %v1514
    %1605 = vmatpush.bf16.msra.mxu0 %v1512
    %1606 = vmatpush.bf16.msra.mxu0 %v1510
    %1607 = vmatpush.bf16.msra.mxu0 %v1508
    %1608 = vmatpush.bf16.msra.mxu0 %v1506
    %1609 = vmatpush.bf16.msra.mxu0 %v1504
    %1610 = vmatpush.bf16.msra.mxu0 %v1502
    %1611 = vmatpush.bf16.msra.mxu0 %v1500
    %1612 = vmatmul.bf16.gmra.mxu0 %v1380
    %v1613 = vpop.f32.mrf.mxu0
    %v1614 = vadd.f32 %v1595, %v1613
    %v1615 = vpop.f32.mrf.mxu0
    %v1616 = vadd.f32 %v1597, %v1615
    %1617 = vmatmul.bf16.gmra.mxu0 %v1382
    %v1618 = vpop.f32.mrf.mxu0
    %v1619 = vadd.f32 %v1600, %v1618
    %v1620 = vpop.f32.mrf.mxu0
    %v1621 = vadd.f32 %v1602, %v1620
    %1622 = vdwg.mxu0
    %v1623 = vunpack.c.l.bf16 %v178
    %v1624 = vunpack.c.h.bf16 %v178
    %v1625 = vunpack.c.l.bf16 %v179
    %v1626 = vunpack.c.h.bf16 %v179
    %v1627 = vunpack.c.l.bf16 %v180
    %v1628 = vunpack.c.h.bf16 %v180
    %v1629 = vunpack.c.l.bf16 %v181
    %v1630 = vunpack.c.h.bf16 %v181
    %v1631 = vadd.f32 %v1623, %v1576
    %v1632 = vadd.f32 %v1624, %v1614
    %v1633 = vadd.f32 %v1625, %v1578
    %v1634 = vadd.f32 %v1626, %v1616
    %v1635 = vadd.f32 %v1627, %v1581
    %v1636 = vadd.f32 %v1628, %v1619
    %v1637 = vadd.f32 %v1629, %v1583
    %v1638 = vadd.f32 %v1630, %v1621
    %v1639 = vld [vmem:[#allocation11] sm:$0x3]
    %v1640 = vld [vmem:[#allocation12] sm:$0x3]
    %v1641 = vadd.f32 %v1631, %v1632
    %1642 = vadd.xlane.f32.xlu0 %v1641
    %v1643 = vpop.xlane.xlu0 %1642
    %v1644 = vadd.f32 %v1633, %v1634
    %1645 = vadd.xlane.f32.xlu0 %v1644
    %v1646 = vpop.xlane.xlu0 %1645
    %v1647 = vadd.f32 %v1635, %v1636
    %1648 = vadd.xlane.f32.xlu0 %v1647
    %v1649 = vpop.xlane.xlu0 %1648
    %v1650 = vadd.f32 %v1637, %v1638
    %1651 = vadd.xlane.f32.xlu0 %v1650
    %v1652 = vpop.xlane.xlu0 %1651
    %v1653 = vrcp.pop 256.0
    %v1654 = vmul.f32 256.0, %v1653
    %v1655 = vsub.f32 1.0, %v1654
    %v1656 = vmul.f32 %v1653, %v1655
    %v1657 = vadd.f32 %v1653, %v1656
    %vm1658 = vweird.f32 %v1653
    %v1659 = vsel %vm1658, %v1653, %v1657
    %v1660 = vmul.f32 %v1643, %v1659
    %v1661 = vmul.f32 %v1646, %v1659
    %v1662 = vmul.f32 %v1649, %v1659
    %v1663 = vmul.f32 %v1652, %v1659
    %v1664 = vsub.f32 %v1631, %v1660
    %v1665 = vsub.f32 %v1632, %v1660
    %v1666 = vsub.f32 %v1633, %v1661
    %v1667 = vsub.f32 %v1634, %v1661
    %v1668 = vsub.f32 %v1635, %v1662
    %v1669 = vsub.f32 %v1636, %v1662
    %v1670 = vsub.f32 %v1637, %v1663
    %v1671 = vsub.f32 %v1638, %v1663
    %v1672 = vmul.f32 %v1664, %v1664
    %v1673 = vmul.f32 %v1665, %v1665
    %v1674 = vmul.f32 %v1666, %v1666
    %v1675 = vmul.f32 %v1667, %v1667
    %v1676 = vmul.f32 %v1668, %v1668
    %v1677 = vmul.f32 %v1669, %v1669
    %v1678 = vmul.f32 %v1670, %v1670
    %v1679 = vmul.f32 %v1671, %v1671
    %v1680 = vadd.f32 %v1672, %v1673
    %1681 = vadd.xlane.f32.xlu0 %v1680
    %v1682 = vpop.xlane.xlu0 %1681
    %v1683 = vadd.f32 %v1674, %v1675
    %1684 = vadd.xlane.f32.xlu0 %v1683
    %v1685 = vpop.xlane.xlu0 %1684
    %v1686 = vadd.f32 %v1676, %v1677
    %1687 = vadd.xlane.f32.xlu0 %v1686
    %v1688 = vpop.xlane.xlu0 %1687
    %v1689 = vadd.f32 %v1678, %v1679
    %1690 = vadd.xlane.f32.xlu0 %v1689
    %v1691 = vpop.xlane.xlu0 %1690
    %v1692 = vmul.f32 %v1682, %v1659
    %v1693 = vmul.f32 %v1685, %v1659
    %v1694 = vmul.f32 %v1688, %v1659
    %v1695 = vmul.f32 %v1691, %v1659
    %v1696 = vadd.f32 %v1692, 1e-05
    %v1697 = vadd.f32 %v1693, 1e-05
    %v1698 = vadd.f32 %v1694, 1e-05
    %v1699 = vadd.f32 %v1695, 1e-05
    %v1700 = vrsqrt.pop %v1696
    %v1701 = vmul.f32 %v1700, %v1696
    %v1702 = vmul.f32 %v1701, %v1700
    %v1703 = vmul.f32 0.5, %v1702
    %v1704 = vsub.f32 1.5, %v1703
    %v1705 = vmul.f32 %v1700, %v1704
    %vm1706 = vweird.f32 %v1696
    %vm1707 = vweird.f32 %v1700
    %vm1708 = vmor %vm1706, %vm1707
    %v1709 = vsel %vm1708, %v1700, %v1705
    %v1710 = vrsqrt.pop %v1697
    %v1711 = vmul.f32 %v1710, %v1697
    %v1712 = vmul.f32 %v1711, %v1710
    %v1713 = vmul.f32 0.5, %v1712
    %v1714 = vsub.f32 1.5, %v1713
    %v1715 = vmul.f32 %v1710, %v1714
    %vm1716 = vweird.f32 %v1697
    %vm1717 = vweird.f32 %v1710
    %vm1718 = vmor %vm1716, %vm1717
    %v1719 = vsel %vm1718, %v1710, %v1715
    %v1720 = vrsqrt.pop %v1698
    %v1721 = vmul.f32 %v1720, %v1698
    %v1722 = vmul.f32 %v1721, %v1720
    %v1723 = vmul.f32 0.5, %v1722
    %v1724 = vsub.f32 1.5, %v1723
    %v1725 = vmul.f32 %v1720, %v1724
    %vm1726 = vweird.f32 %v1698
    %vm1727 = vweird.f32 %v1720
    %vm1728 = vmor %vm1726, %vm1727
    %v1729 = vsel %vm1728, %v1720, %v1725
    %v1730 = vrsqrt.pop %v1699
    %v1731 = vmul.f32 %v1730, %v1699
    %v1732 = vmul.f32 %v1731, %v1730
    %v1733 = vmul.f32 0.5, %v1732
    %v1734 = vsub.f32 1.5, %v1733
    %v1735 = vmul.f32 %v1730, %v1734
    %vm1736 = vweird.f32 %v1699
    %vm1737 = vweird.f32 %v1730
    %vm1738 = vmor %vm1736, %vm1737
    %v1739 = vsel %vm1738, %v1730, %v1735
    %v1740 = vmul.f32 %v1664, %v1709
    %v1741 = vmul.f32 %v1665, %v1709
    %v1742 = vmul.f32 %v1666, %v1719
    %v1743 = vmul.f32 %v1667, %v1719
    %v1744 = vmul.f32 %v1668, %v1729
    %v1745 = vmul.f32 %v1669, %v1729
    %v1746 = vmul.f32 %v1670, %v1739
    %v1747 = vmul.f32 %v1671, %v1739
    %v1749 = vperm.slane %v1639, 0
    %v1750 = vperm.slane %v1639, 1
    %v1753 = vmul.f32 %v1740, %v1749
    %v1754 = vmul.f32 %v1741, %v1750
    %v1755 = vmul.f32 %v1742, %v1749
    %v1756 = vmul.f32 %v1743, %v1750
    %v1757 = vmul.f32 %v1744, %v1749
    %v1758 = vmul.f32 %v1745, %v1750
    %v1759 = vmul.f32 %v1746, %v1749
    %v1760 = vmul.f32 %v1747, %v1750
    %v1762 = vperm.slane %v1640, 0
    %v1763 = vperm.slane %v1640, 1
    %v1766 = vadd.f32 %v1753, %v1762
    %v1767 = vadd.f32 %v1754, %v1763
    %v1768 = vadd.f32 %v1755, %v1762
    %v1769 = vadd.f32 %v1756, %v1763
    %v1770 = vadd.f32 %v1757, %v1762
    %v1771 = vadd.f32 %v1758, %v1763
    %v1772 = vadd.f32 %v1759, %v1762
    %v1773 = vadd.f32 %v1760, %v1763
    %v1774 = vpack.c.bf16 %v1768, %v1766
    %v1775 = vpack.c.bf16 %v1769, %v1767
    %v1776 = vpack.c.bf16 %v1772, %v1770
    %v1777 = vpack.c.bf16 %v1773, %v1771
    %v1778 = vld [vmem:[#allocation14] sm:$0xff]
    %v1779 = vld [vmem:[#allocation14 + $0x8] sm:$0xff]
    %v1780 = vld [vmem:[#allocation14 + $0x10] sm:$0xff]
    %v1781 = vld [vmem:[#allocation14 + $0x18] sm:$0xff]
    %v1782 = vld [vmem:[#allocation14 + $0x20] sm:$0xff]
    %v1783 = vld [vmem:[#allocation14 + $0x28] sm:$0xff]
    %v1784 = vld [vmem:[#allocation14 + $0x30] sm:$0xff]
    %v1785 = vld [vmem:[#allocation14 + $0x38] sm:$0xff]
    %v1786 = vld [vmem:[#allocation14 + $0x40] sm:$0xff]
    %v1787 = vld [vmem:[#allocation14 + $0x48] sm:$0xff]
    %v1788 = vld [vmem:[#allocation14 + $0x50] sm:$0xff]
    %v1789 = vld [vmem:[#allocation14 + $0x58] sm:$0xff]
    %v1790 = vld [vmem:[#allocation14 + $0x60] sm:$0xff]
    %v1791 = vld [vmem:[#allocation14 + $0x68] sm:$0xff]
    %v1792 = vld [vmem:[#allocation14 + $0x70] sm:$0xff]
    %v1793 = vld [vmem:[#allocation14 + $0x78] sm:$0xff]
    %v1794 = vld [vmem:[#allocation14 + $0x80] sm:$0xff]
    %v1795 = vld [vmem:[#allocation14 + $0x88] sm:$0xff]
    %v1796 = vld [vmem:[#allocation14 + $0x90] sm:$0xff]
    %v1797 = vld [vmem:[#allocation14 + $0x98] sm:$0xff]
    %v1798 = vld [vmem:[#allocation14 + $0xa0] sm:$0xff]
    %v1799 = vld [vmem:[#allocation14 + $0xa8] sm:$0xff]
    %v1800 = vld [vmem:[#allocation14 + $0xb0] sm:$0xff]
    %v1801 = vld [vmem:[#allocation14 + $0xb8] sm:$0xff]
    %v1802 = vld [vmem:[#allocation14 + $0xc0] sm:$0xff]
    %v1803 = vld [vmem:[#allocation14 + $0xc8] sm:$0xff]
    %v1804 = vld [vmem:[#allocation14 + $0xd0] sm:$0xff]
    %v1805 = vld [vmem:[#allocation14 + $0xd8] sm:$0xff]
    %v1806 = vld [vmem:[#allocation14 + $0xe0] sm:$0xff]
    %v1807 = vld [vmem:[#allocation14 + $0xe8] sm:$0xff]
    %v1808 = vld [vmem:[#allocation14 + $0xf0] sm:$0xff]
    %v1809 = vld [vmem:[#allocation14 + $0xf8] sm:$0xff]
    %v1810 = vld [vmem:[#allocation14 + $0x100] sm:$0xff]
    %v1811 = vld [vmem:[#allocation14 + $0x108] sm:$0xff]
    %v1812 = vld [vmem:[#allocation14 + $0x110] sm:$0xff]
    %v1813 = vld [vmem:[#allocation14 + $0x118] sm:$0xff]
    %v1814 = vld [vmem:[#allocation14 + $0x120] sm:$0xff]
    %v1815 = vld [vmem:[#allocation14 + $0x128] sm:$0xff]
    %v1816 = vld [vmem:[#allocation14 + $0x130] sm:$0xff]
    %v1817 = vld [vmem:[#allocation14 + $0x138] sm:$0xff]
    %v1818 = vld [vmem:[#allocation14 + $0x140] sm:$0xff]
    %v1819 = vld [vmem:[#allocation14 + $0x148] sm:$0xff]
    %v1820 = vld [vmem:[#allocation14 + $0x150] sm:$0xff]
    %v1821 = vld [vmem:[#allocation14 + $0x158] sm:$0xff]
    %v1822 = vld [vmem:[#allocation14 + $0x160] sm:$0xff]
    %v1823 = vld [vmem:[#allocation14 + $0x168] sm:$0xff]
    %v1824 = vld [vmem:[#allocation14 + $0x170] sm:$0xff]
    %v1825 = vld [vmem:[#allocation14 + $0x178] sm:$0xff]
    %v1826 = vld [vmem:[#allocation14 + $0x180] sm:$0xff]
    %v1827 = vld [vmem:[#allocation14 + $0x188] sm:$0xff]
    %v1828 = vld [vmem:[#allocation14 + $0x190] sm:$0xff]
    %v1829 = vld [vmem:[#allocation14 + $0x198] sm:$0xff]
    %v1830 = vld [vmem:[#allocation14 + $0x1a0] sm:$0xff]
    %v1831 = vld [vmem:[#allocation14 + $0x1a8] sm:$0xff]
    %v1832 = vld [vmem:[#allocation14 + $0x1b0] sm:$0xff]
    %v1833 = vld [vmem:[#allocation14 + $0x1b8] sm:$0xff]
    %v1834 = vld [vmem:[#allocation14 + $0x1c0] sm:$0xff]
    %v1835 = vld [vmem:[#allocation14 + $0x1c8] sm:$0xff]
    %v1836 = vld [vmem:[#allocation14 + $0x1d0] sm:$0xff]
    %v1837 = vld [vmem:[#allocation14 + $0x1d8] sm:$0xff]
    %v1838 = vld [vmem:[#allocation14 + $0x1e0] sm:$0xff]
    %v1839 = vld [vmem:[#allocation14 + $0x1e8] sm:$0xff]
    %v1840 = vld [vmem:[#allocation14 + $0x1f0] sm:$0xff]
    %v1841 = vld [vmem:[#allocation14 + $0x1f8] sm:$0xff]
    %v1842 = vld [vmem:[%s8] sm:$0xf]
    %v1844 = vperm.slane %v1842, 0
    %v1845 = vperm.slane %v1842, 1
    %v1846 = vperm.slane %v1842, 2
    %v1847 = vperm.slane %v1842, 3
    %v1916 = vunpack.c.l.b16 %v1778
    %v1917 = vunpack.c.h.b16 %v1778
    %v1918 = vunpack.c.l.b16 %v1779
    %v1919 = vunpack.c.h.b16 %v1779
    %v1920 = vunpack.c.l.b16 %v1780
    %v1921 = vunpack.c.h.b16 %v1780
    %v1922 = vunpack.c.l.b16 %v1781
    %v1923 = vunpack.c.h.b16 %v1781
    %v1924 = vunpack.c.l.b16 %v1782
    %v1925 = vunpack.c.h.b16 %v1782
    %v1926 = vunpack.c.l.b16 %v1783
    %v1927 = vunpack.c.h.b16 %v1783
    %v1928 = vunpack.c.l.b16 %v1784
    %v1929 = vunpack.c.h.b16 %v1784
    %v1930 = vunpack.c.l.b16 %v1785
    %v1931 = vunpack.c.h.b16 %v1785
    %v1932 = vunpack.c.l.b16 %v1786
    %v1933 = vunpack.c.h.b16 %v1786
    %v1934 = vunpack.c.l.b16 %v1787
    %v1935 = vunpack.c.h.b16 %v1787
    %v1936 = vunpack.c.l.b16 %v1788
    %v1937 = vunpack.c.h.b16 %v1788
    %v1938 = vunpack.c.l.b16 %v1789
    %v1939 = vunpack.c.h.b16 %v1789
    %v1940 = vunpack.c.l.b16 %v1790
    %v1941 = vunpack.c.h.b16 %v1790
    %v1942 = vunpack.c.l.b16 %v1791
    %v1943 = vunpack.c.h.b16 %v1791
    %v1944 = vunpack.c.l.b16 %v1792
    %v1945 = vunpack.c.h.b16 %v1792
    %v1946 = vunpack.c.l.b16 %v1793
    %v1947 = vunpack.c.h.b16 %v1793
    %v1948 = vunpack.c.l.b16 %v1794
    %v1949 = vunpack.c.h.b16 %v1794
    %v1950 = vunpack.c.l.b16 %v1795
    %v1951 = vunpack.c.h.b16 %v1795
    %v1952 = vunpack.c.l.b16 %v1796
    %v1953 = vunpack.c.h.b16 %v1796
    %v1954 = vunpack.c.l.b16 %v1797
    %v1955 = vunpack.c.h.b16 %v1797
    %v1956 = vunpack.c.l.b16 %v1798
    %v1957 = vunpack.c.h.b16 %v1798
    %v1958 = vunpack.c.l.b16 %v1799
    %v1959 = vunpack.c.h.b16 %v1799
    %v1960 = vunpack.c.l.b16 %v1800
    %v1961 = vunpack.c.h.b16 %v1800
    %v1962 = vunpack.c.l.b16 %v1801
    %v1963 = vunpack.c.h.b16 %v1801
    %v1964 = vunpack.c.l.b16 %v1802
    %v1965 = vunpack.c.h.b16 %v1802
    %v1966 = vunpack.c.l.b16 %v1803
    %v1967 = vunpack.c.h.b16 %v1803
    %v1968 = vunpack.c.l.b16 %v1804
    %v1969 = vunpack.c.h.b16 %v1804
    %v1970 = vunpack.c.l.b16 %v1805
    %v1971 = vunpack.c.h.b16 %v1805
    %v1972 = vunpack.c.l.b16 %v1806
    %v1973 = vunpack.c.h.b16 %v1806
    %v1974 = vunpack.c.l.b16 %v1807
    %v1975 = vunpack.c.h.b16 %v1807
    %v1976 = vunpack.c.l.b16 %v1808
    %v1977 = vunpack.c.h.b16 %v1808
    %v1978 = vunpack.c.l.b16 %v1809
    %v1979 = vunpack.c.h.b16 %v1809
    %v1980 = vunpack.c.l.b16 %v1810
    %v1981 = vunpack.c.h.b16 %v1810
    %v1982 = vunpack.c.l.b16 %v1811
    %v1983 = vunpack.c.h.b16 %v1811
    %v1984 = vunpack.c.l.b16 %v1812
    %v1985 = vunpack.c.h.b16 %v1812
    %v1986 = vunpack.c.l.b16 %v1813
    %v1987 = vunpack.c.h.b16 %v1813
    %v1988 = vunpack.c.l.b16 %v1814
    %v1989 = vunpack.c.h.b16 %v1814
    %v1990 = vunpack.c.l.b16 %v1815
    %v1991 = vunpack.c.h.b16 %v1815
    %v1992 = vunpack.c.l.b16 %v1816
    %v1993 = vunpack.c.h.b16 %v1816
    %v1994 = vunpack.c.l.b16 %v1817
    %v1995 = vunpack.c.h.b16 %v1817
    %v1996 = vunpack.c.l.b16 %v1818
    %v1997 = vunpack.c.h.b16 %v1818
    %v1998 = vunpack.c.l.b16 %v1819
    %v1999 = vunpack.c.h.b16 %v1819
    %v2000 = vunpack.c.l.b16 %v1820
    %v2001 = vunpack.c.h.b16 %v1820
    %v2002 = vunpack.c.l.b16 %v1821
    %v2003 = vunpack.c.h.b16 %v1821
    %v2004 = vunpack.c.l.b16 %v1822
    %v2005 = vunpack.c.h.b16 %v1822
    %v2006 = vunpack.c.l.b16 %v1823
    %v2007 = vunpack.c.h.b16 %v1823
    %v2008 = vunpack.c.l.b16 %v1824
    %v2009 = vunpack.c.h.b16 %v1824
    %v2010 = vunpack.c.l.b16 %v1825
    %v2011 = vunpack.c.h.b16 %v1825
    %v2012 = vunpack.c.l.b16 %v1826
    %v2013 = vunpack.c.h.b16 %v1826
    %v2014 = vunpack.c.l.b16 %v1827
    %v2015 = vunpack.c.h.b16 %v1827
    %v2016 = vunpack.c.l.b16 %v1828
    %v2017 = vunpack.c.h.b16 %v1828
    %v2018 = vunpack.c.l.b16 %v1829
    %v2019 = vunpack.c.h.b16 %v1829
    %v2020 = vunpack.c.l.b16 %v1830
    %v2021 = vunpack.c.h.b16 %v1830
    %v2022 = vunpack.c.l.b16 %v1831
    %v2023 = vunpack.c.h.b16 %v1831
    %v2024 = vunpack.c.l.b16 %v1832
    %v2025 = vunpack.c.h.b16 %v1832
    %v2026 = vunpack.c.l.b16 %v1833
    %v2027 = vunpack.c.h.b16 %v1833
    %v2028 = vunpack.c.l.b16 %v1834
    %v2029 = vunpack.c.h.b16 %v1834
    %v2030 = vunpack.c.l.b16 %v1835
    %v2031 = vunpack.c.h.b16 %v1835
    %v2032 = vunpack.c.l.b16 %v1836
    %v2033 = vunpack.c.h.b16 %v1836
    %v2034 = vunpack.c.l.b16 %v1837
    %v2035 = vunpack.c.h.b16 %v1837
    %v2036 = vunpack.c.l.b16 %v1838
    %v2037 = vunpack.c.h.b16 %v1838
    %v2038 = vunpack.c.l.b16 %v1839
    %v2039 = vunpack.c.h.b16 %v1839
    %v2040 = vunpack.c.l.b16 %v1840
    %v2041 = vunpack.c.h.b16 %v1840
    %v2042 = vunpack.c.l.b16 %v1841
    %v2043 = vunpack.c.h.b16 %v1841
    %v2044 = vpack.c.b16 %v1920, %v1916
    %v2045 = vpack.c.b16 %v1921, %v1917
    %v2046 = vpack.c.b16 %v1922, %v1918
    %v2047 = vpack.c.b16 %v1923, %v1919
    %v2048 = vpack.c.b16 %v1928, %v1924
    %v2049 = vpack.c.b16 %v1929, %v1925
    %v2050 = vpack.c.b16 %v1930, %v1926
    %v2051 = vpack.c.b16 %v1931, %v1927
    %v2052 = vpack.c.b16 %v1936, %v1932
    %v2053 = vpack.c.b16 %v1937, %v1933
    %v2054 = vpack.c.b16 %v1938, %v1934
    %v2055 = vpack.c.b16 %v1939, %v1935
    %v2056 = vpack.c.b16 %v1944, %v1940
    %v2057 = vpack.c.b16 %v1945, %v1941
    %v2058 = vpack.c.b16 %v1946, %v1942
    %v2059 = vpack.c.b16 %v1947, %v1943
    %v2060 = vpack.c.b16 %v1952, %v1948
    %v2061 = vpack.c.b16 %v1953, %v1949
    %v2062 = vpack.c.b16 %v1954, %v1950
    %v2063 = vpack.c.b16 %v1955, %v1951
    %v2064 = vpack.c.b16 %v1960, %v1956
    %v2065 = vpack.c.b16 %v1961, %v1957
    %v2066 = vpack.c.b16 %v1962, %v1958
    %v2067 = vpack.c.b16 %v1963, %v1959
    %v2068 = vpack.c.b16 %v1968, %v1964
    %v2069 = vpack.c.b16 %v1969, %v1965
    %v2070 = vpack.c.b16 %v1970, %v1966
    %v2071 = vpack.c.b16 %v1971, %v1967
    %v2072 = vpack.c.b16 %v1976, %v1972
    %v2073 = vpack.c.b16 %v1977, %v1973
    %v2074 = vpack.c.b16 %v1978, %v1974
    %v2075 = vpack.c.b16 %v1979, %v1975
    %v2076 = vpack.c.b16 %v1984, %v1980
    %v2077 = vpack.c.b16 %v1985, %v1981
    %v2078 = vpack.c.b16 %v1986, %v1982
    %v2079 = vpack.c.b16 %v1987, %v1983
    %v2080 = vpack.c.b16 %v1992, %v1988
    %v2081 = vpack.c.b16 %v1993, %v1989
    %v2082 = vpack.c.b16 %v1994, %v1990
    %v2083 = vpack.c.b16 %v1995, %v1991
    %v2084 = vpack.c.b16 %v2000, %v1996
    %v2085 = vpack.c.b16 %v2001, %v1997
    %v2086 = vpack.c.b16 %v2002, %v1998
    %v2087 = vpack.c.b16 %v2003, %v1999
    %v2088 = vpack.c.b16 %v2008, %v2004
    %v2089 = vpack.c.b16 %v2009, %v2005
    %v2090 = vpack.c.b16 %v2010, %v2006
    %v2091 = vpack.c.b16 %v2011, %v2007
    %v2092 = vpack.c.b16 %v2016, %v2012
    %v2093 = vpack.c.b16 %v2017, %v2013
    %v2094 = vpack.c.b16 %v2018, %v2014
    %v2095 = vpack.c.b16 %v2019, %v2015
    %v2096 = vpack.c.b16 %v2024, %v2020
    %v2097 = vpack.c.b16 %v2025, %v2021
    %v2098 = vpack.c.b16 %v2026, %v2022
    %v2099 = vpack.c.b16 %v2027, %v2023
    %v2100 = vpack.c.b16 %v2032, %v2028
    %v2101 = vpack.c.b16 %v2033, %v2029
    %v2102 = vpack.c.b16 %v2034, %v2030
    %v2103 = vpack.c.b16 %v2035, %v2031
    %v2104 = vpack.c.b16 %v2040, %v2036
    %v2105 = vpack.c.b16 %v2041, %v2037
    %v2106 = vpack.c.b16 %v2042, %v2038
    %v2107 = vpack.c.b16 %v2043, %v2039
    %2172 = vmatpush.bf16.msra.mxu0 %v2072
    %2173 = vmatpush.bf16.msra.mxu0 %v2068
    %2174 = vmatpush.bf16.msra.mxu0 %v2064
    %2175 = vmatpush.bf16.msra.mxu0 %v2060
    %2176 = vmatpush.bf16.msra.mxu0 %v2056
    %2177 = vmatpush.bf16.msra.mxu0 %v2052
    %2178 = vmatpush.bf16.msra.mxu0 %v2048
    %2179 = vmatpush.bf16.msra.mxu0 %v2044
    %2180 = vmatmul.bf16.gmra.mxu0 %v1774
    %v2181 = vpop.f32.mrf.mxu0
    %v2182 = vadd.f32 %v1844, %v2181
    %v2183 = vpop.f32.mrf.mxu0
    %v2184 = vadd.f32 %v1844, %v2183
    %2185 = vmatmul.bf16.gmra.mxu0 %v1776
    %v2186 = vpop.f32.mrf.mxu0
    %v2187 = vadd.f32 %v1844, %v2186
    %v2188 = vpop.f32.mrf.mxu0
    %v2189 = vadd.f32 %v1844, %v2188
    %2190 = vdwg.mxu0
    %2191 = vmatpush.bf16.msra.mxu0 %v2104
    %2192 = vmatpush.bf16.msra.mxu0 %v2100
    %2193 = vmatpush.bf16.msra.mxu0 %v2096
    %2194 = vmatpush.bf16.msra.mxu0 %v2092
    %2195 = vmatpush.bf16.msra.mxu0 %v2088
    %2196 = vmatpush.bf16.msra.mxu0 %v2084
    %2197 = vmatpush.bf16.msra.mxu0 %v2080
    %2198 = vmatpush.bf16.msra.mxu0 %v2076
    %2199 = vmatmul.bf16.gmra.mxu0 %v1775
    %v2200 = vpop.f32.mrf.mxu0
    %v2201 = vadd.f32 %v2182, %v2200
    %v2202 = vpop.f32.mrf.mxu0
    %v2203 = vadd.f32 %v2184, %v2202
    %2204 = vmatmul.bf16.gmra.mxu0 %v1777
    %v2205 = vpop.f32.mrf.mxu0
    %v2206 = vadd.f32 %v2187, %v2205
    %v2207 = vpop.f32.mrf.mxu0
    %v2208 = vadd.f32 %v2189, %v2207
    %2209 = vdwg.mxu0
    %2210 = vmatpush.bf16.msra.mxu0 %v2073
    %2211 = vmatpush.bf16.msra.mxu0 %v2069
    %2212 = vmatpush.bf16.msra.mxu0 %v2065
    %2213 = vmatpush.bf16.msra.mxu0 %v2061
    %2214 = vmatpush.bf16.msra.mxu0 %v2057
    %2215 = vmatpush.bf16.msra.mxu0 %v2053
    %2216 = vmatpush.bf16.msra.mxu0 %v2049
    %2217 = vmatpush.bf16.msra.mxu0 %v2045
    %2218 = vmatmul.bf16.gmra.mxu0 %v1774
    %v2219 = vpop.f32.mrf.mxu0
    %v2220 = vadd.f32 %v1845, %v2219
    %v2221 = vpop.f32.mrf.mxu0
    %v2222 = vadd.f32 %v1845, %v2221
    %2223 = vmatmul.bf16.gmra.mxu0 %v1776
    %v2224 = vpop.f32.mrf.mxu0
    %v2225 = vadd.f32 %v1845, %v2224
    %v2226 = vpop.f32.mrf.mxu0
    %v2227 = vadd.f32 %v1845, %v2226
    %2228 = vdwg.mxu0
    %2229 = vmatpush.bf16.msra.mxu0 %v2105
    %2230 = vmatpush.bf16.msra.mxu0 %v2101
    %2231 = vmatpush.bf16.msra.mxu0 %v2097
    %2232 = vmatpush.bf16.msra.mxu0 %v2093
    %2233 = vmatpush.bf16.msra.mxu0 %v2089
    %2234 = vmatpush.bf16.msra.mxu0 %v2085
    %2235 = vmatpush.bf16.msra.mxu0 %v2081
    %2236 = vmatpush.bf16.msra.mxu0 %v2077
    %2237 = vmatmul.bf16.gmra.mxu0 %v1775
    %v2238 = vpop.f32.mrf.mxu0
    %v2239 = vadd.f32 %v2220, %v2238
    %v2240 = vpop.f32.mrf.mxu0
    %v2241 = vadd.f32 %v2222, %v2240
    %2242 = vmatmul.bf16.gmra.mxu0 %v1777
    %v2243 = vpop.f32.mrf.mxu0
    %v2244 = vadd.f32 %v2225, %v2243
    %v2245 = vpop.f32.mrf.mxu0
    %v2246 = vadd.f32 %v2227, %v2245
    %2247 = vdwg.mxu0
    %2248 = vmatpush.bf16.msra.mxu0 %v2074
    %2249 = vmatpush.bf16.msra.mxu0 %v2070
    %2250 = vmatpush.bf16.msra.mxu0 %v2066
    %2251 = vmatpush.bf16.msra.mxu0 %v2062
    %2252 = vmatpush.bf16.msra.mxu0 %v2058
    %2253 = vmatpush.bf16.msra.mxu0 %v2054
    %2254 = vmatpush.bf16.msra.mxu0 %v2050
    %2255 = vmatpush.bf16.msra.mxu0 %v2046
    %2256 = vmatmul.bf16.gmra.mxu0 %v1774
    %v2257 = vpop.f32.mrf.mxu0
    %v2258 = vadd.f32 %v1846, %v2257
    %v2259 = vpop.f32.mrf.mxu0
    %v2260 = vadd.f32 %v1846, %v2259
    %2261 = vmatmul.bf16.gmra.mxu0 %v1776
    %v2262 = vpop.f32.mrf.mxu0
    %v2263 = vadd.f32 %v1846, %v2262
    %v2264 = vpop.f32.mrf.mxu0
    %v2265 = vadd.f32 %v1846, %v2264
    %2266 = vdwg.mxu0
    %2267 = vmatpush.bf16.msra.mxu0 %v2106
    %2268 = vmatpush.bf16.msra.mxu0 %v2102
    %2269 = vmatpush.bf16.msra.mxu0 %v2098
    %2270 = vmatpush.bf16.msra.mxu0 %v2094
    %2271 = vmatpush.bf16.msra.mxu0 %v2090
    %2272 = vmatpush.bf16.msra.mxu0 %v2086
    %2273 = vmatpush.bf16.msra.mxu0 %v2082
    %2274 = vmatpush.bf16.msra.mxu0 %v2078
    %2275 = vmatmul.bf16.gmra.mxu0 %v1775
    %v2276 = vpop.f32.mrf.mxu0
    %v2277 = vadd.f32 %v2258, %v2276
    %v2278 = vpop.f32.mrf.mxu0
    %v2279 = vadd.f32 %v2260, %v2278
    %2280 = vmatmul.bf16.gmra.mxu0 %v1777
    %v2281 = vpop.f32.mrf.mxu0
    %v2282 = vadd.f32 %v2263, %v2281
    %v2283 = vpop.f32.mrf.mxu0
    %v2284 = vadd.f32 %v2265, %v2283
    %2285 = vdwg.mxu0
    %2286 = vmatpush.bf16.msra.mxu0 %v2075
    %2287 = vmatpush.bf16.msra.mxu0 %v2071
    %2288 = vmatpush.bf16.msra.mxu0 %v2067
    %2289 = vmatpush.bf16.msra.mxu0 %v2063
    %2290 = vmatpush.bf16.msra.mxu0 %v2059
    %2291 = vmatpush.bf16.msra.mxu0 %v2055
    %2292 = vmatpush.bf16.msra.mxu0 %v2051
    %2293 = vmatpush.bf16.msra.mxu0 %v2047
    %2294 = vmatmul.bf16.gmra.mxu0 %v1774
    %v2295 = vpop.f32.mrf.mxu0
    %v2296 = vadd.f32 %v1847, %v2295
    %v2297 = vpop.f32.mrf.mxu0
    %v2298 = vadd.f32 %v1847, %v2297
    %2299 = vmatmul.bf16.gmra.mxu0 %v1776
    %v2300 = vpop.f32.mrf.mxu0
    %v2301 = vadd.f32 %v1847, %v2300
    %v2302 = vpop.f32.mrf.mxu0
    %v2303 = vadd.f32 %v1847, %v2302
    %2304 = vdwg.mxu0
    %2305 = vmatpush.bf16.msra.mxu0 %v2107
    %2306 = vmatpush.bf16.msra.mxu0 %v2103
    %2307 = vmatpush.bf16.msra.mxu0 %v2099
    %2308 = vmatpush.bf16.msra.mxu0 %v2095
    %2309 = vmatpush.bf16.msra.mxu0 %v2091
    %2310 = vmatpush.bf16.msra.mxu0 %v2087
    %2311 = vmatpush.bf16.msra.mxu0 %v2083
    %2312 = vmatpush.bf16.msra.mxu0 %v2079
    %2313 = vmatmul.bf16.gmra.mxu0 %v1775
    %v2314 = vpop.f32.mrf.mxu0
    %v2315 = vadd.f32 %v2296, %v2314
    %v2316 = vpop.f32.mrf.mxu0
    %v2317 = vadd.f32 %v2298, %v2316
    %2318 = vmatmul.bf16.gmra.mxu0 %v1777
    %v2319 = vpop.f32.mrf.mxu0
    %v2320 = vadd.f32 %v2301, %v2319
    %v2321 = vpop.f32.mrf.mxu0
    %v2322 = vadd.f32 %v2303, %v2321
    %2323 = vdwg.mxu0
    %v2324 = vmax.f32 %v2201, 0.0
    %v2325 = vmax.f32 %v2239, 0.0
    %v2326 = vmax.f32 %v2277, 0.0
    %v2327 = vmax.f32 %v2315, 0.0
    %v2328 = vmax.f32 %v2203, 0.0
    %v2329 = vmax.f32 %v2241, 0.0
    %v2330 = vmax.f32 %v2279, 0.0
    %v2331 = vmax.f32 %v2317, 0.0
    %v2332 = vmax.f32 %v2206, 0.0
    %v2333 = vmax.f32 %v2244, 0.0
    %v2334 = vmax.f32 %v2282, 0.0
    %v2335 = vmax.f32 %v2320, 0.0
    %v2336 = vmax.f32 %v2208, 0.0
    %v2337 = vmax.f32 %v2246, 0.0
    %v2338 = vmax.f32 %v2284, 0.0
    %v2339 = vmax.f32 %v2322, 0.0
    %v2340 = vpack.c.bf16 %v2328, %v2324
    %v2341 = vpack.c.bf16 %v2329, %v2325
    %v2342 = vpack.c.bf16 %v2330, %v2326
    %v2343 = vpack.c.bf16 %v2331, %v2327
    %v2344 = vpack.c.bf16 %v2336, %v2332
    %v2345 = vpack.c.bf16 %v2337, %v2333
    %v2346 = vpack.c.bf16 %v2338, %v2334
    %v2347 = vpack.c.bf16 %v2339, %v2335
    %v2348 = vld [vmem:[#allocation15] sm:$0xff]
    %v2349 = vld [vmem:[#allocation15 + $0x8] sm:$0xff]
    %v2350 = vld [vmem:[#allocation15 + $0x10] sm:$0xff]
    %v2351 = vld [vmem:[#allocation15 + $0x18] sm:$0xff]
    %v2352 = vld [vmem:[#allocation15 + $0x20] sm:$0xff]
    %v2353 = vld [vmem:[#allocation15 + $0x28] sm:$0xff]
    %v2354 = vld [vmem:[#allocation15 + $0x30] sm:$0xff]
    %v2355 = vld [vmem:[#allocation15 + $0x38] sm:$0xff]
    %v2356 = vld [vmem:[#allocation15 + $0x40] sm:$0xff]
    %v2357 = vld [vmem:[#allocation15 + $0x48] sm:$0xff]
    %v2358 = vld [vmem:[#allocation15 + $0x50] sm:$0xff]
    %v2359 = vld [vmem:[#allocation15 + $0x58] sm:$0xff]
    %v2360 = vld [vmem:[#allocation15 + $0x60] sm:$0xff]
    %v2361 = vld [vmem:[#allocation15 + $0x68] sm:$0xff]
    %v2362 = vld [vmem:[#allocation15 + $0x70] sm:$0xff]
    %v2363 = vld [vmem:[#allocation15 + $0x78] sm:$0xff]
    %v2364 = vld [vmem:[#allocation15 + $0x80] sm:$0xff]
    %v2365 = vld [vmem:[#allocation15 + $0x88] sm:$0xff]
    %v2366 = vld [vmem:[#allocation15 + $0x90] sm:$0xff]
    %v2367 = vld [vmem:[#allocation15 + $0x98] sm:$0xff]
    %v2368 = vld [vmem:[#allocation15 + $0xa0] sm:$0xff]
    %v2369 = vld [vmem:[#allocation15 + $0xa8] sm:$0xff]
    %v2370 = vld [vmem:[#allocation15 + $0xb0] sm:$0xff]
    %v2371 = vld [vmem:[#allocation15 + $0xb8] sm:$0xff]
    %v2372 = vld [vmem:[#allocation15 + $0xc0] sm:$0xff]
    %v2373 = vld [vmem:[#allocation15 + $0xc8] sm:$0xff]
    %v2374 = vld [vmem:[#allocation15 + $0xd0] sm:$0xff]
    %v2375 = vld [vmem:[#allocation15 + $0xd8] sm:$0xff]
    %v2376 = vld [vmem:[#allocation15 + $0xe0] sm:$0xff]
    %v2377 = vld [vmem:[#allocation15 + $0xe8] sm:$0xff]
    %v2378 = vld [vmem:[#allocation15 + $0xf0] sm:$0xff]
    %v2379 = vld [vmem:[#allocation15 + $0xf8] sm:$0xff]
    %v2380 = vld [vmem:[#allocation15 + $0x100] sm:$0xff]
    %v2381 = vld [vmem:[#allocation15 + $0x108] sm:$0xff]
    %v2382 = vld [vmem:[#allocation15 + $0x110] sm:$0xff]
    %v2383 = vld [vmem:[#allocation15 + $0x118] sm:$0xff]
    %v2384 = vld [vmem:[#allocation15 + $0x120] sm:$0xff]
    %v2385 = vld [vmem:[#allocation15 + $0x128] sm:$0xff]
    %v2386 = vld [vmem:[#allocation15 + $0x130] sm:$0xff]
    %v2387 = vld [vmem:[#allocation15 + $0x138] sm:$0xff]
    %v2388 = vld [vmem:[#allocation15 + $0x140] sm:$0xff]
    %v2389 = vld [vmem:[#allocation15 + $0x148] sm:$0xff]
    %v2390 = vld [vmem:[#allocation15 + $0x150] sm:$0xff]
    %v2391 = vld [vmem:[#allocation15 + $0x158] sm:$0xff]
    %v2392 = vld [vmem:[#allocation15 + $0x160] sm:$0xff]
    %v2393 = vld [vmem:[#allocation15 + $0x168] sm:$0xff]
    %v2394 = vld [vmem:[#allocation15 + $0x170] sm:$0xff]
    %v2395 = vld [vmem:[#allocation15 + $0x178] sm:$0xff]
    %v2396 = vld [vmem:[#allocation15 + $0x180] sm:$0xff]
    %v2397 = vld [vmem:[#allocation15 + $0x188] sm:$0xff]
    %v2398 = vld [vmem:[#allocation15 + $0x190] sm:$0xff]
    %v2399 = vld [vmem:[#allocation15 + $0x198] sm:$0xff]
    %v2400 = vld [vmem:[#allocation15 + $0x1a0] sm:$0xff]
    %v2401 = vld [vmem:[#allocation15 + $0x1a8] sm:$0xff]
    %v2402 = vld [vmem:[#allocation15 + $0x1b0] sm:$0xff]
    %v2403 = vld [vmem:[#allocation15 + $0x1b8] sm:$0xff]
    %v2404 = vld [vmem:[#allocation15 + $0x1c0] sm:$0xff]
    %v2405 = vld [vmem:[#allocation15 + $0x1c8] sm:$0xff]
    %v2406 = vld [vmem:[#allocation15 + $0x1d0] sm:$0xff]
    %v2407 = vld [vmem:[#allocation15 + $0x1d8] sm:$0xff]
    %v2408 = vld [vmem:[#allocation15 + $0x1e0] sm:$0xff]
    %v2409 = vld [vmem:[#allocation15 + $0x1e8] sm:$0xff]
    %v2410 = vld [vmem:[#allocation15 + $0x1f0] sm:$0xff]
    %v2411 = vld [vmem:[#allocation15 + $0x1f8] sm:$0xff]
    %v2412 = vld [vmem:[%s10] sm:$0x3]
    %v2414 = vperm.slane %v2412, 0
    %v2415 = vperm.slane %v2412, 1
    %v2482 = vunpack.c.l.b16 %v2348
    %v2483 = vunpack.c.h.b16 %v2348
    %v2484 = vunpack.c.l.b16 %v2349
    %v2485 = vunpack.c.h.b16 %v2349
    %v2486 = vunpack.c.l.b16 %v2350
    %v2487 = vunpack.c.h.b16 %v2350
    %v2488 = vunpack.c.l.b16 %v2351
    %v2489 = vunpack.c.h.b16 %v2351
    %v2490 = vunpack.c.l.b16 %v2352
    %v2491 = vunpack.c.h.b16 %v2352
    %v2492 = vunpack.c.l.b16 %v2353
    %v2493 = vunpack.c.h.b16 %v2353
    %v2494 = vunpack.c.l.b16 %v2354
    %v2495 = vunpack.c.h.b16 %v2354
    %v2496 = vunpack.c.l.b16 %v2355
    %v2497 = vunpack.c.h.b16 %v2355
    %v2498 = vunpack.c.l.b16 %v2356
    %v2499 = vunpack.c.h.b16 %v2356
    %v2500 = vunpack.c.l.b16 %v2357
    %v2501 = vunpack.c.h.b16 %v2357
    %v2502 = vunpack.c.l.b16 %v2358
    %v2503 = vunpack.c.h.b16 %v2358
    %v2504 = vunpack.c.l.b16 %v2359
    %v2505 = vunpack.c.h.b16 %v2359
    %v2506 = vunpack.c.l.b16 %v2360
    %v2507 = vunpack.c.h.b16 %v2360
    %v2508 = vunpack.c.l.b16 %v2361
    %v2509 = vunpack.c.h.b16 %v2361
    %v2510 = vunpack.c.l.b16 %v2362
    %v2511 = vunpack.c.h.b16 %v2362
    %v2512 = vunpack.c.l.b16 %v2363
    %v2513 = vunpack.c.h.b16 %v2363
    %v2514 = vunpack.c.l.b16 %v2364
    %v2515 = vunpack.c.h.b16 %v2364
    %v2516 = vunpack.c.l.b16 %v2365
    %v2517 = vunpack.c.h.b16 %v2365
    %v2518 = vunpack.c.l.b16 %v2366
    %v2519 = vunpack.c.h.b16 %v2366
    %v2520 = vunpack.c.l.b16 %v2367
    %v2521 = vunpack.c.h.b16 %v2367
    %v2522 = vunpack.c.l.b16 %v2368
    %v2523 = vunpack.c.h.b16 %v2368
    %v2524 = vunpack.c.l.b16 %v2369
    %v2525 = vunpack.c.h.b16 %v2369
    %v2526 = vunpack.c.l.b16 %v2370
    %v2527 = vunpack.c.h.b16 %v2370
    %v2528 = vunpack.c.l.b16 %v2371
    %v2529 = vunpack.c.h.b16 %v2371
    %v2530 = vunpack.c.l.b16 %v2372
    %v2531 = vunpack.c.h.b16 %v2372
    %v2532 = vunpack.c.l.b16 %v2373
    %v2533 = vunpack.c.h.b16 %v2373
    %v2534 = vunpack.c.l.b16 %v2374
    %v2535 = vunpack.c.h.b16 %v2374
    %v2536 = vunpack.c.l.b16 %v2375
    %v2537 = vunpack.c.h.b16 %v2375
    %v2538 = vunpack.c.l.b16 %v2376
    %v2539 = vunpack.c.h.b16 %v2376
    %v2540 = vunpack.c.l.b16 %v2377
    %v2541 = vunpack.c.h.b16 %v2377
    %v2542 = vunpack.c.l.b16 %v2378
    %v2543 = vunpack.c.h.b16 %v2378
    %v2544 = vunpack.c.l.b16 %v2379
    %v2545 = vunpack.c.h.b16 %v2379
    %v2546 = vunpack.c.l.b16 %v2380
    %v2547 = vunpack.c.h.b16 %v2380
    %v2548 = vunpack.c.l.b16 %v2381
    %v2549 = vunpack.c.h.b16 %v2381
    %v2550 = vunpack.c.l.b16 %v2382
    %v2551 = vunpack.c.h.b16 %v2382
    %v2552 = vunpack.c.l.b16 %v2383
    %v2553 = vunpack.c.h.b16 %v2383
    %v2554 = vunpack.c.l.b16 %v2384
    %v2555 = vunpack.c.h.b16 %v2384
    %v2556 = vunpack.c.l.b16 %v2385
    %v2557 = vunpack.c.h.b16 %v2385
    %v2558 = vunpack.c.l.b16 %v2386
    %v2559 = vunpack.c.h.b16 %v2386
    %v2560 = vunpack.c.l.b16 %v2387
    %v2561 = vunpack.c.h.b16 %v2387
    %v2562 = vunpack.c.l.b16 %v2388
    %v2563 = vunpack.c.h.b16 %v2388
    %v2564 = vunpack.c.l.b16 %v2389
    %v2565 = vunpack.c.h.b16 %v2389
    %v2566 = vunpack.c.l.b16 %v2390
    %v2567 = vunpack.c.h.b16 %v2390
    %v2568 = vunpack.c.l.b16 %v2391
    %v2569 = vunpack.c.h.b16 %v2391
    %v2570 = vunpack.c.l.b16 %v2392
    %v2571 = vunpack.c.h.b16 %v2392
    %v2572 = vunpack.c.l.b16 %v2393
    %v2573 = vunpack.c.h.b16 %v2393
    %v2574 = vunpack.c.l.b16 %v2394
    %v2575 = vunpack.c.h.b16 %v2394
    %v2576 = vunpack.c.l.b16 %v2395
    %v2577 = vunpack.c.h.b16 %v2395
    %v2578 = vunpack.c.l.b16 %v2396
    %v2579 = vunpack.c.h.b16 %v2396
    %v2580 = vunpack.c.l.b16 %v2397
    %v2581 = vunpack.c.h.b16 %v2397
    %v2582 = vunpack.c.l.b16 %v2398
    %v2583 = vunpack.c.h.b16 %v2398
    %v2584 = vunpack.c.l.b16 %v2399
    %v2585 = vunpack.c.h.b16 %v2399
    %v2586 = vunpack.c.l.b16 %v2400
    %v2587 = vunpack.c.h.b16 %v2400
    %v2588 = vunpack.c.l.b16 %v2401
    %v2589 = vunpack.c.h.b16 %v2401
    %v2590 = vunpack.c.l.b16 %v2402
    %v2591 = vunpack.c.h.b16 %v2402
    %v2592 = vunpack.c.l.b16 %v2403
    %v2593 = vunpack.c.h.b16 %v2403
    %v2594 = vunpack.c.l.b16 %v2404
    %v2595 = vunpack.c.h.b16 %v2404
    %v2596 = vunpack.c.l.b16 %v2405
    %v2597 = vunpack.c.h.b16 %v2405
    %v2598 = vunpack.c.l.b16 %v2406
    %v2599 = vunpack.c.h.b16 %v2406
    %v2600 = vunpack.c.l.b16 %v2407
    %v2601 = vunpack.c.h.b16 %v2407
    %v2602 = vunpack.c.l.b16 %v2408
    %v2603 = vunpack.c.h.b16 %v2408
    %v2604 = vunpack.c.l.b16 %v2409
    %v2605 = vunpack.c.h.b16 %v2409
    %v2606 = vunpack.c.l.b16 %v2410
    %v2607 = vunpack.c.h.b16 %v2410
    %v2608 = vunpack.c.l.b16 %v2411
    %v2609 = vunpack.c.h.b16 %v2411
    %v2610 = vpack.c.b16 %v2484, %v2482
    %v2611 = vpack.c.b16 %v2485, %v2483
    %v2612 = vpack.c.b16 %v2488, %v2486
    %v2613 = vpack.c.b16 %v2489, %v2487
    %v2614 = vpack.c.b16 %v2492, %v2490
    %v2615 = vpack.c.b16 %v2493, %v2491
    %v2616 = vpack.c.b16 %v2496, %v2494
    %v2617 = vpack.c.b16 %v2497, %v2495
    %v2618 = vpack.c.b16 %v2500, %v2498
    %v2619 = vpack.c.b16 %v2501, %v2499
    %v2620 = vpack.c.b16 %v2504, %v2502
    %v2621 = vpack.c.b16 %v2505, %v2503
    %v2622 = vpack.c.b16 %v2508, %v2506
    %v2623 = vpack.c.b16 %v2509, %v2507
    %v2624 = vpack.c.b16 %v2512, %v2510
    %v2625 = vpack.c.b16 %v2513, %v2511
    %v2626 = vpack.c.b16 %v2516, %v2514
    %v2627 = vpack.c.b16 %v2517, %v2515
    %v2628 = vpack.c.b16 %v2520, %v2518
    %v2629 = vpack.c.b16 %v2521, %v2519
    %v2630 = vpack.c.b16 %v2524, %v2522
    %v2631 = vpack.c.b16 %v2525, %v2523
    %v2632 = vpack.c.b16 %v2528, %v2526
    %v2633 = vpack.c.b16 %v2529, %v2527
    %v2634 = vpack.c.b16 %v2532, %v2530
    %v2635 = vpack.c.b16 %v2533, %v2531
    %v2636 = vpack.c.b16 %v2536, %v2534
    %v2637 = vpack.c.b16 %v2537, %v2535
    %v2638 = vpack.c.b16 %v2540, %v2538
    %v2639 = vpack.c.b16 %v2541, %v2539
    %v2640 = vpack.c.b16 %v2544, %v2542
    %v2641 = vpack.c.b16 %v2545, %v2543
    %v2642 = vpack.c.b16 %v2548, %v2546
    %v2643 = vpack.c.b16 %v2549, %v2547
    %v2644 = vpack.c.b16 %v2552, %v2550
    %v2645 = vpack.c.b16 %v2553, %v2551
    %v2646 = vpack.c.b16 %v2556, %v2554
    %v2647 = vpack.c.b16 %v2557, %v2555
    %v2648 = vpack.c.b16 %v2560, %v2558
    %v2649 = vpack.c.b16 %v2561, %v2559
    %v2650 = vpack.c.b16 %v2564, %v2562
    %v2651 = vpack.c.b16 %v2565, %v2563
    %v2652 = vpack.c.b16 %v2568, %v2566
    %v2653 = vpack.c.b16 %v2569, %v2567
    %v2654 = vpack.c.b16 %v2572, %v2570
    %v2655 = vpack.c.b16 %v2573, %v2571
    %v2656 = vpack.c.b16 %v2576, %v2574
    %v2657 = vpack.c.b16 %v2577, %v2575
    %v2658 = vpack.c.b16 %v2580, %v2578
    %v2659 = vpack.c.b16 %v2581, %v2579
    %v2660 = vpack.c.b16 %v2584, %v2582
    %v2661 = vpack.c.b16 %v2585, %v2583
    %v2662 = vpack.c.b16 %v2588, %v2586
    %v2663 = vpack.c.b16 %v2589, %v2587
    %v2664 = vpack.c.b16 %v2592, %v2590
    %v2665 = vpack.c.b16 %v2593, %v2591
    %v2666 = vpack.c.b16 %v2596, %v2594
    %v2667 = vpack.c.b16 %v2597, %v2595
    %v2668 = vpack.c.b16 %v2600, %v2598
    %v2669 = vpack.c.b16 %v2601, %v2599
    %v2670 = vpack.c.b16 %v2604, %v2602
    %v2671 = vpack.c.b16 %v2605, %v2603
    %v2672 = vpack.c.b16 %v2608, %v2606
    %v2673 = vpack.c.b16 %v2609, %v2607
    %2738 = vmatpush.bf16.msra.mxu0 %v2624
    %2739 = vmatpush.bf16.msra.mxu0 %v2622
    %2740 = vmatpush.bf16.msra.mxu0 %v2620
    %2741 = vmatpush.bf16.msra.mxu0 %v2618
    %2742 = vmatpush.bf16.msra.mxu0 %v2616
    %2743 = vmatpush.bf16.msra.mxu0 %v2614
    %2744 = vmatpush.bf16.msra.mxu0 %v2612
    %2745 = vmatpush.bf16.msra.mxu0 %v2610
    %2746 = vmatmul.bf16.gmra.mxu0 %v2340
    %v2747 = vpop.f32.mrf.mxu0
    %v2748 = vadd.f32 %v2414, %v2747
    %v2749 = vpop.f32.mrf.mxu0
    %v2750 = vadd.f32 %v2414, %v2749
    %2751 = vmatmul.bf16.gmra.mxu0 %v2344
    %v2752 = vpop.f32.mrf.mxu0
    %v2753 = vadd.f32 %v2414, %v2752
    %v2754 = vpop.f32.mrf.mxu0
    %v2755 = vadd.f32 %v2414, %v2754
    %2756 = vdwg.mxu0
    %2757 = vmatpush.bf16.msra.mxu0 %v2640
    %2758 = vmatpush.bf16.msra.mxu0 %v2638
    %2759 = vmatpush.bf16.msra.mxu0 %v2636
    %2760 = vmatpush.bf16.msra.mxu0 %v2634
    %2761 = vmatpush.bf16.msra.mxu0 %v2632
    %2762 = vmatpush.bf16.msra.mxu0 %v2630
    %2763 = vmatpush.bf16.msra.mxu0 %v2628
    %2764 = vmatpush.bf16.msra.mxu0 %v2626
    %2765 = vmatmul.bf16.gmra.mxu0 %v2341
    %v2766 = vpop.f32.mrf.mxu0
    %v2767 = vadd.f32 %v2748, %v2766
    %v2768 = vpop.f32.mrf.mxu0
    %v2769 = vadd.f32 %v2750, %v2768
    %2770 = vmatmul.bf16.gmra.mxu0 %v2345
    %v2771 = vpop.f32.mrf.mxu0
    %v2772 = vadd.f32 %v2753, %v2771
    %v2773 = vpop.f32.mrf.mxu0
    %v2774 = vadd.f32 %v2755, %v2773
    %2775 = vdwg.mxu0
    %2776 = vmatpush.bf16.msra.mxu0 %v2656
    %2777 = vmatpush.bf16.msra.mxu0 %v2654
    %2778 = vmatpush.bf16.msra.mxu0 %v2652
    %2779 = vmatpush.bf16.msra.mxu0 %v2650
    %2780 = vmatpush.bf16.msra.mxu0 %v2648
    %2781 = vmatpush.bf16.msra.mxu0 %v2646
    %2782 = vmatpush.bf16.msra.mxu0 %v2644
    %2783 = vmatpush.bf16.msra.mxu0 %v2642
    %2784 = vmatmul.bf16.gmra.mxu0 %v2342
    %v2785 = vpop.f32.mrf.mxu0
    %v2786 = vadd.f32 %v2767, %v2785
    %v2787 = vpop.f32.mrf.mxu0
    %v2788 = vadd.f32 %v2769, %v2787
    %2789 = vmatmul.bf16.gmra.mxu0 %v2346
    %v2790 = vpop.f32.mrf.mxu0
    %v2791 = vadd.f32 %v2772, %v2790
    %v2792 = vpop.f32.mrf.mxu0
    %v2793 = vadd.f32 %v2774, %v2792
    %2794 = vdwg.mxu0
    %2795 = vmatpush.bf16.msra.mxu0 %v2672
    %2796 = vmatpush.bf16.msra.mxu0 %v2670
    %2797 = vmatpush.bf16.msra.mxu0 %v2668
    %2798 = vmatpush.bf16.msra.mxu0 %v2666
    %2799 = vmatpush.bf16.msra.mxu0 %v2664
    %2800 = vmatpush.bf16.msra.mxu0 %v2662
    %2801 = vmatpush.bf16.msra.mxu0 %v2660
    %2802 = vmatpush.bf16.msra.mxu0 %v2658
    %2803 = vmatmul.bf16.gmra.mxu0 %v2343
    %v2804 = vpop.f32.mrf.mxu0
    %v2805 = vadd.f32 %v2786, %v2804
    %v2806 = vpop.f32.mrf.mxu0
    %v2807 = vadd.f32 %v2788, %v2806
    %2808 = vmatmul.bf16.gmra.mxu0 %v2347
    %v2809 = vpop.f32.mrf.mxu0
    %v2810 = vadd.f32 %v2791, %v2809
    %v2811 = vpop.f32.mrf.mxu0
    %v2812 = vadd.f32 %v2793, %v2811
    %2813 = vdwg.mxu0
    %2814 = vmatpush.bf16.msra.mxu0 %v2625
    %2815 = vmatpush.bf16.msra.mxu0 %v2623
    %2816 = vmatpush.bf16.msra.mxu0 %v2621
    %2817 = vmatpush.bf16.msra.mxu0 %v2619
    %2818 = vmatpush.bf16.msra.mxu0 %v2617
    %2819 = vmatpush.bf16.msra.mxu0 %v2615
    %2820 = vmatpush.bf16.msra.mxu0 %v2613
    %2821 = vmatpush.bf16.msra.mxu0 %v2611
    %2822 = vmatmul.bf16.gmra.mxu0 %v2340
    %v2823 = vpop.f32.mrf.mxu0
    %v2824 = vadd.f32 %v2415, %v2823
    %v2825 = vpop.f32.mrf.mxu0
    %v2826 = vadd.f32 %v2415, %v2825
    %2827 = vmatmul.bf16.gmra.mxu0 %v2344
    %v2828 = vpop.f32.mrf.mxu0
    %v2829 = vadd.f32 %v2415, %v2828
    %v2830 = vpop.f32.mrf.mxu0
    %v2831 = vadd.f32 %v2415, %v2830
    %2832 = vdwg.mxu0
    %2833 = vmatpush.bf16.msra.mxu0 %v2641
    %2834 = vmatpush.bf16.msra.mxu0 %v2639
    %2835 = vmatpush.bf16.msra.mxu0 %v2637
    %2836 = vmatpush.bf16.msra.mxu0 %v2635
    %2837 = vmatpush.bf16.msra.mxu0 %v2633
    %2838 = vmatpush.bf16.msra.mxu0 %v2631
    %2839 = vmatpush.bf16.msra.mxu0 %v2629
    %2840 = vmatpush.bf16.msra.mxu0 %v2627
    %2841 = vmatmul.bf16.gmra.mxu0 %v2341
    %v2842 = vpop.f32.mrf.mxu0
    %v2843 = vadd.f32 %v2824, %v2842
    %v2844 = vpop.f32.mrf.mxu0
    %v2845 = vadd.f32 %v2826, %v2844
    %2846 = vmatmul.bf16.gmra.mxu0 %v2345
    %v2847 = vpop.f32.mrf.mxu0
    %v2848 = vadd.f32 %v2829, %v2847
    %v2849 = vpop.f32.mrf.mxu0
    %v2850 = vadd.f32 %v2831, %v2849
    %2851 = vdwg.mxu0
    %2852 = vmatpush.bf16.msra.mxu0 %v2657
    %2853 = vmatpush.bf16.msra.mxu0 %v2655
    %2854 = vmatpush.bf16.msra.mxu0 %v2653
    %2855 = vmatpush.bf16.msra.mxu0 %v2651
    %2856 = vmatpush.bf16.msra.mxu0 %v2649
    %2857 = vmatpush.bf16.msra.mxu0 %v2647
    %2858 = vmatpush.bf16.msra.mxu0 %v2645
    %2859 = vmatpush.bf16.msra.mxu0 %v2643
    %2860 = vmatmul.bf16.gmra.mxu0 %v2342
    %v2861 = vpop.f32.mrf.mxu0
    %v2862 = vadd.f32 %v2843, %v2861
    %v2863 = vpop.f32.mrf.mxu0
    %v2864 = vadd.f32 %v2845, %v2863
    %2865 = vmatmul.bf16.gmra.mxu0 %v2346
    %v2866 = vpop.f32.mrf.mxu0
    %v2867 = vadd.f32 %v2848, %v2866
    %v2868 = vpop.f32.mrf.mxu0
    %v2869 = vadd.f32 %v2850, %v2868
    %2870 = vdwg.mxu0
    %2871 = vmatpush.bf16.msra.mxu0 %v2673
    %2872 = vmatpush.bf16.msra.mxu0 %v2671
    %2873 = vmatpush.bf16.msra.mxu0 %v2669
    %2874 = vmatpush.bf16.msra.mxu0 %v2667
    %2875 = vmatpush.bf16.msra.mxu0 %v2665
    %2876 = vmatpush.bf16.msra.mxu0 %v2663
    %2877 = vmatpush.bf16.msra.mxu0 %v2661
    %2878 = vmatpush.bf16.msra.mxu0 %v2659
    %2879 = vmatmul.bf16.gmra.mxu0 %v2343
    %v2880 = vpop.f32.mrf.mxu0
    %v2881 = vadd.f32 %v2862, %v2880
    %v2882 = vpop.f32.mrf.mxu0
    %v2883 = vadd.f32 %v2864, %v2882
    %2884 = vmatmul.bf16.gmra.mxu0 %v2347
    %v2885 = vpop.f32.mrf.mxu0
    %v2886 = vadd.f32 %v2867, %v2885
    %v2887 = vpop.f32.mrf.mxu0
    %v2888 = vadd.f32 %v2869, %v2887
    %2889 = vdwg.mxu0
    %v2890 = vadd.f32 %v1766, %v2805
    %v2891 = vadd.f32 %v1767, %v2881
    %v2892 = vadd.f32 %v1768, %v2807
    %v2893 = vadd.f32 %v1769, %v2883
    %v2894 = vadd.f32 %v1770, %v2810
    %v2895 = vadd.f32 %v1771, %v2886
    %v2896 = vadd.f32 %v1772, %v2812
    %v2897 = vadd.f32 %v1773, %v2888
    %v2898 = vld [vmem:[%s11] sm:$0x3]
    %v2899 = vld [vmem:[#allocation17] sm:$0x3]
    %v2900 = vadd.f32 %v2890, %v2891
    %2901 = vadd.xlane.f32.xlu0 %v2900
    %v2902 = vpop.xlane.xlu0 %2901
    %v2903 = vadd.f32 %v2892, %v2893
    %2904 = vadd.xlane.f32.xlu0 %v2903
    %v2905 = vpop.xlane.xlu0 %2904
    %v2906 = vadd.f32 %v2894, %v2895
    %2907 = vadd.xlane.f32.xlu0 %v2906
    %v2908 = vpop.xlane.xlu0 %2907
    %v2909 = vadd.f32 %v2896, %v2897
    %2910 = vadd.xlane.f32.xlu0 %v2909
    %v2911 = vpop.xlane.xlu0 %2910
    %v2912 = vmul.f32 %v2902, %v1659
    %v2913 = vmul.f32 %v2905, %v1659
    %v2914 = vmul.f32 %v2908, %v1659
    %v2915 = vmul.f32 %v2911, %v1659
    %v2916 = vsub.f32 %v2890, %v2912
    %v2917 = vsub.f32 %v2891, %v2912
    %v2918 = vsub.f32 %v2892, %v2913
    %v2919 = vsub.f32 %v2893, %v2913
    %v2920 = vsub.f32 %v2894, %v2914
    %v2921 = vsub.f32 %v2895, %v2914
    %v2922 = vsub.f32 %v2896, %v2915
    %v2923 = vsub.f32 %v2897, %v2915
    %v2924 = vmul.f32 %v2916, %v2916
    %v2925 = vmul.f32 %v2917, %v2917
    %v2926 = vmul.f32 %v2918, %v2918
    %v2927 = vmul.f32 %v2919, %v2919
    %v2928 = vmul.f32 %v2920, %v2920
    %v2929 = vmul.f32 %v2921, %v2921
    %v2930 = vmul.f32 %v2922, %v2922
    %v2931 = vmul.f32 %v2923, %v2923
    %v2932 = vadd.f32 %v2924, %v2925
    %2933 = vadd.xlane.f32.xlu0 %v2932
    %v2934 = vpop.xlane.xlu0 %2933
    %v2935 = vadd.f32 %v2926, %v2927
    %2936 = vadd.xlane.f32.xlu0 %v2935
    %v2937 = vpop.xlane.xlu0 %2936
    %v2938 = vadd.f32 %v2928, %v2929
    %2939 = vadd.xlane.f32.xlu0 %v2938
    %v2940 = vpop.xlane.xlu0 %2939
    %v2941 = vadd.f32 %v2930, %v2931
    %2942 = vadd.xlane.f32.xlu0 %v2941
    %v2943 = vpop.xlane.xlu0 %2942
    %v2944 = vmul.f32 %v2934, %v1659
    %v2945 = vmul.f32 %v2937, %v1659
    %v2946 = vmul.f32 %v2940, %v1659
    %v2947 = vmul.f32 %v2943, %v1659
    %v2948 = vadd.f32 %v2944, 1e-05
    %v2949 = vadd.f32 %v2945, 1e-05
    %v2950 = vadd.f32 %v2946, 1e-05
    %v2951 = vadd.f32 %v2947, 1e-05
    %v2952 = vrsqrt.pop %v2948
    %v2953 = vmul.f32 %v2952, %v2948
    %v2954 = vmul.f32 %v2953, %v2952
    %v2955 = vmul.f32 0.5, %v2954
    %v2956 = vsub.f32 1.5, %v2955
    %v2957 = vmul.f32 %v2952, %v2956
    %vm2958 = vweird.f32 %v2948
    %vm2959 = vweird.f32 %v2952
    %vm2960 = vmor %vm2958, %vm2959
    %v2961 = vsel %vm2960, %v2952, %v2957
    %v2962 = vrsqrt.pop %v2949
    %v2963 = vmul.f32 %v2962, %v2949
    %v2964 = vmul.f32 %v2963, %v2962
    %v2965 = vmul.f32 0.5, %v2964
    %v2966 = vsub.f32 1.5, %v2965
    %v2967 = vmul.f32 %v2962, %v2966
    %vm2968 = vweird.f32 %v2949
    %vm2969 = vweird.f32 %v2962
    %vm2970 = vmor %vm2968, %vm2969
    %v2971 = vsel %vm2970, %v2962, %v2967
    %v2972 = vrsqrt.pop %v2950
    %v2973 = vmul.f32 %v2972, %v2950
    %v2974 = vmul.f32 %v2973, %v2972
    %v2975 = vmul.f32 0.5, %v2974
    %v2976 = vsub.f32 1.5, %v2975
    %v2977 = vmul.f32 %v2972, %v2976
    %vm2978 = vweird.f32 %v2950
    %vm2979 = vweird.f32 %v2972
    %vm2980 = vmor %vm2978, %vm2979
    %v2981 = vsel %vm2980, %v2972, %v2977
    %v2982 = vrsqrt.pop %v2951
    %v2983 = vmul.f32 %v2982, %v2951
    %v2984 = vmul.f32 %v2983, %v2982
    %v2985 = vmul.f32 0.5, %v2984
    %v2986 = vsub.f32 1.5, %v2985
    %v2987 = vmul.f32 %v2982, %v2986
    %vm2988 = vweird.f32 %v2951
    %vm2989 = vweird.f32 %v2982
    %vm2990 = vmor %vm2988, %vm2989
    %v2991 = vsel %vm2990, %v2982, %v2987
    %v2992 = vmul.f32 %v2916, %v2961
    %v2993 = vmul.f32 %v2917, %v2961
    %v2994 = vmul.f32 %v2918, %v2971
    %v2995 = vmul.f32 %v2919, %v2971
    %v2996 = vmul.f32 %v2920, %v2981
    %v2997 = vmul.f32 %v2921, %v2981
    %v2998 = vmul.f32 %v2922, %v2991
    %v2999 = vmul.f32 %v2923, %v2991
    %v3001 = vperm.slane %v2898, 0
    %v3002 = vperm.slane %v2898, 1
    %v3005 = vmul.f32 %v2992, %v3001
    %v3006 = vmul.f32 %v2993, %v3002
    %v3007 = vmul.f32 %v2994, %v3001
    %v3008 = vmul.f32 %v2995, %v3002
    %v3009 = vmul.f32 %v2996, %v3001
    %v3010 = vmul.f32 %v2997, %v3002
    %v3011 = vmul.f32 %v2998, %v3001
    %v3012 = vmul.f32 %v2999, %v3002
    %v3014 = vperm.slane %v2899, 0
    %v3015 = vperm.slane %v2899, 1
    %v3018 = vadd.f32 %v3005, %v3014
    %v3019 = vadd.f32 %v3006, %v3015
    %v3020 = vadd.f32 %v3007, %v3014
    %v3021 = vadd.f32 %v3008, %v3015
    %v3022 = vadd.f32 %v3009, %v3014
    %v3023 = vadd.f32 %v3010, %v3015
    %v3024 = vadd.f32 %v3011, %v3014
    %v3025 = vadd.f32 %v3012, %v3015
    %v3026 = vpack.c.bf16 %v3019, %v3018
    %v3027 = vpack.c.bf16 %v3021, %v3020
    %v3028 = vpack.c.bf16 %v3023, %v3022
    %v3029 = vpack.c.bf16 %v3025, %v3024
    %3030 = vst [vmem:[#allocation18] sm:$0xff] %v3026
    %3031 = vst [vmem:[#allocation18 + $0x8] sm:$0xff] %v3027
    %3032 = vst [vmem:[#allocation18 + $0x10] sm:$0xff] %v3028
    %3033 = vst [vmem:[#allocation18 + $0x18] sm:$0xff] %v3029
    // Predicated region
    $region90: #{tpu_custom_call.1} parent=1 // pred_check
      _
    $region91: #{tpu_custom_call.1} parent=1 // pred_check_branch
      %3035 = sbr.rel (0) target = $region93
    $region92: #{tpu_custom_call.1} parent=1 // pred_region
      %3037 = vsyncadd [#allocation5], 0
      %s3038 = sshll.u32 [#allocation18], 4
      %s3039 = int_to_ptr.vmem [resolvable:$true] %s3038
      %s3040 = sshll.u32 %s13, 4
      %s3041 = int_to_ptr.hbm [resolvable:$true] %s3040
      %3046 = dma.vmem_to_hbm [thread:$0]  %s3039, 512, %s3041, [#allocation5], 128, 128, 8
    $region93: #{tpu_custom_call.1} parent=1 // pred_fallthru
      _
    // Predicated region
    $region94: #{tpu_custom_call.1} parent=1 // pred_check
      _
    $region95: #{tpu_custom_call.1} parent=1 // pred_check_branch
      %3048 = sbr.rel (0) target = $region97
    $region96: #{tpu_custom_call.1} parent=1 // pred_region
      %3050 = dma.done [#allocation5], 512
    $region97: #{tpu_custom_call.1} parent=1 // pred_fallthru
      _
    %3051 = vsyncpa [#allocation4], 1
    %3052 = vsyncpa [#allocation7], 1
    %3053 = vsyncpa [#allocation10], 1
    %3054 = vsyncpa [#allocation13], 1
    %3055 = vsyncpa [#allocation16], 1
    %3056 = vsyncpa [#allocation5], 1

</llo_original>
